<compile_context>
chip_gen: v5e
topology: v5e:2x2
jax: 0.10.0
libtpu: 0.0.40
codegen_flags: <defaults>
</compile_context>

<pallas_src>
import functools
import math

import jax
import jax.numpy as jnp
from jax.experimental import pallas as pl
from jax.experimental.pallas import tpu as pltpu

# ---- scaled-down model constants (original values in comments) -------------
B = 8                                     # batch                (orig 32, hard-coded)
SEQ = 8                                   # sequence length      (only CLS token used)
NL = 13                                   # hidden-state layers
HID = 64                                  # transformer hidden   (orig 768)
IMG_C, IMG_H, IMG_W = 3, 4, 4             # orig (3, 7, 7) around the HID axis
FLAT = IMG_C * HID * IMG_H * IMG_W        # orig 3*768*7*7 = 112896
FEAT = 128                                # dim_reducer out / prime_dim (orig 512)
SHARED = 64                               # UnimodalDetection / CrossModule hidden (orig 256)
BN_EPS = 1e-5

_LANE = 128


# ---- generation-aware VMEM budget / tile caps -------------------------------
def _tpu_budgets():
    """(vmem_limit_bytes, tk_cap, tn_cap) tuned per TPU generation.

    v5e/v6e have 128 MiB physical VMEM -> ~96 MiB scoped budget, 16K tile caps
    (weight tile 16.5 MiB bf16 x2 buffers ~= 33 MiB, plenty of headroom).
    v7x has 64 MiB per TensorCore -> 48 MiB budget, 8K caps (weight tile
    8.25 MiB x2 buffers ~= 16.5 MiB + x/acc/out).
    """
    vmem = 64 * 1024 * 1024  # conservative fallback (v7x per-TC)
    try:
        info = pltpu.get_tpu_info()
        cap = getattr(info, "vmem_capacity_bytes", None)
        if cap:
            vmem = int(cap)
    except Exception:  # pragma: no cover - query unavailable in some envs
        pass
    if vmem >= 100 * 1024 * 1024:         # v5e / v6e
        return 96 * 1024 * 1024, 16384, 16384
    return 48 * 1024 * 1024, 8192, 8192   # v7x (or unknown -> safe)


_VMEM_LIMIT, _TK_CAP, _TN_CAP = _tpu_budgets()


def _round_up(n, m):
    return ((n + m - 1) // m) * m


def _pick_tile(dim, cap):
    """Return (tile, padded_dim): largest multiple of 128 <= cap dividing
    padded_dim; padded_dim == dim unless dim has no such divisor (rare).
    These layers are HBM-DMA-bound, so fewest grid steps beats forcing
    256-alignment for MXU cadence."""
    if dim <= cap:
        return dim, dim
    t = (cap // _LANE) * _LANE
    while t >= _LANE:
        if dim % t == 0:
            return t, dim
        t -= _LANE
    padded = _round_up(dim, _LANE)
    t = (cap // _LANE) * _LANE
    while padded % t != 0:
        t -= _LANE
    return t, padded


# ============================================================================
# Kernel 1: Linear (+bias, +optional ReLU), bf16 weights, f32 accumulate.
# Grid (N/tn, K/tk).  Single-K-step path drops the accumulator scratch.
# ============================================================================
def _linear_kernel_1step(x_ref, w_ref, b_ref, o_ref, *, relu):
    y = jnp.dot(x_ref[...].astype(jnp.bfloat16), w_ref[...],
                preferred_element_type=jnp.float32) + b_ref[...]
    if relu:
        y = jnp.maximum(y, 0.0)
    o_ref[...] = y.astype(o_ref.dtype)


def _linear_kernel_ksteps(x_ref, w_ref, b_ref, o_ref, acc_ref, *, relu):
    @pl.when(pl.program_id(1) == 0)
    def _():
        acc_ref[...] = jnp.zeros_like(acc_ref)

    acc_ref[...] += jnp.dot(x_ref[...].astype(jnp.bfloat16), w_ref[...],
                            preferred_element_type=jnp.float32)

    @pl.when(pl.program_id(1) == pl.num_programs(1) - 1)
    def _():
        y = acc_ref[...] + b_ref[...]
        if relu:
            y = jnp.maximum(y, 0.0)
        o_ref[...] = y.astype(o_ref.dtype)


def fused_linear(x, w, b, *, relu=False, out_dtype=jnp.float32):
    """y = [relu](x @ w + b); w is bf16 (weight DMA dominates these layers)."""
    M, K = x.shape
    Kw, N = w.shape
    assert K == Kw
    tk, Kp = _pick_tile(K, _TK_CAP)
    tn, Np = _pick_tile(N, _TN_CAP)
    # Padding only triggers for pathological non-128-multiple big dims
    # (never at these shapes); big weights should be pre-padded at init.
    if Kp != K:
        x = jnp.pad(x, ((0, 0), (0, Kp - K)))
        w = jnp.pad(w, ((0, Kp - K), (0, 0)))
    if Np != N:
        w = jnp.pad(w, ((0, 0), (0, Np - N)))
        b = jnp.pad(b, ((0, Np - N),))
    nk = Kp // tk
    nj = Np // tn
    # If K is multi-step but N fits in one tile (dim_reducer at original scale)
    # the grid would have zero parallel work -> split N so v7x's second TC and
    # both DMA engines get a share of the ~116 MB weight stream.
    if nj == 1 and nk > 1 and tn % 256 == 0:
        tn //= 2
        nj = 2

    b2 = b.reshape(1, Np)
    grid = (nj, nk)

    in_specs = [
        pl.BlockSpec((M, tk), lambda j, k: (0, k)),
        pl.BlockSpec((tk, tn), lambda j, k: (k, j)),
        pl.BlockSpec((1, tn), lambda j, k: (0, j)),
    ]
    out_spec = pl.BlockSpec((M, tn), lambda j, k: (0, j))
    if nk == 1:
        kern = functools.partial(_linear_kernel_1step, relu=relu)
        scratch = []
    else:
        kern = functools.partial(_linear_kernel_ksteps, relu=relu)
        scratch = [pltpu.VMEM((M, tn), jnp.float32)]

    out_itemsize = jnp.dtype(out_dtype).itemsize
    cost = pl.CostEstimate(
        flops=2 * M * Kp * Np,
        transcendentals=0,
        bytes_accessed=(x.size * x.dtype.itemsize + w.size * w.dtype.itemsize
                        + b2.size * 4 + M * Np * out_itemsize),
    )

    out = pl.pallas_call(
        kern,
        out_shape=jax.ShapeDtypeStruct((M, Np), out_dtype),
        grid_spec=pltpu.PrefetchScalarGridSpec(
            num_scalar_prefetch=0, grid=grid,
            in_specs=in_specs, out_specs=out_spec,
            scratch_shapes=scratch),
        compiler_params=pltpu.CompilerParams(
            dimension_semantics=("parallel", "arbitrary"),
            vmem_limit_bytes=_VMEM_LIMIT),
        cost_estimate=cost,
    )(x, w, b2)
    return out[:, :N] if Np != N else out


# ============================================================================
# Kernel 2: CLS-token layer attention
#   atten = softmax_l( sum_{b,h} ht[l,b,h] * weights[l] )
#   text_raw[b,h] = sum_l ht[l,b,h] * atten[l]
# ============================================================================
def _cls_attention_kernel(ht_ref, w_ref, o_ref):
    ht = ht_ref[...]                                          # (NL, B*HID)
    w = w_ref[...]                                            # (NL, 1)
    logits = jnp.sum(ht, axis=1, keepdims=True) * w           # (NL, 1)
    mx = jnp.max(logits, axis=0, keepdims=True)
    e = jnp.exp(logits - mx)
    atten = e / jnp.sum(e, axis=0, keepdims=True)             # softmax over layers
    o_ref[...] = jnp.sum(ht * atten, axis=0, keepdims=True)   # (1, B*HID)


def cls_attention(ht2, weights):
    nl, bh = ht2.shape
    vmem = pl.BlockSpec(memory_space=pltpu.MemorySpace.VMEM)
    return pl.pallas_call(
        _cls_attention_kernel,
        out_shape=jax.ShapeDtypeStruct((1, bh), jnp.float32),
        in_specs=[vmem, vmem],
        out_specs=vmem,
    )(ht2, weights)


# ============================================================================
# Kernel 3: fully fused small stage, one pallas_call:
#   text_uni / image_uni MLP towers (first Linear split at the concat boundary,
#   so no activation concat is ever built), CrossModule MLP (same split),
#   cosine-sim gate, avg/max pooling, 3x3 SE-net (weights in SMEM),
#   sigmoid channel gating, global min-max norm of text_prime.
# final_feature is written lane-dense as (B, 3*FEAT).
# ============================================================================
def _uni_cross_kernel(traw_ref, tenc_ref, iraw_ref, ienc_ref,
                      tw1r_ref, tw1e_ref, tb1_ref, tw2_ref, tb2_ref,
                      iw1r_ref, iw1e_ref, ib1_ref, iw2_ref, ib2_ref,
                      cw1t_ref, cw1i_ref, cb1_ref, cw2_ref, cb2_ref,
                      w_ref, bb_ref, sw1_ref, sb1_ref, sw2_ref, sb2_ref,
                      tpn_ref, ip_ref, corr_ref, ff_ref):
    feat = tpn_ref.shape[1]
    traw = traw_ref[...].astype(jnp.bfloat16)
    iraw = iraw_ref[...].astype(jnp.bfloat16)
    tenc = tenc_ref[...]
    ienc = ienc_ref[...]
    tenc_bf = tenc.astype(jnp.bfloat16)
    ienc_bf = ienc.astype(jnp.bfloat16)

    def tower(xa, xb, w1a, w1b, b1, w2, b2):
        # Linear -> BN(folded) -> ReLU -> Dropout(id) -> Linear -> BN(folded) -> ReLU
        h = (jnp.dot(xa, w1a, preferred_element_type=jnp.float32)
             + jnp.dot(xb, w1b, preferred_element_type=jnp.float32) + b1)
        h = jnp.maximum(h, 0.0)
        y = jnp.dot(h.astype(jnp.bfloat16), w2,
                    preferred_element_type=jnp.float32) + b2
        return jnp.maximum(y, 0.0)

    tp = tower(traw, tenc_bf, tw1r_ref[...], tw1e_ref[...], tb1_ref[...],
               tw2_ref[...], tb2_ref[...])                     # text_prime
    ip = tower(iraw, ienc_bf, iw1r_ref[...], iw1e_ref[...], ib1_ref[...],
               iw2_ref[...], ib2_ref[...])                     # image_prime
    corr = tower(tenc_bf, ienc_bf, cw1t_ref[...], cw1i_ref[...], cb1_ref[...],
                 cw2_ref[...], cb2_ref[...])                   # correlation

    ip_ref[...] = ip

    # ---- cosine-similarity gate: sim = <t,i>/(||t||*||i||) * w + b ----------
    dot = jnp.sum(tenc * ienc, axis=1, keepdims=True)          # (B,1)
    nt = jnp.sqrt(jnp.sum(tenc * tenc, axis=1, keepdims=True))
    ni = jnp.sqrt(jnp.sum(ienc * ienc, axis=1, keepdims=True))
    sim = dot / jnp.maximum(nt * ni, 1e-12)    # eps only guards zero-norm rows
    sim = sim * w_ref[0] + bb_ref[0]
    corr_s = corr * sim
    corr_ref[...] = corr_s

    # ---- AvgPool1d(FEAT)/MaxPool1d(FEAT): one value per (batch, channel) ----
    a = [jnp.mean(tp, axis=1, keepdims=True),
         jnp.mean(ip, axis=1, keepdims=True),
         jnp.mean(corr_s, axis=1, keepdims=True)]
    m = [jnp.max(tp, axis=1, keepdims=True),
         jnp.max(ip, axis=1, keepdims=True),
         jnp.max(corr_s, axis=1, keepdims=True)]

    def senet(x3):  # 3x3 Linear -> GELU -> 3x3 Linear; weights ([out,in]) in SMEM
        h3 = []
        for j in range(3):
            hj = (x3[0] * sw1_ref[j, 0] + x3[1] * sw1_ref[j, 1]
                  + x3[2] * sw1_ref[j, 2] + sb1_ref[j])
            # TODO(synk): torch nn.GELU default is exact erf; tanh approximation used.
            hj = 0.5 * hj * (1.0 + jnp.tanh(0.7978845608028654
                                            * (hj + 0.044715 * hj * hj * hj)))
            h3.append(hj)
        return [h3[0] * sw2_ref[j, 0] + h3[1] * sw2_ref[j, 1]
                + h3[2] * sw2_ref[j, 2] + sb2_ref[j] for j in range(3)]

    s1 = senet(a)
    s2 = senet(m)
    chans = (tp, ip, corr_s)
    for j in range(3):
        gate = 1.0 / (1.0 + jnp.exp(-(s1[j] + s2[j])))         # sigmoid, (B,1)
        ff_ref[:, j * feat:(j + 1) * feat] = gate * chans[j]   # lane-dense store

    # ---- global min-max normalisation of text_prime into [-1, 1] ------------
    mn = jnp.min(jnp.min(tp, axis=1, keepdims=True), axis=0, keepdims=True)
    mx = jnp.max(jnp.max(tp, axis=1, keepdims=True), axis=0, keepdims=True)
    rng = mx - mn
    rng = jnp.where(rng == 0.0, rng + 1e-6, rng)
    tpn_ref[...] = 2.0 * ((tp - mn) / rng) - 1.0


def uni_cross_fusion(text_raw, text, image_raw, image_red, uni_p, cross_p,
                     w, b, senet_w1, senet_b1, senet_w2, senet_b2):
    vmem = pl.BlockSpec(memory_space=pltpu.MemorySpace.VMEM)
    smem = pl.BlockSpec(memory_space=pltpu.MemorySpace.SMEM)
    bsz, feat = text.shape
    tpn, ip, corr_s, ff = pl.pallas_call(
        _uni_cross_kernel,
        out_shape=(jax.ShapeDtypeStruct((bsz, feat), jnp.float32),
                   jax.ShapeDtypeStruct((bsz, feat), jnp.float32),
                   jax.ShapeDtypeStruct((bsz, feat), jnp.float32),
                   jax.ShapeDtypeStruct((bsz, 3 * feat), jnp.float32)),
        in_specs=[vmem] * 19 + [smem] * 6,
        out_specs=(vmem, vmem, vmem, vmem),
        compiler_params=pltpu.CompilerParams(vmem_limit_bytes=_VMEM_LIMIT),
    )(text_raw, text, image_raw, image_red,
      uni_p["t_w1_raw"], uni_p["t_w1_enc"], uni_p["t_b1"], uni_p["t_w2"], uni_p["t_b2"],
      uni_p["i_w1_raw"], uni_p["i_w1_enc"], uni_p["i_b1"], uni_p["i_w2"], uni_p["i_b2"],
      cross_p["w1_t"], cross_p["w1_i"], cross_p["b1"], cross_p["w2"], cross_p["b2"],
      w, b, senet_w1, senet_b1, senet_w2, senet_b2)
    # (B, 3*FEAT) -> (B, 3, FEAT) is a metadata-only row-major reshape.
    return tpn, ip, corr_s, ff.reshape(bsz, 3, feat)


# ============================================================================
# Glue: forward
# ============================================================================
def multimodal_forward(params, input_ids, all_hidden_states, image_raw, text, image):
    bsz = input_ids.shape[0]

    # CLS-token layer attention; slice each layer's CLS token BEFORE stacking.
    ht2 = jnp.stack([h[:, 0, :] for h in all_hidden_states], axis=0)  # (NL, B, HID)
    ht2 = ht2.reshape(NL, bsz * HID)
    text_raw = cls_attention(ht2, params["weights"]).reshape(bsz, HID)

    # image branch: flatten (torch: image.view(B, -1)); cast activations to
    # bf16 in the wrapper (halves the x stream of the HBM-bound dim_reducer).
    flattened = image.reshape(bsz, -1).astype(jnp.bfloat16)
    image_red = fused_linear(flattened, params["dim_reducer_w"],
                             params["dim_reducer_b"])

    # Fused small stage: UnimodalDetection towers + CrossModule + sim gate +
    # pooling + SE-net + sigmoid gate + min-max norm (no concat/stack temps,
    # no text_prime/image_prime HBM round-trip).
    text_prime_norm, image_prime, correlation_scaled, final_feature = \
        uni_cross_fusion(text_raw, text, image_raw, image_red,
                         params["uni"], params["cross"],
                         params["w"], params["b"],
                         params["senet_w1"], params["senet_b1"],
                         params["senet_w2"], params["senet_b2"])

    # image_prime = dim_uper(image_prime).view(B, 3, HID, H, W)
    # Output emitted bf16: this layer is output-HBM-bound; accumulation is f32.
    image_prime_up = fused_linear(image_prime, params["dim_uper_w"],
                                  params["dim_uper_b"], out_dtype=jnp.bfloat16)
    image_prime_up = image_prime_up.reshape(bsz, IMG_C, HID, IMG_H, IMG_W)

    return text_prime_norm, image_prime_up, correlation_scaled, final_feature


# ============================================================================
# Parameters
# ============================================================================
def _linear_params(key, fan_in, fan_out):
    kw, kb = jax.random.split(key)
    bound = 1.0 / math.sqrt(fan_in)
    w = jax.random.uniform(kw, (fan_in, fan_out), jnp.float32, -bound, bound)
    b = jax.random.uniform(kb, (fan_out,), jnp.float32, -bound, bound)
    return w, b


def _bn_fold(n):
    # eval-mode BatchNorm1d with PyTorch defaults (gamma=1, beta=0, rm=0, rv=1)
    gamma = jnp.ones((n,), jnp.float32)
    beta = jnp.zeros((n,), jnp.float32)
    rm = jnp.zeros((n,), jnp.float32)
    rv = jnp.ones((n,), jnp.float32)
    scale = gamma / jnp.sqrt(rv + BN_EPS)
    shift = beta - rm * scale
    return scale, shift


def _folded_linear_bn(key, d_in, d_out):
    """Linear + eval-mode BN folded: w' = w*scale (bf16), b' = b*scale + shift (f32)."""
    w, b = _linear_params(key, d_in, d_out)
    scale, shift = _bn_fold(d_out)
    return (w * scale[None, :]).astype(jnp.bfloat16), b * scale + shift


def _uni_params(key_text, key_image, d_raw, d_enc, d_h, d_out):
    """UnimodalDetection towers; first-layer weight split at the torch concat
    boundary (raw part first, encoding second) so the kernel needs no concat."""
    out = {}
    for name, k in (("t", key_text), ("i", key_image)):
        k1, k2 = jax.random.split(k)
        w1, b1 = _folded_linear_bn(k1, d_raw + d_enc, d_h)
        w2, b2 = _folded_linear_bn(k2, d_h, d_out)
        out[name + "_w1_raw"] = w1[:d_raw]
        out[name + "_w1_enc"] = w1[d_raw:]
        out[name + "_b1"] = b1.reshape(1, d_h)
        out[name + "_w2"] = w2
        out[name + "_b2"] = b2.reshape(1, d_out)
    return out


def _cross_params(key, feat, d_h, d_out):
    k1, k2 = jax.random.split(key)
    w1, b1 = _folded_linear_bn(k1, 2 * feat, d_h)
    w2, b2 = _folded_linear_bn(k2, d_h, d_out)
    # first-layer weight split at the text/image boundary avoids an in-kernel concat
    return dict(w1_t=w1[:feat], w1_i=w1[feat:], b1=b1.reshape(1, d_h),
                w2=w2, b2=b2.reshape(1, d_out))


def init_params(key):
    ks = jax.random.split(key, 9)
    weights = jax.random.uniform(ks[0], (NL, 1), jnp.float32)        # torch.rand(13, 1)
    w = jax.random.uniform(ks[1], (1,), jnp.float32)                 # torch.rand(1)
    b = jax.random.uniform(ks[2], (1,), jnp.float32)                 # torch.rand(1)
    sw1, sb1 = _linear_params(ks[3], 3, 3)
    sw2, sb2 = _linear_params(ks[4], 3, 3)
    dr_w, dr_b = _linear_params(ks[5], FLAT, FEAT)
    du_w, du_b = _linear_params(ks[6], FEAT, FLAT)
    kt, ki = jax.random.split(ks[7])
    return dict(
        weights=weights, w=w, b=b,
        # senet weights kept in torch [out, in] layout (indexed W[j_out, i_in] in-kernel)
        senet_w1=sw1.T, senet_b1=sb1, senet_w2=sw2.T, senet_b2=sb2,
        # TODO(synk): optional fp8(v7x)/int8(v5e,v6e) quantization of these two
        #             huge weights would halve the dominant byte stream again.
        dim_reducer_w=dr_w.astype(jnp.bfloat16), dim_reducer_b=dr_b,
        dim_uper_w=du_w.astype(jnp.bfloat16), dim_uper_b=du_b,
        uni=_uni_params(kt, ki, HID, FEAT, SHARED, FEAT),
        cross=_cross_params(ks[8], FEAT, SHARED, FEAT),
    )


if __name__ == "__main__":
    key = jax.random.PRNGKey(0)
    pkey, dkey = jax.random.split(key)
    params = init_params(pkey)

    dks = jax.random.split(dkey, 4 + NL)
    input_ids = jax.random.randint(dks[0], (B, SEQ), 0, 1000)
    all_hidden_states = tuple(
        jax.random.normal(dks[4 + l], (B, SEQ, HID), jnp.float32) for l in range(NL))
    image_raw = jax.random.normal(dks[1], (B, HID), jnp.float32)
    text = jax.random.normal(dks[2], (B, FEAT), jnp.float32)
    image = jax.random.normal(dks[3], (B, IMG_C, HID, IMG_H, IMG_W), jnp.float32)

    fwd = jax.jit(multimodal_forward)
    outs = fwd(params, input_ids, all_hidden_states, image_raw, text, image)
    jax.block_until_ready(outs)

    tpn, ipu, corr, ff = outs
    assert tpn.shape == (B, FEAT)
    assert ipu.shape == (B, IMG_C, HID, IMG_H, IMG_W)
    assert corr.shape == (B, FEAT)
    assert ff.shape == (B, 3, FEAT)
    print("KERNEL_OK")
</pallas_src>

<mosaic_0001>
module attributes {stable_mosaic.version = 11 : i64} {
  func.func @_linear_kernel_1step(%arg0: i32, %arg1: i32, %arg2: memref<8x3072xbf16, #tpu.memory_space<vmem>>, %arg3: memref<3072x128xbf16, #tpu.memory_space<vmem>>, %arg4: memref<1x128xf32, #tpu.memory_space<vmem>>, %arg5: memref<8x128xf32, #tpu.memory_space<vmem>>) attributes {dimension_semantics = [#tpu.dimension_semantics<parallel>, #tpu.dimension_semantics<arbitrary>], iteration_bounds = array<i64: 1, 1>, scalar_prefetch = 0 : i64, scratch_operands = 0 : i64, tpu.core_type = #tpu.core_type<tc>, window_params = [{transform_indices = @transform_0, window_bounds = array<i64: 8, 3072>}, {transform_indices = @transform_1, window_bounds = array<i64: 3072, 128>}, {transform_indices = @transform_2, window_bounds = array<i64: 1, 128>}, {transform_indices = @transform_3, window_bounds = array<i64: 8, 128>}]} {
    %c0 = arith.constant 0 : index
    %c0_0 = arith.constant 0 : index
    %0 = vector.load %arg2[%c0, %c0_0] : memref<8x3072xbf16, #tpu.memory_space<vmem>>, vector<8x3072xbf16>
    %c0_1 = arith.constant 0 : index
    %c0_2 = arith.constant 0 : index
    %1 = vector.load %arg3[%c0_1, %c0_2] : memref<3072x128xbf16, #tpu.memory_space<vmem>>, vector<3072x128xbf16>
    %cst = arith.constant dense<0.000000e+00> : vector<8x128xf32>
    %2 = tpu.matmul %0, %1, %cst {dimension_numbers = #tpu.dot_dimension_numbers<[1], [0], [0], [1], [0, 0, 1, 1], [], []>} : vector<8x3072xbf16>, vector<3072x128xbf16>, vector<8x128xf32> -> vector<8x128xf32>
    %c0_3 = arith.constant 0 : index
    %c0_4 = arith.constant 0 : index
    %3 = vector.load %arg4[%c0_3, %c0_4] : memref<1x128xf32, #tpu.memory_space<vmem>>, vector<1x128xf32>
    %4 = vector.broadcast %3 : vector<1x128xf32> to vector<8x128xf32>
    %5 = arith.addf %2, %4 : vector<8x128xf32>
    %c0_5 = arith.constant 0 : index
    %c0_6 = arith.constant 0 : index
    %6 = vector.load %arg5[%c0_5, %c0_6] : memref<8x128xf32, #tpu.memory_space<vmem>>, vector<8x128xf32>
    tpu.vector_store %arg5[%c0_5, %c0_6], %5 {strides = array<i32>} : memref<8x128xf32, #tpu.memory_space<vmem>>, vector<8x128xf32>,
    return
  }
  func.func @transform_0(%arg0: i32, %arg1: i32) -> (i32, i32) {
    %c0_i32 = arith.constant 0 : i32
    %c0_i32_0 = arith.constant 0 : i32
    return %c0_i32, %arg1 : i32, i32
  }
  func.func @transform_1(%arg0: i32, %arg1: i32) -> (i32, i32) {
    %c0_i32 = arith.constant 0 : i32
    return %arg1, %arg0 : i32, i32
  }
  func.func @transform_2(%arg0: i32, %arg1: i32) -> (i32, i32) {
    %c0_i32 = arith.constant 0 : i32
    %c0_i32_0 = arith.constant 0 : i32
    return %c0_i32, %arg0 : i32, i32
  }
  func.func @transform_3(%arg0: i32, %arg1: i32) -> (i32, i32) {
    %c0_i32 = arith.constant 0 : i32
    %c0_i32_0 = arith.constant 0 : i32
    return %c0_i32, %arg0 : i32, i32
  }
}

module attributes {stable_mosaic.version = 11 : i64} {
  func.func @_cls_attention_kernel(%arg0: memref<13x512xf32, #tpu.memory_space<vmem>>, %arg1: memref<13x1xf32, #tpu.memory_space<vmem>>, %arg2: memref<1x512xf32, #tpu.memory_space<vmem>>) attributes {dimension_semantics = [], scalar_prefetch = 0 : i64, scratch_operands = 0 : i64, tpu.core_type = #tpu.core_type<tc>} {
    %c0 = arith.constant 0 : index
    %c0_0 = arith.constant 0 : index
    %0 = vector.load %arg0[%c0, %c0_0] : memref<13x512xf32, #tpu.memory_space<vmem>>, vector<13x512xf32>
    %c0_1 = arith.constant 0 : index
    %c0_2 = arith.constant 0 : index
    %1 = vector.load %arg1[%c0_1, %c0_2] : memref<13x1xf32, #tpu.memory_space<vmem>>, vector<13x1xf32>
    %cst = arith.constant dense<0.000000e+00> : vector<13xf32>
    %2 = vector.multi_reduction <add>, %0, %cst [1] : vector<13x512xf32> to vector<13xf32>
    %3 = vector.shape_cast %2 : vector<13xf32> to vector<13x1xf32>
    %4 = arith.mulf %3, %1 : vector<13x1xf32>
    %cst_3 = arith.constant dense<0xFF800000> : vector<1xf32>
    %5 = vector.multi_reduction <maximumf>, %4, %cst_3 [0] : vector<13x1xf32> to vector<1xf32>
    %6 = vector.shape_cast %5 : vector<1xf32> to vector<1x1xf32>
    %7 = vector.broadcast %6 : vector<1x1xf32> to vector<13x1xf32>
    %8 = arith.subf %4, %7 : vector<13x1xf32>
    %9 = math.exp %8 : vector<13x1xf32>
    %cst_4 = arith.constant dense<0.000000e+00> : vector<1xf32>
    %10 = vector.multi_reduction <add>, %9, %cst_4 [0] : vector<13x1xf32> to vector<1xf32>
    %11 = vector.shape_cast %10 : vector<1xf32> to vector<1x1xf32>
    %12 = vector.broadcast %11 : vector<1x1xf32> to vector<13x1xf32>
    %13 = arith.divf %9, %12 : vector<13x1xf32>
    %14 = vector.broadcast %13 : vector<13x1xf32> to vector<13x512xf32>
    %15 = arith.mulf %0, %14 : vector<13x512xf32>
    %cst_5 = arith.constant dense<0.000000e+00> : vector<512xf32>
    %16 = vector.multi_reduction <add>, %15, %cst_5 [0] : vector<13x512xf32> to vector<512xf32>
    %17 = vector.shape_cast %16 : vector<512xf32> to vector<1x512xf32>
    %c0_6 = arith.constant 0 : index
    %c0_7 = arith.constant 0 : index
    %18 = vector.load %arg2[%c0_6, %c0_7] : memref<1x512xf32, #tpu.memory_space<vmem>>, vector<1x512xf32>
    tpu.vector_store %arg2[%c0_6, %c0_7], %17 {strides = array<i32>} : memref<1x512xf32, #tpu.memory_space<vmem>>, vector<1x512xf32>,
    return
  }
}

module attributes {stable_mosaic.version = 11 : i64} {
  func.func @_uni_cross_kernel(%arg0: memref<8x64xf32, #tpu.memory_space<vmem>>, %arg1: memref<8x128xf32, #tpu.memory_space<vmem>>, %arg2: memref<8x64xf32, #tpu.memory_space<vmem>>, %arg3: memref<8x128xf32, #tpu.memory_space<vmem>>, %arg4: memref<64x64xbf16, #tpu.memory_space<vmem>>, %arg5: memref<128x64xbf16, #tpu.memory_space<vmem>>, %arg6: memref<1x64xf32, #tpu.memory_space<vmem>>, %arg7: memref<64x128xbf16, #tpu.memory_space<vmem>>, %arg8: memref<1x128xf32, #tpu.memory_space<vmem>>, %arg9: memref<64x64xbf16, #tpu.memory_space<vmem>>, %arg10: memref<128x64xbf16, #tpu.memory_space<vmem>>, %arg11: memref<1x64xf32, #tpu.memory_space<vmem>>, %arg12: memref<64x128xbf16, #tpu.memory_space<vmem>>, %arg13: memref<1x128xf32, #tpu.memory_space<vmem>>, %arg14: memref<128x64xbf16, #tpu.memory_space<vmem>>, %arg15: memref<128x64xbf16, #tpu.memory_space<vmem>>, %arg16: memref<1x64xf32, #tpu.memory_space<vmem>>, %arg17: memref<64x128xbf16, #tpu.memory_space<vmem>>, %arg18: memref<1x128xf32, #tpu.memory_space<vmem>>, %arg19: memref<1xf32, #tpu.memory_space<smem>>, %arg20: memref<1xf32, #tpu.memory_space<smem>>, %arg21: memref<3x3xf32, #tpu.memory_space<smem>>, %arg22: memref<3xf32, #tpu.memory_space<smem>>, %arg23: memref<3x3xf32, #tpu.memory_space<smem>>, %arg24: memref<3xf32, #tpu.memory_space<smem>>, %arg25: memref<8x128xf32, #tpu.memory_space<vmem>>, %arg26: memref<8x128xf32, #tpu.memory_space<vmem>>, %arg27: memref<8x128xf32, #tpu.memory_space<vmem>>, %arg28: memref<8x384xf32, #tpu.memory_space<vmem>>) attributes {dimension_semantics = [], scalar_prefetch = 0 : i64, scratch_operands = 0 : i64, tpu.core_type = #tpu.core_type<tc>} {
    %c0 = arith.constant 0 : index
    %c0_0 = arith.constant 0 : index
    %0 = vector.load %arg0[%c0, %c0_0] : memref<8x64xf32, #tpu.memory_space<vmem>>, vector<8x64xf32>
    %1 = arith.truncf %0 : vector<8x64xf32> to vector<8x64xbf16>
    %c0_1 = arith.constant 0 : index
    %c0_2 = arith.constant 0 : index
    %2 = vector.load %arg2[%c0_1, %c0_2] : memref<8x64xf32, #tpu.memory_space<vmem>>, vector<8x64xf32>
    %3 = arith.truncf %2 : vector<8x64xf32> to vector<8x64xbf16>
    %c0_3 = arith.constant 0 : index
    %c0_4 = arith.constant 0 : index
    %4 = vector.load %arg1[%c0_3, %c0_4] : memref<8x128xf32, #tpu.memory_space<vmem>>, vector<8x128xf32>
    %c0_5 = arith.constant 0 : index
    %c0_6 = arith.constant 0 : index
    %5 = vector.load %arg3[%c0_5, %c0_6] : memref<8x128xf32, #tpu.memory_space<vmem>>, vector<8x128xf32>
    %6 = arith.truncf %4 : vector<8x128xf32> to vector<8x128xbf16>
    %7 = arith.truncf %5 : vector<8x128xf32> to vector<8x128xbf16>
    %c0_7 = arith.constant 0 : index
    %c0_8 = arith.constant 0 : index
    %8 = vector.load %arg4[%c0_7, %c0_8] : memref<64x64xbf16, #tpu.memory_space<vmem>>, vector<64x64xbf16>
    %c0_9 = arith.constant 0 : index
    %c0_10 = arith.constant 0 : index
    %9 = vector.load %arg5[%c0_9, %c0_10] : memref<128x64xbf16, #tpu.memory_space<vmem>>, vector<128x64xbf16>
    %c0_11 = arith.constant 0 : index
    %c0_12 = arith.constant 0 : index
    %10 = vector.load %arg6[%c0_11, %c0_12] : memref<1x64xf32, #tpu.memory_space<vmem>>, vector<1x64xf32>
    %c0_13 = arith.constant 0 : index
    %c0_14 = arith.constant 0 : index
    %11 = vector.load %arg7[%c0_13, %c0_14] : memref<64x128xbf16, #tpu.memory_space<vmem>>, vector<64x128xbf16>
    %c0_15 = arith.constant 0 : index
    %c0_16 = arith.constant 0 : index
    %12 = vector.load %arg8[%c0_15, %c0_16] : memref<1x128xf32, #tpu.memory_space<vmem>>, vector<1x128xf32>
    %cst = arith.constant dense<0.000000e+00> : vector<8x64xf32>
    %13 = tpu.matmul %1, %8, %cst {dimension_numbers = #tpu.dot_dimension_numbers<[1], [0], [0], [1], [0, 0, 1, 1], [], []>} : vector<8x64xbf16>, vector<64x64xbf16>, vector<8x64xf32> -> vector<8x64xf32>
    %cst_17 = arith.constant dense<0.000000e+00> : vector<8x64xf32>
    %14 = tpu.matmul %6, %9, %cst_17 {dimension_numbers = #tpu.dot_dimension_numbers<[1], [0], [0], [1], [0, 0, 1, 1], [], []>} : vector<8x128xbf16>, vector<128x64xbf16>, vector<8x64xf32> -> vector<8x64xf32>
    %15 = arith.addf %13, %14 : vector<8x64xf32>
    %16 = vector.broadcast %10 : vector<1x64xf32> to vector<8x64xf32>
    %17 = arith.addf %15, %16 : vector<8x64xf32>
    %cst_18 = arith.constant 0.000000e+00 : f32
    %18 = vector.broadcast %cst_18 : f32 to vector<8x64xf32>
    %19 = arith.maximumf %17, %18 : vector<8x64xf32>
    %20 = arith.truncf %19 : vector<8x64xf32> to vector<8x64xbf16>
    %cst_19 = arith.constant dense<0.000000e+00> : vector<8x128xf32>
    %21 = tpu.matmul %20, %11, %cst_19 {dimension_numbers = #tpu.dot_dimension_numbers<[1], [0], [0], [1], [0, 0, 1, 1], [], []>} : vector<8x64xbf16>, vector<64x128xbf16>, vector<8x128xf32> -> vector<8x128xf32>
    %22 = vector.broadcast %12 : vector<1x128xf32> to vector<8x128xf32>
    %23 = arith.addf %21, %22 : vector<8x128xf32>
    %cst_20 = arith.constant 0.000000e+00 : f32
    %24 = vector.broadcast %cst_20 : f32 to vector<8x128xf32>
    %25 = arith.maximumf %23, %24 : vector<8x128xf32>
    %c0_21 = arith.constant 0 : index
    %c0_22 = arith.constant 0 : index
    %26 = vector.load %arg9[%c0_21, %c0_22] : memref<64x64xbf16, #tpu.memory_space<vmem>>, vector<64x64xbf16>
    %c0_23 = arith.constant 0 : index
    %c0_24 = arith.constant 0 : index
    %27 = vector.load %arg10[%c0_23, %c0_24] : memref<128x64xbf16, #tpu.memory_space<vmem>>, vector<128x64xbf16>
    %c0_25 = arith.constant 0 : index
    %c0_26 = arith.constant 0 : index
    %28 = vector.load %arg11[%c0_25, %c0_26] : memref<1x64xf32, #tpu.memory_space<vmem>>, vector<1x64xf32>
    %c0_27 = arith.constant 0 : index
    %c0_28 = arith.constant 0 : index
    %29 = vector.load %arg12[%c0_27, %c0_28] : memref<64x128xbf16, #tpu.memory_space<vmem>>, vector<64x128xbf16>
    %c0_29 = arith.constant 0 : index
    %c0_30 = arith.constant 0 : index
    %30 = vector.load %arg13[%c0_29, %c0_30] : memref<1x128xf32, #tpu.memory_space<vmem>>, vector<1x128xf32>
    %cst_31 = arith.constant dense<0.000000e+00> : vector<8x64xf32>
    %31 = tpu.matmul %3, %26, %cst_31 {dimension_numbers = #tpu.dot_dimension_numbers<[1], [0], [0], [1], [0, 0, 1, 1], [], []>} : vector<8x64xbf16>, vector<64x64xbf16>, vector<8x64xf32> -> vector<8x64xf32>
    %cst_32 = arith.constant dense<0.000000e+00> : vector<8x64xf32>
    %32 = tpu.matmul %7, %27, %cst_32 {dimension_numbers = #tpu.dot_dimension_numbers<[1], [0], [0], [1], [0, 0, 1, 1], [], []>} : vector<8x128xbf16>, vector<128x64xbf16>, vector<8x64xf32> -> vector<8x64xf32>
    %33 = arith.addf %31, %32 : vector<8x64xf32>
    %34 = vector.broadcast %28 : vector<1x64xf32> to vector<8x64xf32>
    %35 = arith.addf %33, %34 : vector<8x64xf32>
    %cst_33 = arith.constant 0.000000e+00 : f32
    %36 = vector.broadcast %cst_33 : f32 to vector<8x64xf32>
    %37 = arith.maximumf %35, %36 : vector<8x64xf32>
    %38 = arith.truncf %37 : vector<8x64xf32> to vector<8x64xbf16>
    %cst_34 = arith.constant dense<0.000000e+00> : vector<8x128xf32>
    %39 = tpu.matmul %38, %29, %cst_34 {dimension_numbers = #tpu.dot_dimension_numbers<[1], [0], [0], [1], [0, 0, 1, 1], [], []>} : vector<8x64xbf16>, vector<64x128xbf16>, vector<8x128xf32> -> vector<8x128xf32>
    %40 = vector.broadcast %30 : vector<1x128xf32> to vector<8x128xf32>
    %41 = arith.addf %39, %40 : vector<8x128xf32>
    %cst_35 = arith.constant 0.000000e+00 : f32
    %42 = vector.broadcast %cst_35 : f32 to vector<8x128xf32>
    %43 = arith.maximumf %41, %42 : vector<8x128xf32>
    %c0_36 = arith.constant 0 : index
    %c0_37 = arith.constant 0 : index
    %44 = vector.load %arg14[%c0_36, %c0_37] : memref<128x64xbf16, #tpu.memory_space<vmem>>, vector<128x64xbf16>
    %c0_38 = arith.constant 0 : index
    %c0_39 = arith.constant 0 : index
    %45 = vector.load %arg15[%c0_38, %c0_39] : memref<128x64xbf16, #tpu.memory_space<vmem>>, vector<128x64xbf16>
    %c0_40 = arith.constant 0 : index
    %c0_41 = arith.constant 0 : index
    %46 = vector.load %arg16[%c0_40, %c0_41] : memref<1x64xf32, #tpu.memory_space<vmem>>, vector<1x64xf32>
    %c0_42 = arith.constant 0 : index
    %c0_43 = arith.constant 0 : index
    %47 = vector.load %arg17[%c0_42, %c0_43] : memref<64x128xbf16, #tpu.memory_space<vmem>>, vector<64x128xbf16>
    %c0_44 = arith.constant 0 : index
    %c0_45 = arith.constant 0 : index
    %48 = vector.load %arg18[%c0_44, %c0_45] : memref<1x128xf32, #tpu.memory_space<vmem>>, vector<1x128xf32>
    %cst_46 = arith.constant dense<0.000000e+00> : vector<8x64xf32>
    %49 = tpu.matmul %6, %44, %cst_46 {dimension_numbers = #tpu.dot_dimension_numbers<[1], [0], [0], [1], [0, 0, 1, 1], [], []>} : vector<8x128xbf16>, vector<128x64xbf16>, vector<8x64xf32> -> vector<8x64xf32>
    %cst_47 = arith.constant dense<0.000000e+00> : vector<8x64xf32>
    %50 = tpu.matmul %7, %45, %cst_47 {dimension_numbers = #tpu.dot_dimension_numbers<[1], [0], [0], [1], [0, 0, 1, 1], [], []>} : vector<8x128xbf16>, vector<128x64xbf16>, vector<8x64xf32> -> vector<8x64xf32>
    %51 = arith.addf %49, %50 : vector<8x64xf32>
    %52 = vector.broadcast %46 : vector<1x64xf32> to vector<8x64xf32>
    %53 = arith.addf %51, %52 : vector<8x64xf32>
    %cst_48 = arith.constant 0.000000e+00 : f32
    %54 = vector.broadcast %cst_48 : f32 to vector<8x64xf32>
    %55 = arith.maximumf %53, %54 : vector<8x64xf32>
    %56 = arith.truncf %55 : vector<8x64xf32> to vector<8x64xbf16>
    %cst_49 = arith.constant dense<0.000000e+00> : vector<8x128xf32>
    %57 = tpu.matmul %56, %47, %cst_49 {dimension_numbers = #tpu.dot_dimension_numbers<[1], [0], [0], [1], [0, 0, 1, 1], [], []>} : vector<8x64xbf16>, vector<64x128xbf16>, vector<8x128xf32> -> vector<8x128xf32>
    %58 = vector.broadcast %48 : vector<1x128xf32> to vector<8x128xf32>
    %59 = arith.addf %57, %58 : vector<8x128xf32>
    %cst_50 = arith.constant 0.000000e+00 : f32
    %60 = vector.broadcast %cst_50 : f32 to vector<8x128xf32>
    %61 = arith.maximumf %59, %60 : vector<8x128xf32>
    %c0_51 = arith.constant 0 : index
    %c0_52 = arith.constant 0 : index
    %62 = vector.load %arg26[%c0_51, %c0_52] : memref<8x128xf32, #tpu.memory_space<vmem>>, vector<8x128xf32>
    tpu.vector_store %arg26[%c0_51, %c0_52], %43 {strides = array<i32>} : memref<8x128xf32, #tpu.memory_space<vmem>>, vector<8x128xf32>,
    %63 = arith.mulf %4, %5 : vector<8x128xf32>
    %cst_53 = arith.constant dense<0.000000e+00> : vector<8xf32>
    %64 = vector.multi_reduction <add>, %63, %cst_53 [1] : vector<8x128xf32> to vector<8xf32>
    %65 = vector.shape_cast %64 : vector<8xf32> to vector<8x1xf32>
    %66 = arith.mulf %4, %4 : vector<8x128xf32>
    %cst_54 = arith.constant dense<0.000000e+00> : vector<8xf32>
    %67 = vector.multi_reduction <add>, %66, %cst_54 [1] : vector<8x128xf32> to vector<8xf32>
    %68 = vector.shape_cast %67 : vector<8xf32> to vector<8x1xf32>
    %69 = math.sqrt %68 : vector<8x1xf32>
    %70 = arith.mulf %5, %5 : vector<8x128xf32>
    %cst_55 = arith.constant dense<0.000000e+00> : vector<8xf32>
    %71 = vector.multi_reduction <add>, %70, %cst_55 [1] : vector<8x128xf32> to vector<8xf32>
    %72 = vector.shape_cast %71 : vector<8xf32> to vector<8x1xf32>
    %73 = math.sqrt %72 : vector<8x1xf32>
    %74 = arith.mulf %69, %73 : vector<8x1xf32>
    %cst_56 = arith.constant 9.99999996E-13 : f32
    %75 = vector.broadcast %cst_56 : f32 to vector<8x1xf32>
    %76 = arith.maximumf %74, %75 : vector<8x1xf32>
    %77 = arith.divf %65, %76 : vector<8x1xf32>
    %c0_57 = arith.constant 0 : index
    %78 = memref.load %arg19[%c0_57] : memref<1xf32, #tpu.memory_space<smem>>
    %79 = vector.broadcast %78 : f32 to vector<8x1xf32>
    %80 = arith.mulf %77, %79 : vector<8x1xf32>
    %c0_58 = arith.constant 0 : index
    %81 = memref.load %arg20[%c0_58] : memref<1xf32, #tpu.memory_space<smem>>
    %82 = vector.broadcast %81 : f32 to vector<8x1xf32>
    %83 = arith.addf %80, %82 : vector<8x1xf32>
    %84 = vector.broadcast %83 : vector<8x1xf32> to vector<8x128xf32>
    %85 = arith.mulf %61, %84 : vector<8x128xf32>
    %c0_59 = arith.constant 0 : index
    %c0_60 = arith.constant 0 : index
    %86 = vector.load %arg27[%c0_59, %c0_60] : memref<8x128xf32, #tpu.memory_space<vmem>>, vector<8x128xf32>
    tpu.vector_store %arg27[%c0_59, %c0_60], %85 {strides = array<i32>} : memref<8x128xf32, #tpu.memory_space<vmem>>, vector<8x128xf32>,
    %cst_61 = arith.constant dense<0.000000e+00> : vector<8xf32>
    %87 = vector.multi_reduction <add>, %25, %cst_61 [1] : vector<8x128xf32> to vector<8xf32>
    %88 = vector.shape_cast %87 : vector<8xf32> to vector<8x1xf32>
    %cst_62 = arith.constant 1.280000e+02 : f32
    %89 = vector.broadcast %cst_62 : f32 to vector<8x1xf32>
    %90 = arith.divf %88, %89 : vector<8x1xf32>
    %cst_63 = arith.constant dense<0.000000e+00> : vector<8xf32>
    %91 = vector.multi_reduction <add>, %43, %cst_63 [1] : vector<8x128xf32> to vector<8xf32>
    %92 = vector.shape_cast %91 : vector<8xf32> to vector<8x1xf32>
    %cst_64 = arith.constant 1.280000e+02 : f32
    %93 = vector.broadcast %cst_64 : f32 to vector<8x1xf32>
    %94 = arith.divf %92, %93 : vector<8x1xf32>
    %cst_65 = arith.constant dense<0.000000e+00> : vector<8xf32>
    %95 = vector.multi_reduction <add>, %85, %cst_65 [1] : vector<8x128xf32> to vector<8xf32>
    %96 = vector.shape_cast %95 : vector<8xf32> to vector<8x1xf32>
    %cst_66 = arith.constant 1.280000e+02 : f32
    %97 = vector.broadcast %cst_66 : f32 to vector<8x1xf32>
    %98 = arith.divf %96, %97 : vector<8x1xf32>
    %cst_67 = arith.constant dense<0xFF800000> : vector<8xf32>
    %99 = vector.multi_reduction <maximumf>, %25, %cst_67 [1] : vector<8x128xf32> to vector<8xf32>
    %100 = vector.shape_cast %99 : vector<8xf32> to vector<8x1xf32>
    %cst_68 = arith.constant dense<0xFF800000> : vector<8xf32>
    %101 = vector.multi_reduction <maximumf>, %43, %cst_68 [1] : vector<8x128xf32> to vector<8xf32>
    %102 = vector.shape_cast %101 : vector<8xf32> to vector<8x1xf32>
    %cst_69 = arith.constant dense<0xFF800000> : vector<8xf32>
    %103 = vector.multi_reduction <maximumf>, %85, %cst_69 [1] : vector<8x128xf32> to vector<8xf32>
    %104 = vector.shape_cast %103 : vector<8xf32> to vector<8x1xf32>
    %c0_70 = arith.constant 0 : index
    %c0_71 = arith.constant 0 : index
    %105 = memref.load %arg21[%c0_70, %c0_71] : memref<3x3xf32, #tpu.memory_space<smem>>
    %106 = vector.broadcast %105 : f32 to vector<8x1xf32>
    %107 = arith.mulf %90, %106 : vector<8x1xf32>
    %c0_72 = arith.constant 0 : index
    %c1 = arith.constant 1 : index
    %108 = memref.load %arg21[%c0_72, %c1] : memref<3x3xf32, #tpu.memory_space<smem>>
    %109 = vector.broadcast %108 : f32 to vector<8x1xf32>
    %110 = arith.mulf %94, %109 : vector<8x1xf32>
    %111 = arith.addf %107, %110 : vector<8x1xf32>
    %c0_73 = arith.constant 0 : index
    %c2 = arith.constant 2 : index
    %112 = memref.load %arg21[%c0_73, %c2] : memref<3x3xf32, #tpu.memory_space<smem>>
    %113 = vector.broadcast %112 : f32 to vector<8x1xf32>
    %114 = arith.mulf %98, %113 : vector<8x1xf32>
    %115 = arith.addf %111, %114 : vector<8x1xf32>
    %c0_74 = arith.constant 0 : index
    %116 = memref.load %arg22[%c0_74] : memref<3xf32, #tpu.memory_space<smem>>
    %117 = vector.broadcast %116 : f32 to vector<8x1xf32>
    %118 = arith.addf %115, %117 : vector<8x1xf32>
    %cst_75 = arith.constant 5.000000e-01 : f32
    %119 = vector.broadcast %cst_75 : f32 to vector<8x1xf32>
    %120 = arith.mulf %119, %118 : vector<8x1xf32>
    %cst_76 = arith.constant 4.471500e-02 : f32
    %121 = vector.broadcast %cst_76 : f32 to vector<8x1xf32>
    %122 = arith.mulf %121, %118 : vector<8x1xf32>
    %123 = arith.mulf %122, %118 : vector<8x1xf32>
    %124 = arith.mulf %123, %118 : vector<8x1xf32>
    %125 = arith.addf %118, %124 : vector<8x1xf32>
    %cst_77 = arith.constant 0.797884583 : f32
    %126 = vector.broadcast %cst_77 : f32 to vector<8x1xf32>
    %127 = arith.mulf %126, %125 : vector<8x1xf32>
    %128 = math.tanh %127 : vector<8x1xf32>
    %cst_78 = arith.constant 1.000000e+00 : f32
    %129 = vector.broadcast %cst_78 : f32 to vector<8x1xf32>
    %130 = arith.addf %129, %128 : vector<8x1xf32>
    %131 = arith.mulf %120, %130 : vector<8x1xf32>
    %c1_79 = arith.constant 1 : index
    %c0_80 = arith.constant 0 : index
    %132 = memref.load %arg21[%c1_79, %c0_80] : memref<3x3xf32, #tpu.memory_space<smem>>
    %133 = vector.broadcast %132 : f32 to vector<8x1xf32>
    %134 = arith.mulf %90, %133 : vector<8x1xf32>
    %c1_81 = arith.constant 1 : index
    %c1_82 = arith.constant 1 : index
    %135 = memref.load %arg21[%c1_81, %c1_82] : memref<3x3xf32, #tpu.memory_space<smem>>
    %136 = vector.broadcast %135 : f32 to vector<8x1xf32>
    %137 = arith.mulf %94, %136 : vector<8x1xf32>
    %138 = arith.addf %134, %137 : vector<8x1xf32>
    %c1_83 = arith.constant 1 : index
    %c2_84 = arith.constant 2 : index
    %139 = memref.load %arg21[%c1_83, %c2_84] : memref<3x3xf32, #tpu.memory_space<smem>>
    %140 = vector.broadcast %139 : f32 to vector<8x1xf32>
    %141 = arith.mulf %98, %140 : vector<8x1xf32>
    %142 = arith.addf %138, %141 : vector<8x1xf32>
    %c1_85 = arith.constant 1 : index
    %143 = memref.load %arg22[%c1_85] : memref<3xf32, #tpu.memory_space<smem>>
    %144 = vector.broadcast %143 : f32 to vector<8x1xf32>
    %145 = arith.addf %142, %144 : vector<8x1xf32>
    %cst_86 = arith.constant 5.000000e-01 : f32
    %146 = vector.broadcast %cst_86 : f32 to vector<8x1xf32>
    %147 = arith.mulf %146, %145 : vector<8x1xf32>
    %cst_87 = arith.constant 4.471500e-02 : f32
    %148 = vector.broadcast %cst_87 : f32 to vector<8x1xf32>
    %149 = arith.mulf %148, %145 : vector<8x1xf32>
    %150 = arith.mulf %149, %145 : vector<8x1xf32>
    %151 = arith.mulf %150, %145 : vector<8x1xf32>
    %152 = arith.addf %145, %151 : vector<8x1xf32>
    %cst_88 = arith.constant 0.797884583 : f32
    %153 = vector.broadcast %cst_88 : f32 to vector<8x1xf32>
    %154 = arith.mulf %153, %152 : vector<8x1xf32>
    %155 = math.tanh %154 : vector<8x1xf32>
    %cst_89 = arith.constant 1.000000e+00 : f32
    %156 = vector.broadcast %cst_89 : f32 to vector<8x1xf32>
    %157 = arith.addf %156, %155 : vector<8x1xf32>
    %158 = arith.mulf %147, %157 : vector<8x1xf32>
    %c2_90 = arith.constant 2 : index
    %c0_91 = arith.constant 0 : index
    %159 = memref.load %arg21[%c2_90, %c0_91] : memref<3x3xf32, #tpu.memory_space<smem>>
    %160 = vector.broadcast %159 : f32 to vector<8x1xf32>
    %161 = arith.mulf %90, %160 : vector<8x1xf32>
    %c2_92 = arith.constant 2 : index
    %c1_93 = arith.constant 1 : index
    %162 = memref.load %arg21[%c2_92, %c1_93] : memref<3x3xf32, #tpu.memory_space<smem>>
    %163 = vector.broadcast %162 : f32 to vector<8x1xf32>
    %164 = arith.mulf %94, %163 : vector<8x1xf32>
    %165 = arith.addf %161, %164 : vector<8x1xf32>
    %c2_94 = arith.constant 2 : index
    %c2_95 = arith.constant 2 : index
    %166 = memref.load %arg21[%c2_94, %c2_95] : memref<3x3xf32, #tpu.memory_space<smem>>
    %167 = vector.broadcast %166 : f32 to vector<8x1xf32>
    %168 = arith.mulf %98, %167 : vector<8x1xf32>
    %169 = arith.addf %165, %168 : vector<8x1xf32>
    %c2_96 = arith.constant 2 : index
    %170 = memref.load %arg22[%c2_96] : memref<3xf32, #tpu.memory_space<smem>>
    %171 = vector.broadcast %170 : f32 to vector<8x1xf32>
    %172 = arith.addf %169, %171 : vector<8x1xf32>
    %cst_97 = arith.constant 5.000000e-01 : f32
    %173 = vector.broadcast %cst_97 : f32 to vector<8x1xf32>
    %174 = arith.mulf %173, %172 : vector<8x1xf32>
    %cst_98 = arith.constant 4.471500e-02 : f32
    %175 = vector.broadcast %cst_98 : f32 to vector<8x1xf32>
    %176 = arith.mulf %175, %172 : vector<8x1xf32>
    %177 = arith.mulf %176, %172 : vector<8x1xf32>
    %178 = arith.mulf %177, %172 : vector<8x1xf32>
    %179 = arith.addf %172, %178 : vector<8x1xf32>
    %cst_99 = arith.constant 0.797884583 : f32
    %180 = vector.broadcast %cst_99 : f32 to vector<8x1xf32>
    %181 = arith.mulf %180, %179 : vector<8x1xf32>
    %182 = math.tanh %181 : vector<8x1xf32>
    %cst_100 = arith.constant 1.000000e+00 : f32
    %183 = vector.broadcast %cst_100 : f32 to vector<8x1xf32>
    %184 = arith.addf %183, %182 : vector<8x1xf32>
    %185 = arith.mulf %174, %184 : vector<8x1xf32>
    %c0_101 = arith.constant 0 : index
    %c0_102 = arith.constant 0 : index
    %186 = memref.load %arg23[%c0_101, %c0_102] : memref<3x3xf32, #tpu.memory_space<smem>>
    %187 = vector.broadcast %186 : f32 to vector<8x1xf32>
    %188 = arith.mulf %131, %187 : vector<8x1xf32>
    %c0_103 = arith.constant 0 : index
    %c1_104 = arith.constant 1 : index
    %189 = memref.load %arg23[%c0_103, %c1_104] : memref<3x3xf32, #tpu.memory_space<smem>>
    %190 = vector.broadcast %189 : f32 to vector<8x1xf32>
    %191 = arith.mulf %158, %190 : vector<8x1xf32>
    %192 = arith.addf %188, %191 : vector<8x1xf32>
    %c0_105 = arith.constant 0 : index
    %c2_106 = arith.constant 2 : index
    %193 = memref.load %arg23[%c0_105, %c2_106] : memref<3x3xf32, #tpu.memory_space<smem>>
    %194 = vector.broadcast %193 : f32 to vector<8x1xf32>
    %195 = arith.mulf %185, %194 : vector<8x1xf32>
    %196 = arith.addf %192, %195 : vector<8x1xf32>
    %c0_107 = arith.constant 0 : index
    %197 = memref.load %arg24[%c0_107] : memref<3xf32, #tpu.memory_space<smem>>
    %198 = vector.broadcast %197 : f32 to vector<8x1xf32>
    %199 = arith.addf %196, %198 : vector<8x1xf32>
    %c1_108 = arith.constant 1 : index
    %c0_109 = arith.constant 0 : index
    %200 = memref.load %arg23[%c1_108, %c0_109] : memref<3x3xf32, #tpu.memory_space<smem>>
    %201 = vector.broadcast %200 : f32 to vector<8x1xf32>
    %202 = arith.mulf %131, %201 : vector<8x1xf32>
    %c1_110 = arith.constant 1 : index
    %c1_111 = arith.constant 1 : index
    %203 = memref.load %arg23[%c1_110, %c1_111] : memref<3x3xf32, #tpu.memory_space<smem>>
    %204 = vector.broadcast %203 : f32 to vector<8x1xf32>
    %205 = arith.mulf %158, %204 : vector<8x1xf32>
    %206 = arith.addf %202, %205 : vector<8x1xf32>
    %c1_112 = arith.constant 1 : index
    %c2_113 = arith.constant 2 : index
    %207 = memref.load %arg23[%c1_112, %c2_113] : memref<3x3xf32, #tpu.memory_space<smem>>
    %208 = vector.broadcast %207 : f32 to vector<8x1xf32>
    %209 = arith.mulf %185, %208 : vector<8x1xf32>
    %210 = arith.addf %206, %209 : vector<8x1xf32>
    %c1_114 = arith.constant 1 : index
    %211 = memref.load %arg24[%c1_114] : memref<3xf32, #tpu.memory_space<smem>>
    %212 = vector.broadcast %211 : f32 to vector<8x1xf32>
    %213 = arith.addf %210, %212 : vector<8x1xf32>
    %c2_115 = arith.constant 2 : index
    %c0_116 = arith.constant 0 : index
    %214 = memref.load %arg23[%c2_115, %c0_116] : memref<3x3xf32, #tpu.memory_space<smem>>
    %215 = vector.broadcast %214 : f32 to vector<8x1xf32>
    %216 = arith.mulf %131, %215 : vector<8x1xf32>
    %c2_117 = arith.constant 2 : index
    %c1_118 = arith.constant 1 : index
    %217 = memref.load %arg23[%c2_117, %c1_118] : memref<3x3xf32, #tpu.memory_space<smem>>
    %218 = vector.broadcast %217 : f32 to vector<8x1xf32>
    %219 = arith.mulf %158, %218 : vector<8x1xf32>
    %220 = arith.addf %216, %219 : vector<8x1xf32>
    %c2_119 = arith.constant 2 : index
    %c2_120 = arith.constant 2 : index
    %221 = memref.load %arg23[%c2_119, %c2_120] : memref<3x3xf32, #tpu.memory_space<smem>>
    %222 = vector.broadcast %221 : f32 to vector<8x1xf32>
    %223 = arith.mulf %185, %222 : vector<8x1xf32>
    %224 = arith.addf %220, %223 : vector<8x1xf32>
    %c2_121 = arith.constant 2 : index
    %225 = memref.load %arg24[%c2_121] : memref<3xf32, #tpu.memory_space<smem>>
    %226 = vector.broadcast %225 : f32 to vector<8x1xf32>
    %227 = arith.addf %224, %226 : vector<8x1xf32>
    %c0_122 = arith.constant 0 : index
    %c0_123 = arith.constant 0 : index
    %228 = memref.load %arg21[%c0_122, %c0_123] : memref<3x3xf32, #tpu.memory_space<smem>>
    %229 = vector.broadcast %228 : f32 to vector<8x1xf32>
    %230 = arith.mulf %100, %229 : vector<8x1xf32>
    %c0_124 = arith.constant 0 : index
    %c1_125 = arith.constant 1 : index
    %231 = memref.load %arg21[%c0_124, %c1_125] : memref<3x3xf32, #tpu.memory_space<smem>>
    %232 = vector.broadcast %231 : f32 to vector<8x1xf32>
    %233 = arith.mulf %102, %232 : vector<8x1xf32>
    %234 = arith.addf %230, %233 : vector<8x1xf32>
    %c0_126 = arith.constant 0 : index
    %c2_127 = arith.constant 2 : index
    %235 = memref.load %arg21[%c0_126, %c2_127] : memref<3x3xf32, #tpu.memory_space<smem>>
    %236 = vector.broadcast %235 : f32 to vector<8x1xf32>
    %237 = arith.mulf %104, %236 : vector<8x1xf32>
    %238 = arith.addf %234, %237 : vector<8x1xf32>
    %c0_128 = arith.constant 0 : index
    %239 = memref.load %arg22[%c0_128] : memref<3xf32, #tpu.memory_space<smem>>
    %240 = vector.broadcast %239 : f32 to vector<8x1xf32>
    %241 = arith.addf %238, %240 : vector<8x1xf32>
    %cst_129 = arith.constant 5.000000e-01 : f32
    %242 = vector.broadcast %cst_129 : f32 to vector<8x1xf32>
    %243 = arith.mulf %242, %241 : vector<8x1xf32>
    %cst_130 = arith.constant 4.471500e-02 : f32
    %244 = vector.broadcast %cst_130 : f32 to vector<8x1xf32>
    %245 = arith.mulf %244, %241 : vector<8x1xf32>
    %246 = arith.mulf %245, %241 : vector<8x1xf32>
    %247 = arith.mulf %246, %241 : vector<8x1xf32>
    %248 = arith.addf %241, %247 : vector<8x1xf32>
    %cst_131 = arith.constant 0.797884583 : f32
    %249 = vector.broadcast %cst_131 : f32 to vector<8x1xf32>
    %250 = arith.mulf %249, %248 : vector<8x1xf32>
    %251 = math.tanh %250 : vector<8x1xf32>
    %cst_132 = arith.constant 1.000000e+00 : f32
    %252 = vector.broadcast %cst_132 : f32 to vector<8x1xf32>
    %253 = arith.addf %252, %251 : vector<8x1xf32>
    %254 = arith.mulf %243, %253 : vector<8x1xf32>
    %c1_133 = arith.constant 1 : index
    %c0_134 = arith.constant 0 : index
    %255 = memref.load %arg21[%c1_133, %c0_134] : memref<3x3xf32, #tpu.memory_space<smem>>
    %256 = vector.broadcast %255 : f32 to vector<8x1xf32>
    %257 = arith.mulf %100, %256 : vector<8x1xf32>
    %c1_135 = arith.constant 1 : index
    %c1_136 = arith.constant 1 : index
    %258 = memref.load %arg21[%c1_135, %c1_136] : memref<3x3xf32, #tpu.memory_space<smem>>
    %259 = vector.broadcast %258 : f32 to vector<8x1xf32>
    %260 = arith.mulf %102, %259 : vector<8x1xf32>
    %261 = arith.addf %257, %260 : vector<8x1xf32>
    %c1_137 = arith.constant 1 : index
    %c2_138 = arith.constant 2 : index
    %262 = memref.load %arg21[%c1_137, %c2_138] : memref<3x3xf32, #tpu.memory_space<smem>>
    %263 = vector.broadcast %262 : f32 to vector<8x1xf32>
    %264 = arith.mulf %104, %263 : vector<8x1xf32>
    %265 = arith.addf %261, %264 : vector<8x1xf32>
    %c1_139 = arith.constant 1 : index
    %266 = memref.load %arg22[%c1_139] : memref<3xf32, #tpu.memory_space<smem>>
    %267 = vector.broadcast %266 : f32 to vector<8x1xf32>
    %268 = arith.addf %265, %267 : vector<8x1xf32>
    %cst_140 = arith.constant 5.000000e-01 : f32
    %269 = vector.broadcast %cst_140 : f32 to vector<8x1xf32>
    %270 = arith.mulf %269, %268 : vector<8x1xf32>
    %cst_141 = arith.constant 4.471500e-02 : f32
    %271 = vector.broadcast %cst_141 : f32 to vector<8x1xf32>
    %272 = arith.mulf %271, %268 : vector<8x1xf32>
    %273 = arith.mulf %272, %268 : vector<8x1xf32>
    %274 = arith.mulf %273, %268 : vector<8x1xf32>
    %275 = arith.addf %268, %274 : vector<8x1xf32>
    %cst_142 = arith.constant 0.797884583 : f32
    %276 = vector.broadcast %cst_142 : f32 to vector<8x1xf32>
    %277 = arith.mulf %276, %275 : vector<8x1xf32>
    %278 = math.tanh %277 : vector<8x1xf32>
    %cst_143 = arith.constant 1.000000e+00 : f32
    %279 = vector.broadcast %cst_143 : f32 to vector<8x1xf32>
    %280 = arith.addf %279, %278 : vector<8x1xf32>
    %281 = arith.mulf %270, %280 : vector<8x1xf32>
    %c2_144 = arith.constant 2 : index
    %c0_145 = arith.constant 0 : index
    %282 = memref.load %arg21[%c2_144, %c0_145] : memref<3x3xf32, #tpu.memory_space<smem>>
    %283 = vector.broadcast %282 : f32 to vector<8x1xf32>
    %284 = arith.mulf %100, %283 : vector<8x1xf32>
    %c2_146 = arith.constant 2 : index
    %c1_147 = arith.constant 1 : index
    %285 = memref.load %arg21[%c2_146, %c1_147] : memref<3x3xf32, #tpu.memory_space<smem>>
    %286 = vector.broadcast %285 : f32 to vector<8x1xf32>
    %287 = arith.mulf %102, %286 : vector<8x1xf32>
    %288 = arith.addf %284, %287 : vector<8x1xf32>
    %c2_148 = arith.constant 2 : index
    %c2_149 = arith.constant 2 : index
    %289 = memref.load %arg21[%c2_148, %c2_149] : memref<3x3xf32, #tpu.memory_space<smem>>
    %290 = vector.broadcast %289 : f32 to vector<8x1xf32>
    %291 = arith.mulf %104, %290 : vector<8x1xf32>
    %292 = arith.addf %288, %291 : vector<8x1xf32>
    %c2_150 = arith.constant 2 : index
    %293 = memref.load %arg22[%c2_150] : memref<3xf32, #tpu.memory_space<smem>>
    %294 = vector.broadcast %293 : f32 to vector<8x1xf32>
    %295 = arith.addf %292, %294 : vector<8x1xf32>
    %cst_151 = arith.constant 5.000000e-01 : f32
    %296 = vector.broadcast %cst_151 : f32 to vector<8x1xf32>
    %297 = arith.mulf %296, %295 : vector<8x1xf32>
    %cst_152 = arith.constant 4.471500e-02 : f32
    %298 = vector.broadcast %cst_152 : f32 to vector<8x1xf32>
    %299 = arith.mulf %298, %295 : vector<8x1xf32>
    %300 = arith.mulf %299, %295 : vector<8x1xf32>
    %301 = arith.mulf %300, %295 : vector<8x1xf32>
    %302 = arith.addf %295, %301 : vector<8x1xf32>
    %cst_153 = arith.constant 0.797884583 : f32
    %303 = vector.broadcast %cst_153 : f32 to vector<8x1xf32>
    %304 = arith.mulf %303, %302 : vector<8x1xf32>
    %305 = math.tanh %304 : vector<8x1xf32>
    %cst_154 = arith.constant 1.000000e+00 : f32
    %306 = vector.broadcast %cst_154 : f32 to vector<8x1xf32>
    %307 = arith.addf %306, %305 : vector<8x1xf32>
    %308 = arith.mulf %297, %307 : vector<8x1xf32>
    %c0_155 = arith.constant 0 : index
    %c0_156 = arith.constant 0 : index
    %309 = memref.load %arg23[%c0_155, %c0_156] : memref<3x3xf32, #tpu.memory_space<smem>>
    %310 = vector.broadcast %309 : f32 to vector<8x1xf32>
    %311 = arith.mulf %254, %310 : vector<8x1xf32>
    %c0_157 = arith.constant 0 : index
    %c1_158 = arith.constant 1 : index
    %312 = memref.load %arg23[%c0_157, %c1_158] : memref<3x3xf32, #tpu.memory_space<smem>>
    %313 = vector.broadcast %312 : f32 to vector<8x1xf32>
    %314 = arith.mulf %281, %313 : vector<8x1xf32>
    %315 = arith.addf %311, %314 : vector<8x1xf32>
    %c0_159 = arith.constant 0 : index
    %c2_160 = arith.constant 2 : index
    %316 = memref.load %arg23[%c0_159, %c2_160] : memref<3x3xf32, #tpu.memory_space<smem>>
    %317 = vector.broadcast %316 : f32 to vector<8x1xf32>
    %318 = arith.mulf %308, %317 : vector<8x1xf32>
    %319 = arith.addf %315, %318 : vector<8x1xf32>
    %c0_161 = arith.constant 0 : index
    %320 = memref.load %arg24[%c0_161] : memref<3xf32, #tpu.memory_space<smem>>
    %321 = vector.broadcast %320 : f32 to vector<8x1xf32>
    %322 = arith.addf %319, %321 : vector<8x1xf32>
    %c1_162 = arith.constant 1 : index
    %c0_163 = arith.constant 0 : index
    %323 = memref.load %arg23[%c1_162, %c0_163] : memref<3x3xf32, #tpu.memory_space<smem>>
    %324 = vector.broadcast %323 : f32 to vector<8x1xf32>
    %325 = arith.mulf %254, %324 : vector<8x1xf32>
    %c1_164 = arith.constant 1 : index
    %c1_165 = arith.constant 1 : index
    %326 = memref.load %arg23[%c1_164, %c1_165] : memref<3x3xf32, #tpu.memory_space<smem>>
    %327 = vector.broadcast %326 : f32 to vector<8x1xf32>
    %328 = arith.mulf %281, %327 : vector<8x1xf32>
    %329 = arith.addf %325, %328 : vector<8x1xf32>
    %c1_166 = arith.constant 1 : index
    %c2_167 = arith.constant 2 : index
    %330 = memref.load %arg23[%c1_166, %c2_167] : memref<3x3xf32, #tpu.memory_space<smem>>
    %331 = vector.broadcast %330 : f32 to vector<8x1xf32>
    %332 = arith.mulf %308, %331 : vector<8x1xf32>
    %333 = arith.addf %329, %332 : vector<8x1xf32>
    %c1_168 = arith.constant 1 : index
    %334 = memref.load %arg24[%c1_168] : memref<3xf32, #tpu.memory_space<smem>>
    %335 = vector.broadcast %334 : f32 to vector<8x1xf32>
    %336 = arith.addf %333, %335 : vector<8x1xf32>
    %c2_169 = arith.constant 2 : index
    %c0_170 = arith.constant 0 : index
    %337 = memref.load %arg23[%c2_169, %c0_170] : memref<3x3xf32, #tpu.memory_space<smem>>
    %338 = vector.broadcast %337 : f32 to vector<8x1xf32>
    %339 = arith.mulf %254, %338 : vector<8x1xf32>
    %c2_171 = arith.constant 2 : index
    %c1_172 = arith.constant 1 : index
    %340 = memref.load %arg23[%c2_171, %c1_172] : memref<3x3xf32, #tpu.memory_space<smem>>
    %341 = vector.broadcast %340 : f32 to vector<8x1xf32>
    %342 = arith.mulf %281, %341 : vector<8x1xf32>
    %343 = arith.addf %339, %342 : vector<8x1xf32>
    %c2_173 = arith.constant 2 : index
    %c2_174 = arith.constant 2 : index
    %344 = memref.load %arg23[%c2_173, %c2_174] : memref<3x3xf32, #tpu.memory_space<smem>>
    %345 = vector.broadcast %344 : f32 to vector<8x1xf32>
    %346 = arith.mulf %308, %345 : vector<8x1xf32>
    %347 = arith.addf %343, %346 : vector<8x1xf32>
    %c2_175 = arith.constant 2 : index
    %348 = memref.load %arg24[%c2_175] : memref<3xf32, #tpu.memory_space<smem>>
    %349 = vector.broadcast %348 : f32 to vector<8x1xf32>
    %350 = arith.addf %347, %349 : vector<8x1xf32>
    %351 = arith.addf %199, %322 : vector<8x1xf32>
    %cst_176 = arith.constant 0.000000e+00 : f32
    %352 = vector.broadcast %cst_176 : f32 to vector<8x1xf32>
    %353 = arith.subf %352, %351 : vector<8x1xf32>
    %354 = math.exp %353 : vector<8x1xf32>
    %cst_177 = arith.constant 1.000000e+00 : f32
    %355 = vector.broadcast %cst_177 : f32 to vector<8x1xf32>
    %356 = arith.addf %355, %354 : vector<8x1xf32>
    %cst_178 = arith.constant 1.000000e+00 : f32
    %357 = vector.broadcast %cst_178 : f32 to vector<8x1xf32>
    %358 = arith.divf %357, %356 : vector<8x1xf32>
    %359 = vector.broadcast %358 : vector<8x1xf32> to vector<8x128xf32>
    %360 = arith.mulf %359, %25 : vector<8x128xf32>
    %c0_179 = arith.constant 0 : index
    %c0_180 = arith.constant 0 : index
    %361 = vector.load %arg28[%c0_179, %c0_180] : memref<8x384xf32, #tpu.memory_space<vmem>>, vector<8x128xf32>
    tpu.vector_store %arg28[%c0_179, %c0_180], %360 {strides = array<i32>} : memref<8x384xf32, #tpu.memory_space<vmem>>, vector<8x128xf32>,
    %362 = arith.addf %213, %336 : vector<8x1xf32>
    %cst_181 = arith.constant 0.000000e+00 : f32
    %363 = vector.broadcast %cst_181 : f32 to vector<8x1xf32>
    %364 = arith.subf %363, %362 : vector<8x1xf32>
    %365 = math.exp %364 : vector<8x1xf32>
    %cst_182 = arith.constant 1.000000e+00 : f32
    %366 = vector.broadcast %cst_182 : f32 to vector<8x1xf32>
    %367 = arith.addf %366, %365 : vector<8x1xf32>
    %cst_183 = arith.constant 1.000000e+00 : f32
    %368 = vector.broadcast %cst_183 : f32 to vector<8x1xf32>
    %369 = arith.divf %368, %367 : vector<8x1xf32>
    %370 = vector.broadcast %369 : vector<8x1xf32> to vector<8x128xf32>
    %371 = arith.mulf %370, %43 : vector<8x128xf32>
    %c0_184 = arith.constant 0 : index
    %c128 = arith.constant 128 : index
    %372 = vector.load %arg28[%c0_184, %c128] : memref<8x384xf32, #tpu.memory_space<vmem>>, vector<8x128xf32>
    tpu.vector_store %arg28[%c0_184, %c128], %371 {strides = array<i32>} : memref<8x384xf32, #tpu.memory_space<vmem>>, vector<8x128xf32>,
    %373 = arith.addf %227, %350 : vector<8x1xf32>
    %cst_185 = arith.constant 0.000000e+00 : f32
    %374 = vector.broadcast %cst_185 : f32 to vector<8x1xf32>
    %375 = arith.subf %374, %373 : vector<8x1xf32>
    %376 = math.exp %375 : vector<8x1xf32>
    %cst_186 = arith.constant 1.000000e+00 : f32
    %377 = vector.broadcast %cst_186 : f32 to vector<8x1xf32>
    %378 = arith.addf %377, %376 : vector<8x1xf32>
    %cst_187 = arith.constant 1.000000e+00 : f32
    %379 = vector.broadcast %cst_187 : f32 to vector<8x1xf32>
    %380 = arith.divf %379, %378 : vector<8x1xf32>
    %381 = vector.broadcast %380 : vector<8x1xf32> to vector<8x128xf32>
    %382 = arith.mulf %381, %85 : vector<8x128xf32>
    %c0_188 = arith.constant 0 : index
    %c256 = arith.constant 256 : index
    %383 = vector.load %arg28[%c0_188, %c256] : memref<8x384xf32, #tpu.memory_space<vmem>>, vector<8x128xf32>
    tpu.vector_store %arg28[%c0_188, %c256], %382 {strides = array<i32>} : memref<8x384xf32, #tpu.memory_space<vmem>>, vector<8x128xf32>,
    %cst_189 = arith.constant dense<0x7F800000> : vector<8xf32>
    %384 = vector.multi_reduction <minimumf>, %25, %cst_189 [1] : vector<8x128xf32> to vector<8xf32>
    %385 = vector.shape_cast %384 : vector<8xf32> to vector<8x1xf32>
    %cst_190 = arith.constant dense<0x7F800000> : vector<1xf32>
    %386 = vector.multi_reduction <minimumf>, %385, %cst_190 [0] : vector<8x1xf32> to vector<1xf32>
    %387 = vector.shape_cast %386 : vector<1xf32> to vector<1x1xf32>
    %cst_191 = arith.constant dense<0xFF800000> : vector<8xf32>
    %388 = vector.multi_reduction <maximumf>, %25, %cst_191 [1] : vector<8x128xf32> to vector<8xf32>
    %389 = vector.shape_cast %388 : vector<8xf32> to vector<8x1xf32>
    %cst_192 = arith.constant dense<0xFF800000> : vector<1xf32>
    %390 = vector.multi_reduction <maximumf>, %389, %cst_192 [0] : vector<8x1xf32> to vector<1xf32>
    %391 = vector.shape_cast %390 : vector<1xf32> to vector<1x1xf32>
    %392 = arith.subf %391, %387 : vector<1x1xf32>
    %cst_193 = arith.constant 0.000000e+00 : f32
    %393 = vector.broadcast %cst_193 : f32 to vector<1x1xf32>
    %394 = arith.cmpf oeq, %392, %393 : vector<1x1xf32>
    %cst_194 = arith.constant 9.99999997E-7 : f32
    %395 = vector.broadcast %cst_194 : f32 to vector<1x1xf32>
    %396 = arith.addf %392, %395 : vector<1x1xf32>
    %397 = arith.select %394, %396, %392 : vector<1x1xi1>, vector<1x1xf32>
    %398 = vector.broadcast %387 : vector<1x1xf32> to vector<8x128xf32>
    %399 = arith.subf %25, %398 : vector<8x128xf32>
    %400 = vector.broadcast %397 : vector<1x1xf32> to vector<8x128xf32>
    %401 = arith.divf %399, %400 : vector<8x128xf32>
    %cst_195 = arith.constant 2.000000e+00 : f32
    %402 = vector.broadcast %cst_195 : f32 to vector<8x128xf32>
    %403 = arith.mulf %402, %401 : vector<8x128xf32>
    %cst_196 = arith.constant 1.000000e+00 : f32
    %404 = vector.broadcast %cst_196 : f32 to vector<8x128xf32>
    %405 = arith.subf %403, %404 : vector<8x128xf32>
    %c0_197 = arith.constant 0 : index
    %c0_198 = arith.constant 0 : index
    %406 = vector.load %arg25[%c0_197, %c0_198] : memref<8x128xf32, #tpu.memory_space<vmem>>, vector<8x128xf32>
    tpu.vector_store %arg25[%c0_197, %c0_198], %405 {strides = array<i32>} : memref<8x128xf32, #tpu.memory_space<vmem>>, vector<8x128xf32>,
    return
  }
}

module attributes {stable_mosaic.version = 11 : i64} {
  func.func @_linear_kernel_1step(%arg0: i32, %arg1: i32, %arg2: memref<8x128xf32, #tpu.memory_space<vmem>>, %arg3: memref<128x3072xbf16, #tpu.memory_space<vmem>>, %arg4: memref<1x3072xf32, #tpu.memory_space<vmem>>, %arg5: memref<8x3072xbf16, #tpu.memory_space<vmem>>) attributes {dimension_semantics = [#tpu.dimension_semantics<parallel>, #tpu.dimension_semantics<arbitrary>], iteration_bounds = array<i64: 1, 1>, scalar_prefetch = 0 : i64, scratch_operands = 0 : i64, tpu.core_type = #tpu.core_type<tc>, window_params = [{transform_indices = @transform_0, window_bounds = array<i64: 8, 128>}, {transform_indices = @transform_1, window_bounds = array<i64: 128, 3072>}, {transform_indices = @transform_2, window_bounds = array<i64: 1, 3072>}, {transform_indices = @transform_3, window_bounds = array<i64: 8, 3072>}]} {
    %c0 = arith.constant 0 : index
    %c0_0 = arith.constant 0 : index
    %0 = vector.load %arg2[%c0, %c0_0] : memref<8x128xf32, #tpu.memory_space<vmem>>, vector<8x128xf32>
    %1 = arith.truncf %0 : vector<8x128xf32> to vector<8x128xbf16>
    %c0_1 = arith.constant 0 : index
    %c0_2 = arith.constant 0 : index
    %2 = vector.load %arg3[%c0_1, %c0_2] : memref<128x3072xbf16, #tpu.memory_space<vmem>>, vector<128x3072xbf16>
    %cst = arith.constant dense<0.000000e+00> : vector<8x3072xf32>
    %3 = tpu.matmul %1, %2, %cst {dimension_numbers = #tpu.dot_dimension_numbers<[1], [0], [0], [1], [0, 0, 1, 1], [], []>} : vector<8x128xbf16>, vector<128x3072xbf16>, vector<8x3072xf32> -> vector<8x3072xf32>
    %c0_3 = arith.constant 0 : index
    %c0_4 = arith.constant 0 : index
    %4 = vector.load %arg4[%c0_3, %c0_4] : memref<1x3072xf32, #tpu.memory_space<vmem>>, vector<1x3072xf32>
    %5 = vector.broadcast %4 : vector<1x3072xf32> to vector<8x3072xf32>
    %6 = arith.addf %3, %5 : vector<8x3072xf32>
    %7 = arith.truncf %6 : vector<8x3072xf32> to vector<8x3072xbf16>
    %c0_5 = arith.constant 0 : index
    %c0_6 = arith.constant 0 : index
    %8 = vector.load %arg5[%c0_5, %c0_6] : memref<8x3072xbf16, #tpu.memory_space<vmem>>, vector<8x3072xbf16>
    tpu.vector_store %arg5[%c0_5, %c0_6], %7 {strides = array<i32>} : memref<8x3072xbf16, #tpu.memory_space<vmem>>, vector<8x3072xbf16>,
    return
  }
  func.func @transform_0(%arg0: i32, %arg1: i32) -> (i32, i32) {
    %c0_i32 = arith.constant 0 : i32
    %c0_i32_0 = arith.constant 0 : i32
    return %c0_i32, %arg1 : i32, i32
  }
  func.func @transform_1(%arg0: i32, %arg1: i32) -> (i32, i32) {
    %c0_i32 = arith.constant 0 : i32
    return %arg1, %arg0 : i32, i32
  }
  func.func @transform_2(%arg0: i32, %arg1: i32) -> (i32, i32) {
    %c0_i32 = arith.constant 0 : i32
    %c0_i32_0 = arith.constant 0 : i32
    return %c0_i32, %arg0 : i32, i32
  }
  func.func @transform_3(%arg0: i32, %arg1: i32) -> (i32, i32) {
    %c0_i32 = arith.constant 0 : i32
    %c0_i32_0 = arith.constant 0 : i32
    return %c0_i32, %arg0 : i32, i32
  }
}

</mosaic_0001>

<llo_original>
// kernel: multimodal_forward.4
$region0: #{multimodal_forward.4}
  #allocation0 [shape = 'u32[]', space=smem, size = 0x4, offset = 0x4, fixed_abs, tag = 'smem constant byte address 0x4 - core index']
  #allocation1 [shape = 'u32[72,128]{1,0:T(1,128)}', space=vmem, size = 0x9000, scoped, tag = 'internal scratch']
  %s0 = inlined_call_operand.vmem [shape: f32[13,512], index: 0, kind: input, shape index: {}]
  %s1 = inlined_call_operand.vmem [shape: f32[13,1], index: 1, kind: input, shape index: {}]
  %s2 = inlined_call_operand.vmem [shape: f32[1,512], index: 2, kind: output, shape index: {}]
  %s3 = sld [smem:[#allocation0]]
  $region18: #{multimodal_forward.4} parent=0
    _
  %s5 = ssub.s32 1, %s3
  %s6 = scalar_select 0, %s5, %s3
  // Predicated region
  $region2: #{multimodal_forward.4} parent=0 // pred_check
    _
  $region3: #{multimodal_forward.4} parent=0 // pred_check_branch
    %8 = sbr.rel (0) target = $region5
  $region4: #{multimodal_forward.4} parent=0 // pred_region
    _
  $region5: #{multimodal_forward.4} parent=0 // pred_fallthru
    _
  // Predicated region
  $region6: #{multimodal_forward.4} parent=0 // pred_check
    _
  $region7: #{multimodal_forward.4} parent=0 // pred_check_branch
    %10 = sbr.rel (0) target = $region9
  $region8: #{multimodal_forward.4} parent=0 // pred_region
    _
  $region9: #{multimodal_forward.4} parent=0 // pred_fallthru
    _
  %v11 = vld [vmem:[%s0] sm:$0xff]
  %v12 = vld [vmem:[%s0 + $0x8] sm:$0xff]
  %v13 = vld [vmem:[%s0 + $0x10] sm:$0xff]
  %v14 = vld [vmem:[%s0 + $0x18] sm:$0xff]
  %v15 = vld [vmem:[%s0 + $0x20] sm:$0x1f]
  %v16 = vld [vmem:[%s0 + $0x28] sm:$0x1f]
  %v17 = vld [vmem:[%s0 + $0x30] sm:$0x1f]
  %v18 = vld [vmem:[%s0 + $0x38] sm:$0x1f]
  %v19 = vld [vmem:[%s1] sm:$0xff]
  %v20 = vld [vmem:[%s1 + $0x8] sm:$0x1f]
  %v21 = vadd.f32 %v11, %v12
  %v22 = vadd.f32 %v21, %v13
  %v23 = vadd.f32 %v22, %v14
  %24 = vadd.xlane.f32.xlu0 %v23
  %v25 = vpop.xlane.xlu0 %24
  %vm26 = vcmask 1044480
  %v27 = vsel %vm26, %v15, 0.0
  %v28 = vsel %vm26, %v16, 0.0
  %v29 = vadd.f32 %v27, %v28
  %v30 = vsel %vm26, %v17, 0.0
  %v31 = vadd.f32 %v29, %v30
  %v32 = vsel %vm26, %v18, 0.0
  %v33 = vadd.f32 %v31, %v32
  %34 = vadd.xlane.f32.xlu0 %v33
  %v35 = vpop.xlane.xlu0 %34
  %v36 = vmul.f32 %v25, %v19
  %v37 = vmul.f32 %v35, %v20
  %vm38 = vcmask 7168
  %v39 = vsel %vm38, %v36, -inf
  %vm40 = vcmask 4096
  %v41 = vsel %vm40, %v37, -inf
  %v42 = vmax.f32 %v39, %v41
  %v43 = vrot.slane %v42, 4
  %v44 = vmax.f32 %v42, %v43
  %v45 = vrot.slane %v44, 2
  %v46 = vmax.f32 %v44, %v45
  %v47 = vrot.slane %v46, 1
  %v48 = vmax.f32 %v46, %v47
  %v49 = vsub.f32 %v36, %v48
  %v50 = vsub.f32 %v37, %v48
  %v51 = vmul.f32 %v49, 1.442695
  %v52 = vpow.pop %v51
  %v53 = vmul.f32 %v50, 1.442695
  %v54 = vpow.pop %v53
  %v55 = vsel %vm38, %v52, 0.0
  %v56 = vsel %vm40, %v54, 0.0
  %v57 = vadd.f32 %v55, %v56
  %v58 = vrot.slane %v57, 4
  %v59 = vadd.f32 %v57, %v58
  %v60 = vrot.slane %v59, 2
  %v61 = vadd.f32 %v59, %v60
  %v62 = vrot.slane %v61, 1
  %v63 = vadd.f32 %v61, %v62
  %v64 = vrcp.pop %v63
  %v65 = vmul.f32 %v63, %v64
  %v66 = vsub.f32 1.0, %v65
  %v67 = vmul.f32 %v64, %v66
  %v68 = vadd.f32 %v64, %v67
  %vm69 = vweird.f32 %v63
  %vm70 = vweird.f32 %v64
  %vm71 = vmor %vm69, %vm70
  %v72 = vsel %vm71, %v64, %v68
  %v73 = vand.u32 2147483647, %v63
  %vm74 = vcmp.eq.f32.partialorder %v73, 8.507059e+37
  %v75 = vand.u32 %v63, 2147483648
  %v76 = vor.u32 1.1754944e-38, %v75
  %v77 = vsel %vm74, %v76, %v72
  %v78 = vmul.f32 %v52, %v77
  %v79 = vmul.f32 %v54, %v77
  %81 = vset.pattern.permute.xlu0 0
  %82 = vperm.xlu0 %81, %v78
  %v83 = vpop.permute.xlu0 %82
  %86 = vset.pattern.permute.xlu0 0
  %87 = vperm.xlu0 %86, %v79
  %v88 = vpop.permute.xlu0 %87
  %v90 = vmul.f32 %v11, %v83
  %v91 = vmul.f32 %v12, %v83
  %v92 = vmul.f32 %v13, %v83
  %v93 = vmul.f32 %v14, %v83
  %v94 = vmul.f32 %v15, %v88
  %v95 = vmul.f32 %v16, %v88
  %v96 = vmul.f32 %v17, %v88
  %v97 = vmul.f32 %v18, %v88
  %v98 = vsel %vm26, %v94, 0.0
  %v99 = vadd.f32 %v90, %v98
  %v100 = vrot.slane %v99, 4
  %v101 = vadd.f32 %v99, %v100
  %v102 = vrot.slane %v101, 2
  %v103 = vadd.f32 %v101, %v102
  %v104 = vrot.slane %v103, 1
  %v105 = vadd.f32 %v103, %v104
  %v106 = vsel %vm26, %v95, 0.0
  %v107 = vadd.f32 %v91, %v106
  %v108 = vrot.slane %v107, 4
  %v109 = vadd.f32 %v107, %v108
  %v110 = vrot.slane %v109, 2
  %v111 = vadd.f32 %v109, %v110
  %v112 = vrot.slane %v111, 1
  %v113 = vadd.f32 %v111, %v112
  %v114 = vsel %vm26, %v96, 0.0
  %v115 = vadd.f32 %v92, %v114
  %v116 = vrot.slane %v115, 4
  %v117 = vadd.f32 %v115, %v116
  %v118 = vrot.slane %v117, 2
  %v119 = vadd.f32 %v117, %v118
  %v120 = vrot.slane %v119, 1
  %v121 = vadd.f32 %v119, %v120
  %v122 = vsel %vm26, %v97, 0.0
  %v123 = vadd.f32 %v93, %v122
  %v124 = vrot.slane %v123, 4
  %v125 = vadd.f32 %v123, %v124
  %v126 = vrot.slane %v125, 2
  %v127 = vadd.f32 %v125, %v126
  %v128 = vrot.slane %v127, 1
  %v129 = vadd.f32 %v127, %v128
  %v134 = vrot.slane %v113, 7
  %v135 = vrot.slane %v121, 6
  %v136 = vrot.slane %v129, 5
  %vm137 = vcmask 1040384
  %v138 = vsel %vm137, %v105, %v134
  %vm139 = vcmask 1042434
  %v140 = vsel %vm139, %v135, %v136
  %vm141 = vcmask 1041408
  %v142 = vsel %vm141, %v138, %v140
  %v144 = vlaneseq
  %vm145 = vcmp.ge.s32.totalorder %v144, 0
  %vm146 = vcmp.lt.s32.totalorder %v144, 512
  %vm147 = vmand %vm145, %vm146
  %148 = vst.msk [vmem:[%s2] sm:$0xf] %vm147, %v142
  // Predicated region
  $region10: #{multimodal_forward.4} parent=0 // pred_check
    _
  $region11: #{multimodal_forward.4} parent=0 // pred_check_branch
    %150 = sbr.rel (0) target = $region13
  $region12: #{multimodal_forward.4} parent=0 // pred_region
    _
  $region13: #{multimodal_forward.4} parent=0 // pred_fallthru
    _
  // Predicated region
  $region14: #{multimodal_forward.4} parent=0 // pred_check
    _
  $region15: #{multimodal_forward.4} parent=0 // pred_check_branch
    %152 = sbr.rel (0) target = $region17
  $region16: #{multimodal_forward.4} parent=0 // pred_region
    _
  $region17: #{multimodal_forward.4} parent=0 // pred_fallthru
    _

// kernel: multimodal_forward.5
$region0: #{multimodal_forward.5}
  #allocation0 [shape = 'u32[]', space=smem, size = 0x4, offset = 0x4, fixed_abs, tag = 'smem constant byte address 0x4 - core index']
  #allocation1 [shape = 'u32[72,128]{1,0:T(1,128)}', space=vmem, size = 0x9000, scoped, tag = 'internal scratch']
  %s0 = inlined_call_operand.vmem [shape: bf16[8,3072], index: 0, kind: input, shape index: {}]
  %s1 = inlined_call_operand.vmem [shape: bf16[3072,128], index: 1, kind: input, shape index: {}]
  %s2 = inlined_call_operand.vmem [shape: f32[1,128], index: 2, kind: input, shape index: {}]
  %s3 = inlined_call_operand.vmem [shape: f32[8,128], index: 3, kind: output, shape index: {}]
  %s4 = sld [smem:[#allocation0]]
  $region22: #{multimodal_forward.5} parent=0
    _
  %s6 = ssub.s32 1, %s4
  %s7 = scalar_select 0, %s6, %s4
  // Predicated region
  $region2: #{multimodal_forward.5} parent=0 // pred_check
    _
  $region3: #{multimodal_forward.5} parent=0 // pred_check_branch
    %9 = sbr.rel (0) target = $region5
  $region4: #{multimodal_forward.5} parent=0 // pred_region
    _
  $region5: #{multimodal_forward.5} parent=0 // pred_fallthru
    _
  // Predicated region
  $region6: #{multimodal_forward.5} parent=0 // pred_check
    _
  $region7: #{multimodal_forward.5} parent=0 // pred_check_branch
    %11 = sbr.rel (0) target = $region9
  $region8: #{multimodal_forward.5} parent=0 // pred_region
    _
  $region9: #{multimodal_forward.5} parent=0 // pred_fallthru
    _
  // Predicated region
  $region10: #{multimodal_forward.5} parent=0 // pred_check
    _
  $region11: #{multimodal_forward.5} parent=0 // pred_check_branch
    %13 = sbr.rel (0) target = $region13
  $region12: #{multimodal_forward.5} parent=0 // pred_region
    _
  $region13: #{multimodal_forward.5} parent=0 // pred_fallthru
    _
  %v14 = vld [vmem:[%s0] sm:$0xff]
  %v15 = vld [vmem:[%s0 + $0x8] sm:$0xff]
  %v16 = vld [vmem:[%s0 + $0x10] sm:$0xff]
  %v17 = vld [vmem:[%s0 + $0x18] sm:$0xff]
  %v18 = vld [vmem:[%s0 + $0x20] sm:$0xff]
  %v19 = vld [vmem:[%s0 + $0x28] sm:$0xff]
  %v20 = vld [vmem:[%s0 + $0x30] sm:$0xff]
  %v21 = vld [vmem:[%s0 + $0x38] sm:$0xff]
  %v22 = vld [vmem:[%s0 + $0x40] sm:$0xff]
  %v23 = vld [vmem:[%s0 + $0x48] sm:$0xff]
  %v24 = vld [vmem:[%s0 + $0x50] sm:$0xff]
  %v25 = vld [vmem:[%s0 + $0x58] sm:$0xff]
  %v26 = vld [vmem:[%s1] sm:$0xf]
  %v27 = vld [vmem:[%s1 + $0x4] sm:$0xf]
  %v28 = vld [vmem:[%s1 + $0x8] sm:$0xf]
  %v29 = vld [vmem:[%s1 + $0xc] sm:$0xf]
  %v30 = vld [vmem:[%s1 + $0x10] sm:$0xf]
  %v31 = vld [vmem:[%s1 + $0x14] sm:$0xf]
  %v32 = vld [vmem:[%s1 + $0x18] sm:$0xf]
  %v33 = vld [vmem:[%s1 + $0x1c] sm:$0xf]
  %v34 = vld [vmem:[%s1 + $0x20] sm:$0xf]
  %v35 = vld [vmem:[%s1 + $0x24] sm:$0xf]
  %v36 = vld [vmem:[%s1 + $0x28] sm:$0xf]
  %v37 = vld [vmem:[%s1 + $0x2c] sm:$0xf]
  %v38 = vld [vmem:[%s1 + $0x30] sm:$0xf]
  %v39 = vld [vmem:[%s1 + $0x34] sm:$0xf]
  %v40 = vld [vmem:[%s1 + $0x38] sm:$0xf]
  %v41 = vld [vmem:[%s1 + $0x3c] sm:$0xf]
  %v42 = vld [vmem:[%s1 + $0x40] sm:$0xf]
  %v43 = vld [vmem:[%s1 + $0x44] sm:$0xf]
  %v44 = vld [vmem:[%s1 + $0x48] sm:$0xf]
  %v45 = vld [vmem:[%s1 + $0x4c] sm:$0xf]
  %v46 = vld [vmem:[%s1 + $0x50] sm:$0xf]
  %v47 = vld [vmem:[%s1 + $0x54] sm:$0xf]
  %v48 = vld [vmem:[%s1 + $0x58] sm:$0xf]
  %v49 = vld [vmem:[%s1 + $0x5c] sm:$0xf]
  %v50 = vld [vmem:[%s1 + $0x60] sm:$0xf]
  %v51 = vld [vmem:[%s1 + $0x64] sm:$0xf]
  %v52 = vld [vmem:[%s1 + $0x68] sm:$0xf]
  %v53 = vld [vmem:[%s1 + $0x6c] sm:$0xf]
  %v54 = vld [vmem:[%s1 + $0x70] sm:$0xf]
  %v55 = vld [vmem:[%s1 + $0x74] sm:$0xf]
  %v56 = vld [vmem:[%s1 + $0x78] sm:$0xf]
  %v57 = vld [vmem:[%s1 + $0x7c] sm:$0xf]
  %v58 = vld [vmem:[%s1 + $0x80] sm:$0xf]
  %v59 = vld [vmem:[%s1 + $0x84] sm:$0xf]
  %v60 = vld [vmem:[%s1 + $0x88] sm:$0xf]
  %v61 = vld [vmem:[%s1 + $0x8c] sm:$0xf]
  %v62 = vld [vmem:[%s1 + $0x90] sm:$0xf]
  %v63 = vld [vmem:[%s1 + $0x94] sm:$0xf]
  %v64 = vld [vmem:[%s1 + $0x98] sm:$0xf]
  %v65 = vld [vmem:[%s1 + $0x9c] sm:$0xf]
  %v66 = vld [vmem:[%s1 + $0xa0] sm:$0xf]
  %v67 = vld [vmem:[%s1 + $0xa4] sm:$0xf]
  %v68 = vld [vmem:[%s1 + $0xa8] sm:$0xf]
  %v69 = vld [vmem:[%s1 + $0xac] sm:$0xf]
  %v70 = vld [vmem:[%s1 + $0xb0] sm:$0xf]
  %v71 = vld [vmem:[%s1 + $0xb4] sm:$0xf]
  %v72 = vld [vmem:[%s1 + $0xb8] sm:$0xf]
  %v73 = vld [vmem:[%s1 + $0xbc] sm:$0xf]
  %v74 = vld [vmem:[%s1 + $0xc0] sm:$0xf]
  %v75 = vld [vmem:[%s1 + $0xc4] sm:$0xf]
  %v76 = vld [vmem:[%s1 + $0xc8] sm:$0xf]
  %v77 = vld [vmem:[%s1 + $0xcc] sm:$0xf]
  %v78 = vld [vmem:[%s1 + $0xd0] sm:$0xf]
  %v79 = vld [vmem:[%s1 + $0xd4] sm:$0xf]
  %v80 = vld [vmem:[%s1 + $0xd8] sm:$0xf]
  %v81 = vld [vmem:[%s1 + $0xdc] sm:$0xf]
  %v82 = vld [vmem:[%s1 + $0xe0] sm:$0xf]
  %v83 = vld [vmem:[%s1 + $0xe4] sm:$0xf]
  %v84 = vld [vmem:[%s1 + $0xe8] sm:$0xf]
  %v85 = vld [vmem:[%s1 + $0xec] sm:$0xf]
  %v86 = vld [vmem:[%s1 + $0xf0] sm:$0xf]
  %v87 = vld [vmem:[%s1 + $0xf4] sm:$0xf]
  %v88 = vld [vmem:[%s1 + $0xf8] sm:$0xf]
  %v89 = vld [vmem:[%s1 + $0xfc] sm:$0xf]
  %v90 = vld [vmem:[%s1 + $0x100] sm:$0xf]
  %v91 = vld [vmem:[%s1 + $0x104] sm:$0xf]
  %v92 = vld [vmem:[%s1 + $0x108] sm:$0xf]
  %v93 = vld [vmem:[%s1 + $0x10c] sm:$0xf]
  %v94 = vld [vmem:[%s1 + $0x110] sm:$0xf]
  %v95 = vld [vmem:[%s1 + $0x114] sm:$0xf]
  %v96 = vld [vmem:[%s1 + $0x118] sm:$0xf]
  %v97 = vld [vmem:[%s1 + $0x11c] sm:$0xf]
  %v98 = vld [vmem:[%s1 + $0x120] sm:$0xf]
  %v99 = vld [vmem:[%s1 + $0x124] sm:$0xf]
  %v100 = vld [vmem:[%s1 + $0x128] sm:$0xf]
  %v101 = vld [vmem:[%s1 + $0x12c] sm:$0xf]
  %v102 = vld [vmem:[%s1 + $0x130] sm:$0xf]
  %v103 = vld [vmem:[%s1 + $0x134] sm:$0xf]
  %v104 = vld [vmem:[%s1 + $0x138] sm:$0xf]
  %v105 = vld [vmem:[%s1 + $0x13c] sm:$0xf]
  %v106 = vld [vmem:[%s1 + $0x140] sm:$0xf]
  %v107 = vld [vmem:[%s1 + $0x144] sm:$0xf]
  %v108 = vld [vmem:[%s1 + $0x148] sm:$0xf]
  %v109 = vld [vmem:[%s1 + $0x14c] sm:$0xf]
  %v110 = vld [vmem:[%s1 + $0x150] sm:$0xf]
  %v111 = vld [vmem:[%s1 + $0x154] sm:$0xf]
  %v112 = vld [vmem:[%s1 + $0x158] sm:$0xf]
  %v113 = vld [vmem:[%s1 + $0x15c] sm:$0xf]
  %v114 = vld [vmem:[%s1 + $0x160] sm:$0xf]
  %v115 = vld [vmem:[%s1 + $0x164] sm:$0xf]
  %v116 = vld [vmem:[%s1 + $0x168] sm:$0xf]
  %v117 = vld [vmem:[%s1 + $0x16c] sm:$0xf]
  %v118 = vld [vmem:[%s1 + $0x170] sm:$0xf]
  %v119 = vld [vmem:[%s1 + $0x174] sm:$0xf]
  %v120 = vld [vmem:[%s1 + $0x178] sm:$0xf]
  %v121 = vld [vmem:[%s1 + $0x17c] sm:$0xf]
  %v122 = vld [vmem:[%s1 + $0x180] sm:$0xf]
  %v123 = vld [vmem:[%s1 + $0x184] sm:$0xf]
  %v124 = vld [vmem:[%s1 + $0x188] sm:$0xf]
  %v125 = vld [vmem:[%s1 + $0x18c] sm:$0xf]
  %v126 = vld [vmem:[%s1 + $0x190] sm:$0xf]
  %v127 = vld [vmem:[%s1 + $0x194] sm:$0xf]
  %v128 = vld [vmem:[%s1 + $0x198] sm:$0xf]
  %v129 = vld [vmem:[%s1 + $0x19c] sm:$0xf]
  %v130 = vld [vmem:[%s1 + $0x1a0] sm:$0xf]
  %v131 = vld [vmem:[%s1 + $0x1a4] sm:$0xf]
  %v132 = vld [vmem:[%s1 + $0x1a8] sm:$0xf]
  %v133 = vld [vmem:[%s1 + $0x1ac] sm:$0xf]
  %v134 = vld [vmem:[%s1 + $0x1b0] sm:$0xf]
  %v135 = vld [vmem:[%s1 + $0x1b4] sm:$0xf]
  %v136 = vld [vmem:[%s1 + $0x1b8] sm:$0xf]
  %v137 = vld [vmem:[%s1 + $0x1bc] sm:$0xf]
  %v138 = vld [vmem:[%s1 + $0x1c0] sm:$0xf]
  %v139 = vld [vmem:[%s1 + $0x1c4] sm:$0xf]
  %v140 = vld [vmem:[%s1 + $0x1c8] sm:$0xf]
  %v141 = vld [vmem:[%s1 + $0x1cc] sm:$0xf]
  %v142 = vld [vmem:[%s1 + $0x1d0] sm:$0xf]
  %v143 = vld [vmem:[%s1 + $0x1d4] sm:$0xf]
  %v144 = vld [vmem:[%s1 + $0x1d8] sm:$0xf]
  %v145 = vld [vmem:[%s1 + $0x1dc] sm:$0xf]
  %v146 = vld [vmem:[%s1 + $0x1e0] sm:$0xf]
  %v147 = vld [vmem:[%s1 + $0x1e4] sm:$0xf]
  %v148 = vld [vmem:[%s1 + $0x1e8] sm:$0xf]
  %v149 = vld [vmem:[%s1 + $0x1ec] sm:$0xf]
  %v150 = vld [vmem:[%s1 + $0x1f0] sm:$0xf]
  %v151 = vld [vmem:[%s1 + $0x1f4] sm:$0xf]
  %v152 = vld [vmem:[%s1 + $0x1f8] sm:$0xf]
  %v153 = vld [vmem:[%s1 + $0x1fc] sm:$0xf]
  %v154 = vld [vmem:[%s1 + $0x200] sm:$0xf]
  %v155 = vld [vmem:[%s1 + $0x204] sm:$0xf]
  %v156 = vld [vmem:[%s1 + $0x208] sm:$0xf]
  %v157 = vld [vmem:[%s1 + $0x20c] sm:$0xf]
  %v158 = vld [vmem:[%s1 + $0x210] sm:$0xf]
  %v159 = vld [vmem:[%s1 + $0x214] sm:$0xf]
  %v160 = vld [vmem:[%s1 + $0x218] sm:$0xf]
  %v161 = vld [vmem:[%s1 + $0x21c] sm:$0xf]
  %v162 = vld [vmem:[%s1 + $0x220] sm:$0xf]
  %v163 = vld [vmem:[%s1 + $0x224] sm:$0xf]
  %v164 = vld [vmem:[%s1 + $0x228] sm:$0xf]
  %v165 = vld [vmem:[%s1 + $0x22c] sm:$0xf]
  %v166 = vld [vmem:[%s1 + $0x230] sm:$0xf]
  %v167 = vld [vmem:[%s1 + $0x234] sm:$0xf]
  %v168 = vld [vmem:[%s1 + $0x238] sm:$0xf]
  %v169 = vld [vmem:[%s1 + $0x23c] sm:$0xf]
  %v170 = vld [vmem:[%s1 + $0x240] sm:$0xf]
  %v171 = vld [vmem:[%s1 + $0x244] sm:$0xf]
  %v172 = vld [vmem:[%s1 + $0x248] sm:$0xf]
  %v173 = vld [vmem:[%s1 + $0x24c] sm:$0xf]
  %v174 = vld [vmem:[%s1 + $0x250] sm:$0xf]
  %v175 = vld [vmem:[%s1 + $0x254] sm:$0xf]
  %v176 = vld [vmem:[%s1 + $0x258] sm:$0xf]
  %v177 = vld [vmem:[%s1 + $0x25c] sm:$0xf]
  %v178 = vld [vmem:[%s1 + $0x260] sm:$0xf]
  %v179 = vld [vmem:[%s1 + $0x264] sm:$0xf]
  %v180 = vld [vmem:[%s1 + $0x268] sm:$0xf]
  %v181 = vld [vmem:[%s1 + $0x26c] sm:$0xf]
  %v182 = vld [vmem:[%s1 + $0x270] sm:$0xf]
  %v183 = vld [vmem:[%s1 + $0x274] sm:$0xf]
  %v184 = vld [vmem:[%s1 + $0x278] sm:$0xf]
  %v185 = vld [vmem:[%s1 + $0x27c] sm:$0xf]
  %v186 = vld [vmem:[%s1 + $0x280] sm:$0xf]
  %v187 = vld [vmem:[%s1 + $0x284] sm:$0xf]
  %v188 = vld [vmem:[%s1 + $0x288] sm:$0xf]
  %v189 = vld [vmem:[%s1 + $0x28c] sm:$0xf]
  %v190 = vld [vmem:[%s1 + $0x290] sm:$0xf]
  %v191 = vld [vmem:[%s1 + $0x294] sm:$0xf]
  %v192 = vld [vmem:[%s1 + $0x298] sm:$0xf]
  %v193 = vld [vmem:[%s1 + $0x29c] sm:$0xf]
  %v194 = vld [vmem:[%s1 + $0x2a0] sm:$0xf]
  %v195 = vld [vmem:[%s1 + $0x2a4] sm:$0xf]
  %v196 = vld [vmem:[%s1 + $0x2a8] sm:$0xf]
  %v197 = vld [vmem:[%s1 + $0x2ac] sm:$0xf]
  %v198 = vld [vmem:[%s1 + $0x2b0] sm:$0xf]
  %v199 = vld [vmem:[%s1 + $0x2b4] sm:$0xf]
  %v200 = vld [vmem:[%s1 + $0x2b8] sm:$0xf]
  %v201 = vld [vmem:[%s1 + $0x2bc] sm:$0xf]
  %v202 = vld [vmem:[%s1 + $0x2c0] sm:$0xf]
  %v203 = vld [vmem:[%s1 + $0x2c4] sm:$0xf]
  %v204 = vld [vmem:[%s1 + $0x2c8] sm:$0xf]
  %v205 = vld [vmem:[%s1 + $0x2cc] sm:$0xf]
  %v206 = vld [vmem:[%s1 + $0x2d0] sm:$0xf]
  %v207 = vld [vmem:[%s1 + $0x2d4] sm:$0xf]
  %v208 = vld [vmem:[%s1 + $0x2d8] sm:$0xf]
  %v209 = vld [vmem:[%s1 + $0x2dc] sm:$0xf]
  %v210 = vld [vmem:[%s1 + $0x2e0] sm:$0xf]
  %v211 = vld [vmem:[%s1 + $0x2e4] sm:$0xf]
  %v212 = vld [vmem:[%s1 + $0x2e8] sm:$0xf]
  %v213 = vld [vmem:[%s1 + $0x2ec] sm:$0xf]
  %v214 = vld [vmem:[%s1 + $0x2f0] sm:$0xf]
  %v215 = vld [vmem:[%s1 + $0x2f4] sm:$0xf]
  %v216 = vld [vmem:[%s1 + $0x2f8] sm:$0xf]
  %v217 = vld [vmem:[%s1 + $0x2fc] sm:$0xf]
  %v218 = vld [vmem:[%s1 + $0x300] sm:$0xf]
  %v219 = vld [vmem:[%s1 + $0x304] sm:$0xf]
  %v220 = vld [vmem:[%s1 + $0x308] sm:$0xf]
  %v221 = vld [vmem:[%s1 + $0x30c] sm:$0xf]
  %v222 = vld [vmem:[%s1 + $0x310] sm:$0xf]
  %v223 = vld [vmem:[%s1 + $0x314] sm:$0xf]
  %v224 = vld [vmem:[%s1 + $0x318] sm:$0xf]
  %v225 = vld [vmem:[%s1 + $0x31c] sm:$0xf]
  %v226 = vld [vmem:[%s1 + $0x320] sm:$0xf]
  %v227 = vld [vmem:[%s1 + $0x324] sm:$0xf]
  %v228 = vld [vmem:[%s1 + $0x328] sm:$0xf]
  %v229 = vld [vmem:[%s1 + $0x32c] sm:$0xf]
  %v230 = vld [vmem:[%s1 + $0x330] sm:$0xf]
  %v231 = vld [vmem:[%s1 + $0x334] sm:$0xf]
  %v232 = vld [vmem:[%s1 + $0x338] sm:$0xf]
  %v233 = vld [vmem:[%s1 + $0x33c] sm:$0xf]
  %v234 = vld [vmem:[%s1 + $0x340] sm:$0xf]
  %v235 = vld [vmem:[%s1 + $0x344] sm:$0xf]
  %v236 = vld [vmem:[%s1 + $0x348] sm:$0xf]
  %v237 = vld [vmem:[%s1 + $0x34c] sm:$0xf]
  %v238 = vld [vmem:[%s1 + $0x350] sm:$0xf]
  %v239 = vld [vmem:[%s1 + $0x354] sm:$0xf]
  %v240 = vld [vmem:[%s1 + $0x358] sm:$0xf]
  %v241 = vld [vmem:[%s1 + $0x35c] sm:$0xf]
  %v242 = vld [vmem:[%s1 + $0x360] sm:$0xf]
  %v243 = vld [vmem:[%s1 + $0x364] sm:$0xf]
  %v244 = vld [vmem:[%s1 + $0x368] sm:$0xf]
  %v245 = vld [vmem:[%s1 + $0x36c] sm:$0xf]
  %v246 = vld [vmem:[%s1 + $0x370] sm:$0xf]
  %v247 = vld [vmem:[%s1 + $0x374] sm:$0xf]
  %v248 = vld [vmem:[%s1 + $0x378] sm:$0xf]
  %v249 = vld [vmem:[%s1 + $0x37c] sm:$0xf]
  %v250 = vld [vmem:[%s1 + $0x380] sm:$0xf]
  %v251 = vld [vmem:[%s1 + $0x384] sm:$0xf]
  %v252 = vld [vmem:[%s1 + $0x388] sm:$0xf]
  %v253 = vld [vmem:[%s1 + $0x38c] sm:$0xf]
  %v254 = vld [vmem:[%s1 + $0x390] sm:$0xf]
  %v255 = vld [vmem:[%s1 + $0x394] sm:$0xf]
  %v256 = vld [vmem:[%s1 + $0x398] sm:$0xf]
  %v257 = vld [vmem:[%s1 + $0x39c] sm:$0xf]
  %v258 = vld [vmem:[%s1 + $0x3a0] sm:$0xf]
  %v259 = vld [vmem:[%s1 + $0x3a4] sm:$0xf]
  %v260 = vld [vmem:[%s1 + $0x3a8] sm:$0xf]
  %v261 = vld [vmem:[%s1 + $0x3ac] sm:$0xf]
  %v262 = vld [vmem:[%s1 + $0x3b0] sm:$0xf]
  %v263 = vld [vmem:[%s1 + $0x3b4] sm:$0xf]
  %v264 = vld [vmem:[%s1 + $0x3b8] sm:$0xf]
  %v265 = vld [vmem:[%s1 + $0x3bc] sm:$0xf]
  %v266 = vld [vmem:[%s1 + $0x3c0] sm:$0xf]
  %v267 = vld [vmem:[%s1 + $0x3c4] sm:$0xf]
  %v268 = vld [vmem:[%s1 + $0x3c8] sm:$0xf]
  %v269 = vld [vmem:[%s1 + $0x3cc] sm:$0xf]
  %v270 = vld [vmem:[%s1 + $0x3d0] sm:$0xf]
  %v271 = vld [vmem:[%s1 + $0x3d4] sm:$0xf]
  %v272 = vld [vmem:[%s1 + $0x3d8] sm:$0xf]
  %v273 = vld [vmem:[%s1 + $0x3dc] sm:$0xf]
  %v274 = vld [vmem:[%s1 + $0x3e0] sm:$0xf]
  %v275 = vld [vmem:[%s1 + $0x3e4] sm:$0xf]
  %v276 = vld [vmem:[%s1 + $0x3e8] sm:$0xf]
  %v277 = vld [vmem:[%s1 + $0x3ec] sm:$0xf]
  %v278 = vld [vmem:[%s1 + $0x3f0] sm:$0xf]
  %v279 = vld [vmem:[%s1 + $0x3f4] sm:$0xf]
  %v280 = vld [vmem:[%s1 + $0x3f8] sm:$0xf]
  %v281 = vld [vmem:[%s1 + $0x3fc] sm:$0xf]
  %v282 = vld [vmem:[%s1 + $0x400] sm:$0xf]
  %v283 = vld [vmem:[%s1 + $0x404] sm:$0xf]
  %v284 = vld [vmem:[%s1 + $0x408] sm:$0xf]
  %v285 = vld [vmem:[%s1 + $0x40c] sm:$0xf]
  %v286 = vld [vmem:[%s1 + $0x410] sm:$0xf]
  %v287 = vld [vmem:[%s1 + $0x414] sm:$0xf]
  %v288 = vld [vmem:[%s1 + $0x418] sm:$0xf]
  %v289 = vld [vmem:[%s1 + $0x41c] sm:$0xf]
  %v290 = vld [vmem:[%s1 + $0x420] sm:$0xf]
  %v291 = vld [vmem:[%s1 + $0x424] sm:$0xf]
  %v292 = vld [vmem:[%s1 + $0x428] sm:$0xf]
  %v293 = vld [vmem:[%s1 + $0x42c] sm:$0xf]
  %v294 = vld [vmem:[%s1 + $0x430] sm:$0xf]
  %v295 = vld [vmem:[%s1 + $0x434] sm:$0xf]
  %v296 = vld [vmem:[%s1 + $0x438] sm:$0xf]
  %v297 = vld [vmem:[%s1 + $0x43c] sm:$0xf]
  %v298 = vld [vmem:[%s1 + $0x440] sm:$0xf]
  %v299 = vld [vmem:[%s1 + $0x444] sm:$0xf]
  %v300 = vld [vmem:[%s1 + $0x448] sm:$0xf]
  %v301 = vld [vmem:[%s1 + $0x44c] sm:$0xf]
  %v302 = vld [vmem:[%s1 + $0x450] sm:$0xf]
  %v303 = vld [vmem:[%s1 + $0x454] sm:$0xf]
  %v304 = vld [vmem:[%s1 + $0x458] sm:$0xf]
  %v305 = vld [vmem:[%s1 + $0x45c] sm:$0xf]
  %v306 = vld [vmem:[%s1 + $0x460] sm:$0xf]
  %v307 = vld [vmem:[%s1 + $0x464] sm:$0xf]
  %v308 = vld [vmem:[%s1 + $0x468] sm:$0xf]
  %v309 = vld [vmem:[%s1 + $0x46c] sm:$0xf]
  %v310 = vld [vmem:[%s1 + $0x470] sm:$0xf]
  %v311 = vld [vmem:[%s1 + $0x474] sm:$0xf]
  %v312 = vld [vmem:[%s1 + $0x478] sm:$0xf]
  %v313 = vld [vmem:[%s1 + $0x47c] sm:$0xf]
  %v314 = vld [vmem:[%s1 + $0x480] sm:$0xf]
  %v315 = vld [vmem:[%s1 + $0x484] sm:$0xf]
  %v316 = vld [vmem:[%s1 + $0x488] sm:$0xf]
  %v317 = vld [vmem:[%s1 + $0x48c] sm:$0xf]
  %v318 = vld [vmem:[%s1 + $0x490] sm:$0xf]
  %v319 = vld [vmem:[%s1 + $0x494] sm:$0xf]
  %v320 = vld [vmem:[%s1 + $0x498] sm:$0xf]
  %v321 = vld [vmem:[%s1 + $0x49c] sm:$0xf]
  %v322 = vld [vmem:[%s1 + $0x4a0] sm:$0xf]
  %v323 = vld [vmem:[%s1 + $0x4a4] sm:$0xf]
  %v324 = vld [vmem:[%s1 + $0x4a8] sm:$0xf]
  %v325 = vld [vmem:[%s1 + $0x4ac] sm:$0xf]
  %v326 = vld [vmem:[%s1 + $0x4b0] sm:$0xf]
  %v327 = vld [vmem:[%s1 + $0x4b4] sm:$0xf]
  %v328 = vld [vmem:[%s1 + $0x4b8] sm:$0xf]
  %v329 = vld [vmem:[%s1 + $0x4bc] sm:$0xf]
  %v330 = vld [vmem:[%s1 + $0x4c0] sm:$0xf]
  %v331 = vld [vmem:[%s1 + $0x4c4] sm:$0xf]
  %v332 = vld [vmem:[%s1 + $0x4c8] sm:$0xf]
  %v333 = vld [vmem:[%s1 + $0x4cc] sm:$0xf]
  %v334 = vld [vmem:[%s1 + $0x4d0] sm:$0xf]
  %v335 = vld [vmem:[%s1 + $0x4d4] sm:$0xf]
  %v336 = vld [vmem:[%s1 + $0x4d8] sm:$0xf]
  %v337 = vld [vmem:[%s1 + $0x4dc] sm:$0xf]
  %v338 = vld [vmem:[%s1 + $0x4e0] sm:$0xf]
  %v339 = vld [vmem:[%s1 + $0x4e4] sm:$0xf]
  %v340 = vld [vmem:[%s1 + $0x4e8] sm:$0xf]
  %v341 = vld [vmem:[%s1 + $0x4ec] sm:$0xf]
  %v342 = vld [vmem:[%s1 + $0x4f0] sm:$0xf]
  %v343 = vld [vmem:[%s1 + $0x4f4] sm:$0xf]
  %v344 = vld [vmem:[%s1 + $0x4f8] sm:$0xf]
  %v345 = vld [vmem:[%s1 + $0x4fc] sm:$0xf]
  %v346 = vld [vmem:[%s1 + $0x500] sm:$0xf]
  %v347 = vld [vmem:[%s1 + $0x504] sm:$0xf]
  %v348 = vld [vmem:[%s1 + $0x508] sm:$0xf]
  %v349 = vld [vmem:[%s1 + $0x50c] sm:$0xf]
  %v350 = vld [vmem:[%s1 + $0x510] sm:$0xf]
  %v351 = vld [vmem:[%s1 + $0x514] sm:$0xf]
  %v352 = vld [vmem:[%s1 + $0x518] sm:$0xf]
  %v353 = vld [vmem:[%s1 + $0x51c] sm:$0xf]
  %v354 = vld [vmem:[%s1 + $0x520] sm:$0xf]
  %v355 = vld [vmem:[%s1 + $0x524] sm:$0xf]
  %v356 = vld [vmem:[%s1 + $0x528] sm:$0xf]
  %v357 = vld [vmem:[%s1 + $0x52c] sm:$0xf]
  %v358 = vld [vmem:[%s1 + $0x530] sm:$0xf]
  %v359 = vld [vmem:[%s1 + $0x534] sm:$0xf]
  %v360 = vld [vmem:[%s1 + $0x538] sm:$0xf]
  %v361 = vld [vmem:[%s1 + $0x53c] sm:$0xf]
  %v362 = vld [vmem:[%s1 + $0x540] sm:$0xf]
  %v363 = vld [vmem:[%s1 + $0x544] sm:$0xf]
  %v364 = vld [vmem:[%s1 + $0x548] sm:$0xf]
  %v365 = vld [vmem:[%s1 + $0x54c] sm:$0xf]
  %v366 = vld [vmem:[%s1 + $0x550] sm:$0xf]
  %v367 = vld [vmem:[%s1 + $0x554] sm:$0xf]
  %v368 = vld [vmem:[%s1 + $0x558] sm:$0xf]
  %v369 = vld [vmem:[%s1 + $0x55c] sm:$0xf]
  %v370 = vld [vmem:[%s1 + $0x560] sm:$0xf]
  %v371 = vld [vmem:[%s1 + $0x564] sm:$0xf]
  %v372 = vld [vmem:[%s1 + $0x568] sm:$0xf]
  %v373 = vld [vmem:[%s1 + $0x56c] sm:$0xf]
  %v374 = vld [vmem:[%s1 + $0x570] sm:$0xf]
  %v375 = vld [vmem:[%s1 + $0x574] sm:$0xf]
  %v376 = vld [vmem:[%s1 + $0x578] sm:$0xf]
  %v377 = vld [vmem:[%s1 + $0x57c] sm:$0xf]
  %v378 = vld [vmem:[%s1 + $0x580] sm:$0xf]
  %v379 = vld [vmem:[%s1 + $0x584] sm:$0xf]
  %v380 = vld [vmem:[%s1 + $0x588] sm:$0xf]
  %v381 = vld [vmem:[%s1 + $0x58c] sm:$0xf]
  %v382 = vld [vmem:[%s1 + $0x590] sm:$0xf]
  %v383 = vld [vmem:[%s1 + $0x594] sm:$0xf]
  %v384 = vld [vmem:[%s1 + $0x598] sm:$0xf]
  %v385 = vld [vmem:[%s1 + $0x59c] sm:$0xf]
  %v386 = vld [vmem:[%s1 + $0x5a0] sm:$0xf]
  %v387 = vld [vmem:[%s1 + $0x5a4] sm:$0xf]
  %v388 = vld [vmem:[%s1 + $0x5a8] sm:$0xf]
  %v389 = vld [vmem:[%s1 + $0x5ac] sm:$0xf]
  %v390 = vld [vmem:[%s1 + $0x5b0] sm:$0xf]
  %v391 = vld [vmem:[%s1 + $0x5b4] sm:$0xf]
  %v392 = vld [vmem:[%s1 + $0x5b8] sm:$0xf]
  %v393 = vld [vmem:[%s1 + $0x5bc] sm:$0xf]
  %v394 = vld [vmem:[%s1 + $0x5c0] sm:$0xf]
  %v395 = vld [vmem:[%s1 + $0x5c4] sm:$0xf]
  %v396 = vld [vmem:[%s1 + $0x5c8] sm:$0xf]
  %v397 = vld [vmem:[%s1 + $0x5cc] sm:$0xf]
  %v398 = vld [vmem:[%s1 + $0x5d0] sm:$0xf]
  %v399 = vld [vmem:[%s1 + $0x5d4] sm:$0xf]
  %v400 = vld [vmem:[%s1 + $0x5d8] sm:$0xf]
  %v401 = vld [vmem:[%s1 + $0x5dc] sm:$0xf]
  %v402 = vld [vmem:[%s1 + $0x5e0] sm:$0xf]
  %v403 = vld [vmem:[%s1 + $0x5e4] sm:$0xf]
  %v404 = vld [vmem:[%s1 + $0x5e8] sm:$0xf]
  %v405 = vld [vmem:[%s1 + $0x5ec] sm:$0xf]
  %v406 = vld [vmem:[%s1 + $0x5f0] sm:$0xf]
  %v407 = vld [vmem:[%s1 + $0x5f4] sm:$0xf]
  %v408 = vld [vmem:[%s1 + $0x5f8] sm:$0xf]
  %v409 = vld [vmem:[%s1 + $0x5fc] sm:$0xf]
  %v410 = vld [vmem:[%s2] sm:$0x1]
  %v412 = vperm.slane %v410, 0
  %v426 = vunpack.c.l.b16 %v14
  %v427 = vunpack.c.h.b16 %v14
  %v428 = vunpack.c.l.b16 %v15
  %v429 = vunpack.c.h.b16 %v15
  %v430 = vunpack.c.l.b16 %v16
  %v431 = vunpack.c.h.b16 %v16
  %v432 = vunpack.c.l.b16 %v17
  %v433 = vunpack.c.h.b16 %v17
  %v434 = vunpack.c.l.b16 %v18
  %v435 = vunpack.c.h.b16 %v18
  %v436 = vunpack.c.l.b16 %v19
  %v437 = vunpack.c.h.b16 %v19
  %v438 = vunpack.c.l.b16 %v20
  %v439 = vunpack.c.h.b16 %v20
  %v440 = vunpack.c.l.b16 %v21
  %v441 = vunpack.c.h.b16 %v21
  %v442 = vunpack.c.l.b16 %v22
  %v443 = vunpack.c.h.b16 %v22
  %v444 = vunpack.c.l.b16 %v23
  %v445 = vunpack.c.h.b16 %v23
  %v446 = vunpack.c.l.b16 %v24
  %v447 = vunpack.c.h.b16 %v24
  %v448 = vunpack.c.l.b16 %v25
  %v449 = vunpack.c.h.b16 %v25
  %v450 = vpack.c.b16 %v426, %v426
  %v451 = vpack.c.b16 %v427, %v427
  %v452 = vpack.c.b16 %v428, %v428
  %v453 = vpack.c.b16 %v429, %v429
  %v454 = vpack.c.b16 %v430, %v430
  %v455 = vpack.c.b16 %v431, %v431
  %v456 = vpack.c.b16 %v432, %v432
  %v457 = vpack.c.b16 %v433, %v433
  %v458 = vpack.c.b16 %v434, %v434
  %v459 = vpack.c.b16 %v435, %v435
  %v460 = vpack.c.b16 %v436, %v436
  %v461 = vpack.c.b16 %v437, %v437
  %v462 = vpack.c.b16 %v438, %v438
  %v463 = vpack.c.b16 %v439, %v439
  %v464 = vpack.c.b16 %v440, %v440
  %v465 = vpack.c.b16 %v441, %v441
  %v466 = vpack.c.b16 %v442, %v442
  %v467 = vpack.c.b16 %v443, %v443
  %v468 = vpack.c.b16 %v444, %v444
  %v469 = vpack.c.b16 %v445, %v445
  %v470 = vpack.c.b16 %v446, %v446
  %v471 = vpack.c.b16 %v447, %v447
  %v472 = vpack.c.b16 %v448, %v448
  %v473 = vpack.c.b16 %v449, %v449
  %v882 = vunpack.c.l.b16 %v26
  %v883 = vunpack.c.l.b16 %v27
  %v884 = vunpack.c.l.b16 %v28
  %v885 = vunpack.c.l.b16 %v29
  %v886 = vunpack.c.l.b16 %v30
  %v887 = vunpack.c.l.b16 %v31
  %v888 = vunpack.c.l.b16 %v32
  %v889 = vunpack.c.l.b16 %v33
  %v890 = vunpack.c.l.b16 %v34
  %v891 = vunpack.c.l.b16 %v35
  %v892 = vunpack.c.l.b16 %v36
  %v893 = vunpack.c.l.b16 %v37
  %v894 = vunpack.c.l.b16 %v38
  %v895 = vunpack.c.l.b16 %v39
  %v896 = vunpack.c.l.b16 %v40
  %v897 = vunpack.c.l.b16 %v41
  %v898 = vunpack.c.l.b16 %v42
  %v899 = vunpack.c.l.b16 %v43
  %v900 = vunpack.c.l.b16 %v44
  %v901 = vunpack.c.l.b16 %v45
  %v902 = vunpack.c.l.b16 %v46
  %v903 = vunpack.c.l.b16 %v47
  %v904 = vunpack.c.l.b16 %v48
  %v905 = vunpack.c.l.b16 %v49
  %v906 = vunpack.c.l.b16 %v50
  %v907 = vunpack.c.l.b16 %v51
  %v908 = vunpack.c.l.b16 %v52
  %v909 = vunpack.c.l.b16 %v53
  %v910 = vunpack.c.l.b16 %v54
  %v911 = vunpack.c.l.b16 %v55
  %v912 = vunpack.c.l.b16 %v56
  %v913 = vunpack.c.l.b16 %v57
  %v914 = vunpack.c.l.b16 %v58
  %v915 = vunpack.c.l.b16 %v59
  %v916 = vunpack.c.l.b16 %v60
  %v917 = vunpack.c.l.b16 %v61
  %v918 = vunpack.c.l.b16 %v62
  %v919 = vunpack.c.l.b16 %v63
  %v920 = vunpack.c.l.b16 %v64
  %v921 = vunpack.c.l.b16 %v65
  %v922 = vunpack.c.l.b16 %v66
  %v923 = vunpack.c.l.b16 %v67
  %v924 = vunpack.c.l.b16 %v68
  %v925 = vunpack.c.l.b16 %v69
  %v926 = vunpack.c.l.b16 %v70
  %v927 = vunpack.c.l.b16 %v71
  %v928 = vunpack.c.l.b16 %v72
  %v929 = vunpack.c.l.b16 %v73
  %v930 = vunpack.c.l.b16 %v74
  %v931 = vunpack.c.l.b16 %v75
  %v932 = vunpack.c.l.b16 %v76
  %v933 = vunpack.c.l.b16 %v77
  %v934 = vunpack.c.l.b16 %v78
  %v935 = vunpack.c.l.b16 %v79
  %v936 = vunpack.c.l.b16 %v80
  %v937 = vunpack.c.l.b16 %v81
  %v938 = vunpack.c.l.b16 %v82
  %v939 = vunpack.c.l.b16 %v83
  %v940 = vunpack.c.l.b16 %v84
  %v941 = vunpack.c.l.b16 %v85
  %v942 = vunpack.c.l.b16 %v86
  %v943 = vunpack.c.l.b16 %v87
  %v944 = vunpack.c.l.b16 %v88
  %v945 = vunpack.c.l.b16 %v89
  %v946 = vunpack.c.l.b16 %v90
  %v947 = vunpack.c.l.b16 %v91
  %v948 = vunpack.c.l.b16 %v92
  %v949 = vunpack.c.l.b16 %v93
  %v950 = vunpack.c.l.b16 %v94
  %v951 = vunpack.c.l.b16 %v95
  %v952 = vunpack.c.l.b16 %v96
  %v953 = vunpack.c.l.b16 %v97
  %v954 = vunpack.c.l.b16 %v98
  %v955 = vunpack.c.l.b16 %v99
  %v956 = vunpack.c.l.b16 %v100
  %v957 = vunpack.c.l.b16 %v101
  %v958 = vunpack.c.l.b16 %v102
  %v959 = vunpack.c.l.b16 %v103
  %v960 = vunpack.c.l.b16 %v104
  %v961 = vunpack.c.l.b16 %v105
  %v962 = vunpack.c.l.b16 %v106
  %v963 = vunpack.c.l.b16 %v107
  %v964 = vunpack.c.l.b16 %v108
  %v965 = vunpack.c.l.b16 %v109
  %v966 = vunpack.c.l.b16 %v110
  %v967 = vunpack.c.l.b16 %v111
  %v968 = vunpack.c.l.b16 %v112
  %v969 = vunpack.c.l.b16 %v113
  %v970 = vunpack.c.l.b16 %v114
  %v971 = vunpack.c.l.b16 %v115
  %v972 = vunpack.c.l.b16 %v116
  %v973 = vunpack.c.l.b16 %v117
  %v974 = vunpack.c.l.b16 %v118
  %v975 = vunpack.c.l.b16 %v119
  %v976 = vunpack.c.l.b16 %v120
  %v977 = vunpack.c.l.b16 %v121
  %v978 = vunpack.c.l.b16 %v122
  %v979 = vunpack.c.l.b16 %v123
  %v980 = vunpack.c.l.b16 %v124
  %v981 = vunpack.c.l.b16 %v125
  %v982 = vunpack.c.l.b16 %v126
  %v983 = vunpack.c.l.b16 %v127
  %v984 = vunpack.c.l.b16 %v128
  %v985 = vunpack.c.l.b16 %v129
  %v986 = vunpack.c.l.b16 %v130
  %v987 = vunpack.c.l.b16 %v131
  %v988 = vunpack.c.l.b16 %v132
  %v989 = vunpack.c.l.b16 %v133
  %v990 = vunpack.c.l.b16 %v134
  %v991 = vunpack.c.l.b16 %v135
  %v992 = vunpack.c.l.b16 %v136
  %v993 = vunpack.c.l.b16 %v137
  %v994 = vunpack.c.l.b16 %v138
  %v995 = vunpack.c.l.b16 %v139
  %v996 = vunpack.c.l.b16 %v140
  %v997 = vunpack.c.l.b16 %v141
  %v998 = vunpack.c.l.b16 %v142
  %v999 = vunpack.c.l.b16 %v143
  %v1000 = vunpack.c.l.b16 %v144
  %v1001 = vunpack.c.l.b16 %v145
  %v1002 = vunpack.c.l.b16 %v146
  %v1003 = vunpack.c.l.b16 %v147
  %v1004 = vunpack.c.l.b16 %v148
  %v1005 = vunpack.c.l.b16 %v149
  %v1006 = vunpack.c.l.b16 %v150
  %v1007 = vunpack.c.l.b16 %v151
  %v1008 = vunpack.c.l.b16 %v152
  %v1009 = vunpack.c.l.b16 %v153
  %v1010 = vunpack.c.l.b16 %v154
  %v1011 = vunpack.c.l.b16 %v155
  %v1012 = vunpack.c.l.b16 %v156
  %v1013 = vunpack.c.l.b16 %v157
  %v1014 = vunpack.c.l.b16 %v158
  %v1015 = vunpack.c.l.b16 %v159
  %v1016 = vunpack.c.l.b16 %v160
  %v1017 = vunpack.c.l.b16 %v161
  %v1018 = vunpack.c.l.b16 %v162
  %v1019 = vunpack.c.l.b16 %v163
  %v1020 = vunpack.c.l.b16 %v164
  %v1021 = vunpack.c.l.b16 %v165
  %v1022 = vunpack.c.l.b16 %v166
  %v1023 = vunpack.c.l.b16 %v167
  %v1024 = vunpack.c.l.b16 %v168
  %v1025 = vunpack.c.l.b16 %v169
  %v1026 = vunpack.c.l.b16 %v170
  %v1027 = vunpack.c.l.b16 %v171
  %v1028 = vunpack.c.l.b16 %v172
  %v1029 = vunpack.c.l.b16 %v173
  %v1030 = vunpack.c.l.b16 %v174
  %v1031 = vunpack.c.l.b16 %v175
  %v1032 = vunpack.c.l.b16 %v176
  %v1033 = vunpack.c.l.b16 %v177
  %v1034 = vunpack.c.l.b16 %v178
  %v1035 = vunpack.c.l.b16 %v179
  %v1036 = vunpack.c.l.b16 %v180
  %v1037 = vunpack.c.l.b16 %v181
  %v1038 = vunpack.c.l.b16 %v182
  %v1039 = vunpack.c.l.b16 %v183
  %v1040 = vunpack.c.l.b16 %v184
  %v1041 = vunpack.c.l.b16 %v185
  %v1042 = vunpack.c.l.b16 %v186
  %v1043 = vunpack.c.l.b16 %v187
  %v1044 = vunpack.c.l.b16 %v188
  %v1045 = vunpack.c.l.b16 %v189
  %v1046 = vunpack.c.l.b16 %v190
  %v1047 = vunpack.c.l.b16 %v191
  %v1048 = vunpack.c.l.b16 %v192
  %v1049 = vunpack.c.l.b16 %v193
  %v1050 = vunpack.c.l.b16 %v194
  %v1051 = vunpack.c.l.b16 %v195
  %v1052 = vunpack.c.l.b16 %v196
  %v1053 = vunpack.c.l.b16 %v197
  %v1054 = vunpack.c.l.b16 %v198
  %v1055 = vunpack.c.l.b16 %v199
  %v1056 = vunpack.c.l.b16 %v200
  %v1057 = vunpack.c.l.b16 %v201
  %v1058 = vunpack.c.l.b16 %v202
  %v1059 = vunpack.c.l.b16 %v203
  %v1060 = vunpack.c.l.b16 %v204
  %v1061 = vunpack.c.l.b16 %v205
  %v1062 = vunpack.c.l.b16 %v206
  %v1063 = vunpack.c.l.b16 %v207
  %v1064 = vunpack.c.l.b16 %v208
  %v1065 = vunpack.c.l.b16 %v209
  %v1066 = vunpack.c.l.b16 %v210
  %v1067 = vunpack.c.l.b16 %v211
  %v1068 = vunpack.c.l.b16 %v212
  %v1069 = vunpack.c.l.b16 %v213
  %v1070 = vunpack.c.l.b16 %v214
  %v1071 = vunpack.c.l.b16 %v215
  %v1072 = vunpack.c.l.b16 %v216
  %v1073 = vunpack.c.l.b16 %v217
  %v1074 = vunpack.c.l.b16 %v218
  %v1075 = vunpack.c.l.b16 %v219
  %v1076 = vunpack.c.l.b16 %v220
  %v1077 = vunpack.c.l.b16 %v221
  %v1078 = vunpack.c.l.b16 %v222
  %v1079 = vunpack.c.l.b16 %v223
  %v1080 = vunpack.c.l.b16 %v224
  %v1081 = vunpack.c.l.b16 %v225
  %v1082 = vunpack.c.l.b16 %v226
  %v1083 = vunpack.c.l.b16 %v227
  %v1084 = vunpack.c.l.b16 %v228
  %v1085 = vunpack.c.l.b16 %v229
  %v1086 = vunpack.c.l.b16 %v230
  %v1087 = vunpack.c.l.b16 %v231
  %v1088 = vunpack.c.l.b16 %v232
  %v1089 = vunpack.c.l.b16 %v233
  %v1090 = vunpack.c.l.b16 %v234
  %v1091 = vunpack.c.l.b16 %v235
  %v1092 = vunpack.c.l.b16 %v236
  %v1093 = vunpack.c.l.b16 %v237
  %v1094 = vunpack.c.l.b16 %v238
  %v1095 = vunpack.c.l.b16 %v239
  %v1096 = vunpack.c.l.b16 %v240
  %v1097 = vunpack.c.l.b16 %v241
  %v1098 = vunpack.c.l.b16 %v242
  %v1099 = vunpack.c.l.b16 %v243
  %v1100 = vunpack.c.l.b16 %v244
  %v1101 = vunpack.c.l.b16 %v245
  %v1102 = vunpack.c.l.b16 %v246
  %v1103 = vunpack.c.l.b16 %v247
  %v1104 = vunpack.c.l.b16 %v248
  %v1105 = vunpack.c.l.b16 %v249
  %v1106 = vunpack.c.l.b16 %v250
  %v1107 = vunpack.c.l.b16 %v251
  %v1108 = vunpack.c.l.b16 %v252
  %v1109 = vunpack.c.l.b16 %v253
  %v1110 = vunpack.c.l.b16 %v254
  %v1111 = vunpack.c.l.b16 %v255
  %v1112 = vunpack.c.l.b16 %v256
  %v1113 = vunpack.c.l.b16 %v257
  %v1114 = vunpack.c.l.b16 %v258
  %v1115 = vunpack.c.l.b16 %v259
  %v1116 = vunpack.c.l.b16 %v260
  %v1117 = vunpack.c.l.b16 %v261
  %v1118 = vunpack.c.l.b16 %v262
  %v1119 = vunpack.c.l.b16 %v263
  %v1120 = vunpack.c.l.b16 %v264
  %v1121 = vunpack.c.l.b16 %v265
  %v1122 = vunpack.c.l.b16 %v266
  %v1123 = vunpack.c.l.b16 %v267
  %v1124 = vunpack.c.l.b16 %v268
  %v1125 = vunpack.c.l.b16 %v269
  %v1126 = vunpack.c.l.b16 %v270
  %v1127 = vunpack.c.l.b16 %v271
  %v1128 = vunpack.c.l.b16 %v272
  %v1129 = vunpack.c.l.b16 %v273
  %v1130 = vunpack.c.l.b16 %v274
  %v1131 = vunpack.c.l.b16 %v275
  %v1132 = vunpack.c.l.b16 %v276
  %v1133 = vunpack.c.l.b16 %v277
  %v1134 = vunpack.c.l.b16 %v278
  %v1135 = vunpack.c.l.b16 %v279
  %v1136 = vunpack.c.l.b16 %v280
  %v1137 = vunpack.c.l.b16 %v281
  %v1138 = vunpack.c.l.b16 %v282
  %v1139 = vunpack.c.l.b16 %v283
  %v1140 = vunpack.c.l.b16 %v284
  %v1141 = vunpack.c.l.b16 %v285
  %v1142 = vunpack.c.l.b16 %v286
  %v1143 = vunpack.c.l.b16 %v287
  %v1144 = vunpack.c.l.b16 %v288
  %v1145 = vunpack.c.l.b16 %v289
  %v1146 = vunpack.c.l.b16 %v290
  %v1147 = vunpack.c.l.b16 %v291
  %v1148 = vunpack.c.l.b16 %v292
  %v1149 = vunpack.c.l.b16 %v293
  %v1150 = vunpack.c.l.b16 %v294
  %v1151 = vunpack.c.l.b16 %v295
  %v1152 = vunpack.c.l.b16 %v296
  %v1153 = vunpack.c.l.b16 %v297
  %v1154 = vunpack.c.l.b16 %v298
  %v1155 = vunpack.c.l.b16 %v299
  %v1156 = vunpack.c.l.b16 %v300
  %v1157 = vunpack.c.l.b16 %v301
  %v1158 = vunpack.c.l.b16 %v302
  %v1159 = vunpack.c.l.b16 %v303
  %v1160 = vunpack.c.l.b16 %v304
  %v1161 = vunpack.c.l.b16 %v305
  %v1162 = vunpack.c.l.b16 %v306
  %v1163 = vunpack.c.l.b16 %v307
  %v1164 = vunpack.c.l.b16 %v308
  %v1165 = vunpack.c.l.b16 %v309
  %v1166 = vunpack.c.l.b16 %v310
  %v1167 = vunpack.c.l.b16 %v311
  %v1168 = vunpack.c.l.b16 %v312
  %v1169 = vunpack.c.l.b16 %v313
  %v1170 = vunpack.c.l.b16 %v314
  %v1171 = vunpack.c.l.b16 %v315
  %v1172 = vunpack.c.l.b16 %v316
  %v1173 = vunpack.c.l.b16 %v317
  %v1174 = vunpack.c.l.b16 %v318
  %v1175 = vunpack.c.l.b16 %v319
  %v1176 = vunpack.c.l.b16 %v320
  %v1177 = vunpack.c.l.b16 %v321
  %v1178 = vunpack.c.l.b16 %v322
  %v1179 = vunpack.c.l.b16 %v323
  %v1180 = vunpack.c.l.b16 %v324
  %v1181 = vunpack.c.l.b16 %v325
  %v1182 = vunpack.c.l.b16 %v326
  %v1183 = vunpack.c.l.b16 %v327
  %v1184 = vunpack.c.l.b16 %v328
  %v1185 = vunpack.c.l.b16 %v329
  %v1186 = vunpack.c.l.b16 %v330
  %v1187 = vunpack.c.l.b16 %v331
  %v1188 = vunpack.c.l.b16 %v332
  %v1189 = vunpack.c.l.b16 %v333
  %v1190 = vunpack.c.l.b16 %v334
  %v1191 = vunpack.c.l.b16 %v335
  %v1192 = vunpack.c.l.b16 %v336
  %v1193 = vunpack.c.l.b16 %v337
  %v1194 = vunpack.c.l.b16 %v338
  %v1195 = vunpack.c.l.b16 %v339
  %v1196 = vunpack.c.l.b16 %v340
  %v1197 = vunpack.c.l.b16 %v341
  %v1198 = vunpack.c.l.b16 %v342
  %v1199 = vunpack.c.l.b16 %v343
  %v1200 = vunpack.c.l.b16 %v344
  %v1201 = vunpack.c.l.b16 %v345
  %v1202 = vunpack.c.l.b16 %v346
  %v1203 = vunpack.c.l.b16 %v347
  %v1204 = vunpack.c.l.b16 %v348
  %v1205 = vunpack.c.l.b16 %v349
  %v1206 = vunpack.c.l.b16 %v350
  %v1207 = vunpack.c.l.b16 %v351
  %v1208 = vunpack.c.l.b16 %v352
  %v1209 = vunpack.c.l.b16 %v353
  %v1210 = vunpack.c.l.b16 %v354
  %v1211 = vunpack.c.l.b16 %v355
  %v1212 = vunpack.c.l.b16 %v356
  %v1213 = vunpack.c.l.b16 %v357
  %v1214 = vunpack.c.l.b16 %v358
  %v1215 = vunpack.c.l.b16 %v359
  %v1216 = vunpack.c.l.b16 %v360
  %v1217 = vunpack.c.l.b16 %v361
  %v1218 = vunpack.c.l.b16 %v362
  %v1219 = vunpack.c.l.b16 %v363
  %v1220 = vunpack.c.l.b16 %v364
  %v1221 = vunpack.c.l.b16 %v365
  %v1222 = vunpack.c.l.b16 %v366
  %v1223 = vunpack.c.l.b16 %v367
  %v1224 = vunpack.c.l.b16 %v368
  %v1225 = vunpack.c.l.b16 %v369
  %v1226 = vunpack.c.l.b16 %v370
  %v1227 = vunpack.c.l.b16 %v371
  %v1228 = vunpack.c.l.b16 %v372
  %v1229 = vunpack.c.l.b16 %v373
  %v1230 = vunpack.c.l.b16 %v374
  %v1231 = vunpack.c.l.b16 %v375
  %v1232 = vunpack.c.l.b16 %v376
  %v1233 = vunpack.c.l.b16 %v377
  %v1234 = vunpack.c.l.b16 %v378
  %v1235 = vunpack.c.l.b16 %v379
  %v1236 = vunpack.c.l.b16 %v380
  %v1237 = vunpack.c.l.b16 %v381
  %v1238 = vunpack.c.l.b16 %v382
  %v1239 = vunpack.c.l.b16 %v383
  %v1240 = vunpack.c.l.b16 %v384
  %v1241 = vunpack.c.l.b16 %v385
  %v1242 = vunpack.c.l.b16 %v386
  %v1243 = vunpack.c.l.b16 %v387
  %v1244 = vunpack.c.l.b16 %v388
  %v1245 = vunpack.c.l.b16 %v389
  %v1246 = vunpack.c.l.b16 %v390
  %v1247 = vunpack.c.l.b16 %v391
  %v1248 = vunpack.c.l.b16 %v392
  %v1249 = vunpack.c.l.b16 %v393
  %v1250 = vunpack.c.l.b16 %v394
  %v1251 = vunpack.c.l.b16 %v395
  %v1252 = vunpack.c.l.b16 %v396
  %v1253 = vunpack.c.l.b16 %v397
  %v1254 = vunpack.c.l.b16 %v398
  %v1255 = vunpack.c.l.b16 %v399
  %v1256 = vunpack.c.l.b16 %v400
  %v1257 = vunpack.c.l.b16 %v401
  %v1258 = vunpack.c.l.b16 %v402
  %v1259 = vunpack.c.l.b16 %v403
  %v1260 = vunpack.c.l.b16 %v404
  %v1261 = vunpack.c.l.b16 %v405
  %v1262 = vunpack.c.l.b16 %v406
  %v1263 = vunpack.c.l.b16 %v407
  %v1264 = vunpack.c.l.b16 %v408
  %v1265 = vunpack.c.l.b16 %v409
  %v1266 = vpack.c.b16 %v883, %v882
  %v1267 = vpack.c.b16 %v885, %v884
  %v1268 = vpack.c.b16 %v887, %v886
  %v1269 = vpack.c.b16 %v889, %v888
  %v1270 = vpack.c.b16 %v891, %v890
  %v1271 = vpack.c.b16 %v893, %v892
  %v1272 = vpack.c.b16 %v895, %v894
  %v1273 = vpack.c.b16 %v897, %v896
  %v1274 = vpack.c.b16 %v899, %v898
  %v1275 = vpack.c.b16 %v901, %v900
  %v1276 = vpack.c.b16 %v903, %v902
  %v1277 = vpack.c.b16 %v905, %v904
  %v1278 = vpack.c.b16 %v907, %v906
  %v1279 = vpack.c.b16 %v909, %v908
  %v1280 = vpack.c.b16 %v911, %v910
  %v1281 = vpack.c.b16 %v913, %v912
  %v1282 = vpack.c.b16 %v915, %v914
  %v1283 = vpack.c.b16 %v917, %v916
  %v1284 = vpack.c.b16 %v919, %v918
  %v1285 = vpack.c.b16 %v921, %v920
  %v1286 = vpack.c.b16 %v923, %v922
  %v1287 = vpack.c.b16 %v925, %v924
  %v1288 = vpack.c.b16 %v927, %v926
  %v1289 = vpack.c.b16 %v929, %v928
  %v1290 = vpack.c.b16 %v931, %v930
  %v1291 = vpack.c.b16 %v933, %v932
  %v1292 = vpack.c.b16 %v935, %v934
  %v1293 = vpack.c.b16 %v937, %v936
  %v1294 = vpack.c.b16 %v939, %v938
  %v1295 = vpack.c.b16 %v941, %v940
  %v1296 = vpack.c.b16 %v943, %v942
  %v1297 = vpack.c.b16 %v945, %v944
  %v1298 = vpack.c.b16 %v947, %v946
  %v1299 = vpack.c.b16 %v949, %v948
  %v1300 = vpack.c.b16 %v951, %v950
  %v1301 = vpack.c.b16 %v953, %v952
  %v1302 = vpack.c.b16 %v955, %v954
  %v1303 = vpack.c.b16 %v957, %v956
  %v1304 = vpack.c.b16 %v959, %v958
  %v1305 = vpack.c.b16 %v961, %v960
  %v1306 = vpack.c.b16 %v963, %v962
  %v1307 = vpack.c.b16 %v965, %v964
  %v1308 = vpack.c.b16 %v967, %v966
  %v1309 = vpack.c.b16 %v969, %v968
  %v1310 = vpack.c.b16 %v971, %v970
  %v1311 = vpack.c.b16 %v973, %v972
  %v1312 = vpack.c.b16 %v975, %v974
  %v1313 = vpack.c.b16 %v977, %v976
  %v1314 = vpack.c.b16 %v979, %v978
  %v1315 = vpack.c.b16 %v981, %v980
  %v1316 = vpack.c.b16 %v983, %v982
  %v1317 = vpack.c.b16 %v985, %v984
  %v1318 = vpack.c.b16 %v987, %v986
  %v1319 = vpack.c.b16 %v989, %v988
  %v1320 = vpack.c.b16 %v991, %v990
  %v1321 = vpack.c.b16 %v993, %v992
  %v1322 = vpack.c.b16 %v995, %v994
  %v1323 = vpack.c.b16 %v997, %v996
  %v1324 = vpack.c.b16 %v999, %v998
  %v1325 = vpack.c.b16 %v1001, %v1000
  %v1326 = vpack.c.b16 %v1003, %v1002
  %v1327 = vpack.c.b16 %v1005, %v1004
  %v1328 = vpack.c.b16 %v1007, %v1006
  %v1329 = vpack.c.b16 %v1009, %v1008
  %v1330 = vpack.c.b16 %v1011, %v1010
  %v1331 = vpack.c.b16 %v1013, %v1012
  %v1332 = vpack.c.b16 %v1015, %v1014
  %v1333 = vpack.c.b16 %v1017, %v1016
  %v1334 = vpack.c.b16 %v1019, %v1018
  %v1335 = vpack.c.b16 %v1021, %v1020
  %v1336 = vpack.c.b16 %v1023, %v1022
  %v1337 = vpack.c.b16 %v1025, %v1024
  %v1338 = vpack.c.b16 %v1027, %v1026
  %v1339 = vpack.c.b16 %v1029, %v1028
  %v1340 = vpack.c.b16 %v1031, %v1030
  %v1341 = vpack.c.b16 %v1033, %v1032
  %v1342 = vpack.c.b16 %v1035, %v1034
  %v1343 = vpack.c.b16 %v1037, %v1036
  %v1344 = vpack.c.b16 %v1039, %v1038
  %v1345 = vpack.c.b16 %v1041, %v1040
  %v1346 = vpack.c.b16 %v1043, %v1042
  %v1347 = vpack.c.b16 %v1045, %v1044
  %v1348 = vpack.c.b16 %v1047, %v1046
  %v1349 = vpack.c.b16 %v1049, %v1048
  %v1350 = vpack.c.b16 %v1051, %v1050
  %v1351 = vpack.c.b16 %v1053, %v1052
  %v1352 = vpack.c.b16 %v1055, %v1054
  %v1353 = vpack.c.b16 %v1057, %v1056
  %v1354 = vpack.c.b16 %v1059, %v1058
  %v1355 = vpack.c.b16 %v1061, %v1060
  %v1356 = vpack.c.b16 %v1063, %v1062
  %v1357 = vpack.c.b16 %v1065, %v1064
  %v1358 = vpack.c.b16 %v1067, %v1066
  %v1359 = vpack.c.b16 %v1069, %v1068
  %v1360 = vpack.c.b16 %v1071, %v1070
  %v1361 = vpack.c.b16 %v1073, %v1072
  %v1362 = vpack.c.b16 %v1075, %v1074
  %v1363 = vpack.c.b16 %v1077, %v1076
  %v1364 = vpack.c.b16 %v1079, %v1078
  %v1365 = vpack.c.b16 %v1081, %v1080
  %v1366 = vpack.c.b16 %v1083, %v1082
  %v1367 = vpack.c.b16 %v1085, %v1084
  %v1368 = vpack.c.b16 %v1087, %v1086
  %v1369 = vpack.c.b16 %v1089, %v1088
  %v1370 = vpack.c.b16 %v1091, %v1090
  %v1371 = vpack.c.b16 %v1093, %v1092
  %v1372 = vpack.c.b16 %v1095, %v1094
  %v1373 = vpack.c.b16 %v1097, %v1096
  %v1374 = vpack.c.b16 %v1099, %v1098
  %v1375 = vpack.c.b16 %v1101, %v1100
  %v1376 = vpack.c.b16 %v1103, %v1102
  %v1377 = vpack.c.b16 %v1105, %v1104
  %v1378 = vpack.c.b16 %v1107, %v1106
  %v1379 = vpack.c.b16 %v1109, %v1108
  %v1380 = vpack.c.b16 %v1111, %v1110
  %v1381 = vpack.c.b16 %v1113, %v1112
  %v1382 = vpack.c.b16 %v1115, %v1114
  %v1383 = vpack.c.b16 %v1117, %v1116
  %v1384 = vpack.c.b16 %v1119, %v1118
  %v1385 = vpack.c.b16 %v1121, %v1120
  %v1386 = vpack.c.b16 %v1123, %v1122
  %v1387 = vpack.c.b16 %v1125, %v1124
  %v1388 = vpack.c.b16 %v1127, %v1126
  %v1389 = vpack.c.b16 %v1129, %v1128
  %v1390 = vpack.c.b16 %v1131, %v1130
  %v1391 = vpack.c.b16 %v1133, %v1132
  %v1392 = vpack.c.b16 %v1135, %v1134
  %v1393 = vpack.c.b16 %v1137, %v1136
  %v1394 = vpack.c.b16 %v1139, %v1138
  %v1395 = vpack.c.b16 %v1141, %v1140
  %v1396 = vpack.c.b16 %v1143, %v1142
  %v1397 = vpack.c.b16 %v1145, %v1144
  %v1398 = vpack.c.b16 %v1147, %v1146
  %v1399 = vpack.c.b16 %v1149, %v1148
  %v1400 = vpack.c.b16 %v1151, %v1150
  %v1401 = vpack.c.b16 %v1153, %v1152
  %v1402 = vpack.c.b16 %v1155, %v1154
  %v1403 = vpack.c.b16 %v1157, %v1156
  %v1404 = vpack.c.b16 %v1159, %v1158
  %v1405 = vpack.c.b16 %v1161, %v1160
  %v1406 = vpack.c.b16 %v1163, %v1162
  %v1407 = vpack.c.b16 %v1165, %v1164
  %v1408 = vpack.c.b16 %v1167, %v1166
  %v1409 = vpack.c.b16 %v1169, %v1168
  %v1410 = vpack.c.b16 %v1171, %v1170
  %v1411 = vpack.c.b16 %v1173, %v1172
  %v1412 = vpack.c.b16 %v1175, %v1174
  %v1413 = vpack.c.b16 %v1177, %v1176
  %v1414 = vpack.c.b16 %v1179, %v1178
  %v1415 = vpack.c.b16 %v1181, %v1180
  %v1416 = vpack.c.b16 %v1183, %v1182
  %v1417 = vpack.c.b16 %v1185, %v1184
  %v1418 = vpack.c.b16 %v1187, %v1186
  %v1419 = vpack.c.b16 %v1189, %v1188
  %v1420 = vpack.c.b16 %v1191, %v1190
  %v1421 = vpack.c.b16 %v1193, %v1192
  %v1422 = vpack.c.b16 %v1195, %v1194
  %v1423 = vpack.c.b16 %v1197, %v1196
  %v1424 = vpack.c.b16 %v1199, %v1198
  %v1425 = vpack.c.b16 %v1201, %v1200
  %v1426 = vpack.c.b16 %v1203, %v1202
  %v1427 = vpack.c.b16 %v1205, %v1204
  %v1428 = vpack.c.b16 %v1207, %v1206
  %v1429 = vpack.c.b16 %v1209, %v1208
  %v1430 = vpack.c.b16 %v1211, %v1210
  %v1431 = vpack.c.b16 %v1213, %v1212
  %v1432 = vpack.c.b16 %v1215, %v1214
  %v1433 = vpack.c.b16 %v1217, %v1216
  %v1434 = vpack.c.b16 %v1219, %v1218
  %v1435 = vpack.c.b16 %v1221, %v1220
  %v1436 = vpack.c.b16 %v1223, %v1222
  %v1437 = vpack.c.b16 %v1225, %v1224
  %v1438 = vpack.c.b16 %v1227, %v1226
  %v1439 = vpack.c.b16 %v1229, %v1228
  %v1440 = vpack.c.b16 %v1231, %v1230
  %v1441 = vpack.c.b16 %v1233, %v1232
  %v1442 = vpack.c.b16 %v1235, %v1234
  %v1443 = vpack.c.b16 %v1237, %v1236
  %v1444 = vpack.c.b16 %v1239, %v1238
  %v1445 = vpack.c.b16 %v1241, %v1240
  %v1446 = vpack.c.b16 %v1243, %v1242
  %v1447 = vpack.c.b16 %v1245, %v1244
  %v1448 = vpack.c.b16 %v1247, %v1246
  %v1449 = vpack.c.b16 %v1249, %v1248
  %v1450 = vpack.c.b16 %v1251, %v1250
  %v1451 = vpack.c.b16 %v1253, %v1252
  %v1452 = vpack.c.b16 %v1255, %v1254
  %v1453 = vpack.c.b16 %v1257, %v1256
  %v1454 = vpack.c.b16 %v1259, %v1258
  %v1455 = vpack.c.b16 %v1261, %v1260
  %v1456 = vpack.c.b16 %v1263, %v1262
  %v1457 = vpack.c.b16 %v1265, %v1264
  %1650 = vmatpush.bf16.msra.mxu0 %v1273
  %1651 = vmatpush.bf16.msra.mxu0 %v1272
  %1652 = vmatpush.bf16.msra.mxu0 %v1271
  %1653 = vmatpush.bf16.msra.mxu0 %v1270
  %1654 = vmatpush.bf16.msra.mxu0 %v1269
  %1655 = vmatpush.bf16.msra.mxu0 %v1268
  %1656 = vmatpush.bf16.msra.mxu0 %v1267
  %1657 = vmatpush.bf16.msra.mxu0 %v1266
  %1658 = vmatmul.bf16.gmra.mxu0 %v450
  %v1659 = vpop.f32.mrf.mxu0
  %v1660 = vadd.f32 %v412, %v1659
  %v1661 = vpop.f32.mrf.mxu0
  %1662 = vdwg.mxu0
  %1663 = vmatpush.bf16.msra.mxu0 %v1281
  %1664 = vmatpush.bf16.msra.mxu0 %v1280
  %1665 = vmatpush.bf16.msra.mxu0 %v1279
  %1666 = vmatpush.bf16.msra.mxu0 %v1278
  %1667 = vmatpush.bf16.msra.mxu0 %v1277
  %1668 = vmatpush.bf16.msra.mxu0 %v1276
  %1669 = vmatpush.bf16.msra.mxu0 %v1275
  %1670 = vmatpush.bf16.msra.mxu0 %v1274
  %1671 = vmatmul.bf16.gmra.mxu0 %v451
  %v1672 = vpop.f32.mrf.mxu0
  %v1673 = vadd.f32 %v1660, %v1672
  %v1674 = vpop.f32.mrf.mxu0
  %1675 = vdwg.mxu0
  %1676 = vmatpush.bf16.msra.mxu0 %v1289
  %1677 = vmatpush.bf16.msra.mxu0 %v1288
  %1678 = vmatpush.bf16.msra.mxu0 %v1287
  %1679 = vmatpush.bf16.msra.mxu0 %v1286
  %1680 = vmatpush.bf16.msra.mxu0 %v1285
  %1681 = vmatpush.bf16.msra.mxu0 %v1284
  %1682 = vmatpush.bf16.msra.mxu0 %v1283
  %1683 = vmatpush.bf16.msra.mxu0 %v1282
  %1684 = vmatmul.bf16.gmra.mxu0 %v452
  %v1685 = vpop.f32.mrf.mxu0
  %v1686 = vadd.f32 %v1673, %v1685
  %v1687 = vpop.f32.mrf.mxu0
  %1688 = vdwg.mxu0
  %1689 = vmatpush.bf16.msra.mxu0 %v1297
  %1690 = vmatpush.bf16.msra.mxu0 %v1296
  %1691 = vmatpush.bf16.msra.mxu0 %v1295
  %1692 = vmatpush.bf16.msra.mxu0 %v1294
  %1693 = vmatpush.bf16.msra.mxu0 %v1293
  %1694 = vmatpush.bf16.msra.mxu0 %v1292
  %1695 = vmatpush.bf16.msra.mxu0 %v1291
  %1696 = vmatpush.bf16.msra.mxu0 %v1290
  %1697 = vmatmul.bf16.gmra.mxu0 %v453
  %v1698 = vpop.f32.mrf.mxu0
  %v1699 = vadd.f32 %v1686, %v1698
  %v1700 = vpop.f32.mrf.mxu0
  %1701 = vdwg.mxu0
  %1702 = vmatpush.bf16.msra.mxu0 %v1305
  %1703 = vmatpush.bf16.msra.mxu0 %v1304
  %1704 = vmatpush.bf16.msra.mxu0 %v1303
  %1705 = vmatpush.bf16.msra.mxu0 %v1302
  %1706 = vmatpush.bf16.msra.mxu0 %v1301
  %1707 = vmatpush.bf16.msra.mxu0 %v1300
  %1708 = vmatpush.bf16.msra.mxu0 %v1299
  %1709 = vmatpush.bf16.msra.mxu0 %v1298
  %1710 = vmatmul.bf16.gmra.mxu0 %v454
  %v1711 = vpop.f32.mrf.mxu0
  %v1712 = vadd.f32 %v1699, %v1711
  %v1713 = vpop.f32.mrf.mxu0
  %1714 = vdwg.mxu0
  %1715 = vmatpush.bf16.msra.mxu0 %v1313
  %1716 = vmatpush.bf16.msra.mxu0 %v1312
  %1717 = vmatpush.bf16.msra.mxu0 %v1311
  %1718 = vmatpush.bf16.msra.mxu0 %v1310
  %1719 = vmatpush.bf16.msra.mxu0 %v1309
  %1720 = vmatpush.bf16.msra.mxu0 %v1308
  %1721 = vmatpush.bf16.msra.mxu0 %v1307
  %1722 = vmatpush.bf16.msra.mxu0 %v1306
  %1723 = vmatmul.bf16.gmra.mxu0 %v455
  %v1724 = vpop.f32.mrf.mxu0
  %v1725 = vadd.f32 %v1712, %v1724
  %v1726 = vpop.f32.mrf.mxu0
  %1727 = vdwg.mxu0
  %1728 = vmatpush.bf16.msra.mxu0 %v1321
  %1729 = vmatpush.bf16.msra.mxu0 %v1320
  %1730 = vmatpush.bf16.msra.mxu0 %v1319
  %1731 = vmatpush.bf16.msra.mxu0 %v1318
  %1732 = vmatpush.bf16.msra.mxu0 %v1317
  %1733 = vmatpush.bf16.msra.mxu0 %v1316
  %1734 = vmatpush.bf16.msra.mxu0 %v1315
  %1735 = vmatpush.bf16.msra.mxu0 %v1314
  %1736 = vmatmul.bf16.gmra.mxu0 %v456
  %v1737 = vpop.f32.mrf.mxu0
  %v1738 = vadd.f32 %v1725, %v1737
  %v1739 = vpop.f32.mrf.mxu0
  %1740 = vdwg.mxu0
  %1741 = vmatpush.bf16.msra.mxu0 %v1329
  %1742 = vmatpush.bf16.msra.mxu0 %v1328
  %1743 = vmatpush.bf16.msra.mxu0 %v1327
  %1744 = vmatpush.bf16.msra.mxu0 %v1326
  %1745 = vmatpush.bf16.msra.mxu0 %v1325
  %1746 = vmatpush.bf16.msra.mxu0 %v1324
  %1747 = vmatpush.bf16.msra.mxu0 %v1323
  %1748 = vmatpush.bf16.msra.mxu0 %v1322
  %1749 = vmatmul.bf16.gmra.mxu0 %v457
  %v1750 = vpop.f32.mrf.mxu0
  %v1751 = vadd.f32 %v1738, %v1750
  %v1752 = vpop.f32.mrf.mxu0
  %1753 = vdwg.mxu0
  %1754 = vmatpush.bf16.msra.mxu0 %v1337
  %1755 = vmatpush.bf16.msra.mxu0 %v1336
  %1756 = vmatpush.bf16.msra.mxu0 %v1335
  %1757 = vmatpush.bf16.msra.mxu0 %v1334
  %1758 = vmatpush.bf16.msra.mxu0 %v1333
  %1759 = vmatpush.bf16.msra.mxu0 %v1332
  %1760 = vmatpush.bf16.msra.mxu0 %v1331
  %1761 = vmatpush.bf16.msra.mxu0 %v1330
  %1762 = vmatmul.bf16.gmra.mxu0 %v458
  %v1763 = vpop.f32.mrf.mxu0
  %v1764 = vadd.f32 %v1751, %v1763
  %v1765 = vpop.f32.mrf.mxu0
  %1766 = vdwg.mxu0
  %1767 = vmatpush.bf16.msra.mxu0 %v1345
  %1768 = vmatpush.bf16.msra.mxu0 %v1344
  %1769 = vmatpush.bf16.msra.mxu0 %v1343
  %1770 = vmatpush.bf16.msra.mxu0 %v1342
  %1771 = vmatpush.bf16.msra.mxu0 %v1341
  %1772 = vmatpush.bf16.msra.mxu0 %v1340
  %1773 = vmatpush.bf16.msra.mxu0 %v1339
  %1774 = vmatpush.bf16.msra.mxu0 %v1338
  %1775 = vmatmul.bf16.gmra.mxu0 %v459
  %v1776 = vpop.f32.mrf.mxu0
  %v1777 = vadd.f32 %v1764, %v1776
  %v1778 = vpop.f32.mrf.mxu0
  %1779 = vdwg.mxu0
  %1780 = vmatpush.bf16.msra.mxu0 %v1353
  %1781 = vmatpush.bf16.msra.mxu0 %v1352
  %1782 = vmatpush.bf16.msra.mxu0 %v1351
  %1783 = vmatpush.bf16.msra.mxu0 %v1350
  %1784 = vmatpush.bf16.msra.mxu0 %v1349
  %1785 = vmatpush.bf16.msra.mxu0 %v1348
  %1786 = vmatpush.bf16.msra.mxu0 %v1347
  %1787 = vmatpush.bf16.msra.mxu0 %v1346
  %1788 = vmatmul.bf16.gmra.mxu0 %v460
  %v1789 = vpop.f32.mrf.mxu0
  %v1790 = vadd.f32 %v1777, %v1789
  %v1791 = vpop.f32.mrf.mxu0
  %1792 = vdwg.mxu0
  %1793 = vmatpush.bf16.msra.mxu0 %v1361
  %1794 = vmatpush.bf16.msra.mxu0 %v1360
  %1795 = vmatpush.bf16.msra.mxu0 %v1359
  %1796 = vmatpush.bf16.msra.mxu0 %v1358
  %1797 = vmatpush.bf16.msra.mxu0 %v1357
  %1798 = vmatpush.bf16.msra.mxu0 %v1356
  %1799 = vmatpush.bf16.msra.mxu0 %v1355
  %1800 = vmatpush.bf16.msra.mxu0 %v1354
  %1801 = vmatmul.bf16.gmra.mxu0 %v461
  %v1802 = vpop.f32.mrf.mxu0
  %v1803 = vadd.f32 %v1790, %v1802
  %v1804 = vpop.f32.mrf.mxu0
  %1805 = vdwg.mxu0
  %1806 = vmatpush.bf16.msra.mxu0 %v1369
  %1807 = vmatpush.bf16.msra.mxu0 %v1368
  %1808 = vmatpush.bf16.msra.mxu0 %v1367
  %1809 = vmatpush.bf16.msra.mxu0 %v1366
  %1810 = vmatpush.bf16.msra.mxu0 %v1365
  %1811 = vmatpush.bf16.msra.mxu0 %v1364
  %1812 = vmatpush.bf16.msra.mxu0 %v1363
  %1813 = vmatpush.bf16.msra.mxu0 %v1362
  %1814 = vmatmul.bf16.gmra.mxu0 %v462
  %v1815 = vpop.f32.mrf.mxu0
  %v1816 = vadd.f32 %v1803, %v1815
  %v1817 = vpop.f32.mrf.mxu0
  %1818 = vdwg.mxu0
  %1819 = vmatpush.bf16.msra.mxu0 %v1377
  %1820 = vmatpush.bf16.msra.mxu0 %v1376
  %1821 = vmatpush.bf16.msra.mxu0 %v1375
  %1822 = vmatpush.bf16.msra.mxu0 %v1374
  %1823 = vmatpush.bf16.msra.mxu0 %v1373
  %1824 = vmatpush.bf16.msra.mxu0 %v1372
  %1825 = vmatpush.bf16.msra.mxu0 %v1371
  %1826 = vmatpush.bf16.msra.mxu0 %v1370
  %1827 = vmatmul.bf16.gmra.mxu0 %v463
  %v1828 = vpop.f32.mrf.mxu0
  %v1829 = vadd.f32 %v1816, %v1828
  %v1830 = vpop.f32.mrf.mxu0
  %1831 = vdwg.mxu0
  %1832 = vmatpush.bf16.msra.mxu0 %v1385
  %1833 = vmatpush.bf16.msra.mxu0 %v1384
  %1834 = vmatpush.bf16.msra.mxu0 %v1383
  %1835 = vmatpush.bf16.msra.mxu0 %v1382
  %1836 = vmatpush.bf16.msra.mxu0 %v1381
  %1837 = vmatpush.bf16.msra.mxu0 %v1380
  %1838 = vmatpush.bf16.msra.mxu0 %v1379
  %1839 = vmatpush.bf16.msra.mxu0 %v1378
  %1840 = vmatmul.bf16.gmra.mxu0 %v464
  %v1841 = vpop.f32.mrf.mxu0
  %v1842 = vadd.f32 %v1829, %v1841
  %v1843 = vpop.f32.mrf.mxu0
  %1844 = vdwg.mxu0
  %1845 = vmatpush.bf16.msra.mxu0 %v1393
  %1846 = vmatpush.bf16.msra.mxu0 %v1392
  %1847 = vmatpush.bf16.msra.mxu0 %v1391
  %1848 = vmatpush.bf16.msra.mxu0 %v1390
  %1849 = vmatpush.bf16.msra.mxu0 %v1389
  %1850 = vmatpush.bf16.msra.mxu0 %v1388
  %1851 = vmatpush.bf16.msra.mxu0 %v1387
  %1852 = vmatpush.bf16.msra.mxu0 %v1386
  %1853 = vmatmul.bf16.gmra.mxu0 %v465
  %v1854 = vpop.f32.mrf.mxu0
  %v1855 = vadd.f32 %v1842, %v1854
  %v1856 = vpop.f32.mrf.mxu0
  %1857 = vdwg.mxu0
  %1858 = vmatpush.bf16.msra.mxu0 %v1401
  %1859 = vmatpush.bf16.msra.mxu0 %v1400
  %1860 = vmatpush.bf16.msra.mxu0 %v1399
  %1861 = vmatpush.bf16.msra.mxu0 %v1398
  %1862 = vmatpush.bf16.msra.mxu0 %v1397
  %1863 = vmatpush.bf16.msra.mxu0 %v1396
  %1864 = vmatpush.bf16.msra.mxu0 %v1395
  %1865 = vmatpush.bf16.msra.mxu0 %v1394
  %1866 = vmatmul.bf16.gmra.mxu0 %v466
  %v1867 = vpop.f32.mrf.mxu0
  %v1868 = vadd.f32 %v1855, %v1867
  %v1869 = vpop.f32.mrf.mxu0
  %1870 = vdwg.mxu0
  %1871 = vmatpush.bf16.msra.mxu0 %v1409
  %1872 = vmatpush.bf16.msra.mxu0 %v1408
  %1873 = vmatpush.bf16.msra.mxu0 %v1407
  %1874 = vmatpush.bf16.msra.mxu0 %v1406
  %1875 = vmatpush.bf16.msra.mxu0 %v1405
  %1876 = vmatpush.bf16.msra.mxu0 %v1404
  %1877 = vmatpush.bf16.msra.mxu0 %v1403
  %1878 = vmatpush.bf16.msra.mxu0 %v1402
  %1879 = vmatmul.bf16.gmra.mxu0 %v467
  %v1880 = vpop.f32.mrf.mxu0
  %v1881 = vadd.f32 %v1868, %v1880
  %v1882 = vpop.f32.mrf.mxu0
  %1883 = vdwg.mxu0
  %1884 = vmatpush.bf16.msra.mxu0 %v1417
  %1885 = vmatpush.bf16.msra.mxu0 %v1416
  %1886 = vmatpush.bf16.msra.mxu0 %v1415
  %1887 = vmatpush.bf16.msra.mxu0 %v1414
  %1888 = vmatpush.bf16.msra.mxu0 %v1413
  %1889 = vmatpush.bf16.msra.mxu0 %v1412
  %1890 = vmatpush.bf16.msra.mxu0 %v1411
  %1891 = vmatpush.bf16.msra.mxu0 %v1410
  %1892 = vmatmul.bf16.gmra.mxu0 %v468
  %v1893 = vpop.f32.mrf.mxu0
  %v1894 = vadd.f32 %v1881, %v1893
  %v1895 = vpop.f32.mrf.mxu0
  %1896 = vdwg.mxu0
  %1897 = vmatpush.bf16.msra.mxu0 %v1425
  %1898 = vmatpush.bf16.msra.mxu0 %v1424
  %1899 = vmatpush.bf16.msra.mxu0 %v1423
  %1900 = vmatpush.bf16.msra.mxu0 %v1422
  %1901 = vmatpush.bf16.msra.mxu0 %v1421
  %1902 = vmatpush.bf16.msra.mxu0 %v1420
  %1903 = vmatpush.bf16.msra.mxu0 %v1419
  %1904 = vmatpush.bf16.msra.mxu0 %v1418
  %1905 = vmatmul.bf16.gmra.mxu0 %v469
  %v1906 = vpop.f32.mrf.mxu0
  %v1907 = vadd.f32 %v1894, %v1906
  %v1908 = vpop.f32.mrf.mxu0
  %1909 = vdwg.mxu0
  %1910 = vmatpush.bf16.msra.mxu0 %v1433
  %1911 = vmatpush.bf16.msra.mxu0 %v1432
  %1912 = vmatpush.bf16.msra.mxu0 %v1431
  %1913 = vmatpush.bf16.msra.mxu0 %v1430
  %1914 = vmatpush.bf16.msra.mxu0 %v1429
  %1915 = vmatpush.bf16.msra.mxu0 %v1428
  %1916 = vmatpush.bf16.msra.mxu0 %v1427
  %1917 = vmatpush.bf16.msra.mxu0 %v1426
  %1918 = vmatmul.bf16.gmra.mxu0 %v470
  %v1919 = vpop.f32.mrf.mxu0
  %v1920 = vadd.f32 %v1907, %v1919
  %v1921 = vpop.f32.mrf.mxu0
  %1922 = vdwg.mxu0
  %1923 = vmatpush.bf16.msra.mxu0 %v1441
  %1924 = vmatpush.bf16.msra.mxu0 %v1440
  %1925 = vmatpush.bf16.msra.mxu0 %v1439
  %1926 = vmatpush.bf16.msra.mxu0 %v1438
  %1927 = vmatpush.bf16.msra.mxu0 %v1437
  %1928 = vmatpush.bf16.msra.mxu0 %v1436
  %1929 = vmatpush.bf16.msra.mxu0 %v1435
  %1930 = vmatpush.bf16.msra.mxu0 %v1434
  %1931 = vmatmul.bf16.gmra.mxu0 %v471
  %v1932 = vpop.f32.mrf.mxu0
  %v1933 = vadd.f32 %v1920, %v1932
  %v1934 = vpop.f32.mrf.mxu0
  %1935 = vdwg.mxu0
  %1936 = vmatpush.bf16.msra.mxu0 %v1449
  %1937 = vmatpush.bf16.msra.mxu0 %v1448
  %1938 = vmatpush.bf16.msra.mxu0 %v1447
  %1939 = vmatpush.bf16.msra.mxu0 %v1446
  %1940 = vmatpush.bf16.msra.mxu0 %v1445
  %1941 = vmatpush.bf16.msra.mxu0 %v1444
  %1942 = vmatpush.bf16.msra.mxu0 %v1443
  %1943 = vmatpush.bf16.msra.mxu0 %v1442
  %1944 = vmatmul.bf16.gmra.mxu0 %v472
  %v1945 = vpop.f32.mrf.mxu0
  %v1946 = vadd.f32 %v1933, %v1945
  %v1947 = vpop.f32.mrf.mxu0
  %1948 = vdwg.mxu0
  %1949 = vmatpush.bf16.msra.mxu0 %v1457
  %1950 = vmatpush.bf16.msra.mxu0 %v1456
  %1951 = vmatpush.bf16.msra.mxu0 %v1455
  %1952 = vmatpush.bf16.msra.mxu0 %v1454
  %1953 = vmatpush.bf16.msra.mxu0 %v1453
  %1954 = vmatpush.bf16.msra.mxu0 %v1452
  %1955 = vmatpush.bf16.msra.mxu0 %v1451
  %1956 = vmatpush.bf16.msra.mxu0 %v1450
  %1957 = vmatmul.bf16.gmra.mxu0 %v473
  %v1958 = vpop.f32.mrf.mxu0
  %v1959 = vadd.f32 %v1946, %v1958
  %v1960 = vpop.f32.mrf.mxu0
  %1961 = vdwg.mxu0
  %1962 = vst [vmem:[%s3] sm:$0xff] %v1959
  // Predicated region
  $region14: #{multimodal_forward.5} parent=0 // pred_check
    _
  $region15: #{multimodal_forward.5} parent=0 // pred_check_branch
    %1964 = sbr.rel (0) target = $region17
  $region16: #{multimodal_forward.5} parent=0 // pred_region
    _
  $region17: #{multimodal_forward.5} parent=0 // pred_fallthru
    _
  // Predicated region
  $region18: #{multimodal_forward.5} parent=0 // pred_check
    _
  $region19: #{multimodal_forward.5} parent=0 // pred_check_branch
    %1966 = sbr.rel (0) target = $region21
  $region20: #{multimodal_forward.5} parent=0 // pred_region
    _
  $region21: #{multimodal_forward.5} parent=0 // pred_fallthru
    _

// kernel: multimodal_forward.6
$region0: #{multimodal_forward.6}
  #allocation0 [shape = 'u32[]', space=smem, size = 0x4, offset = 0x4, fixed_abs, tag = 'smem constant byte address 0x4 - core index']
  #allocation1 [shape = 'u32[72,128]{1,0:T(1,128)}', space=vmem, size = 0x9000, scoped, tag = 'internal scratch']
  #allocation2 [shape = 'f32[1]{0:T(128)S(6)}', space=smem, size = 0x200, scoped, tag = 'scoped memory for multimodal_forward.6']
  #allocation3 [shape = 'f32[1]{0:T(128)S(6)}', space=smem, size = 0x200, scoped, tag = 'scoped memory for multimodal_forward.6']
  %s0 = inlined_call_operand.vmem [shape: f32[8,64], index: 0, kind: input, shape index: {}]
  %s1 = inlined_call_operand.vmem [shape: f32[8,128], index: 1, kind: input, shape index: {}]
  %s2 = inlined_call_operand.vmem [shape: f32[8,64], index: 2, kind: input, shape index: {}]
  %s3 = inlined_call_operand.vmem [shape: f32[8,128], index: 3, kind: input, shape index: {}]
  %s4 = inlined_call_operand.vmem [shape: bf16[64,64], index: 4, kind: input, shape index: {}]
  %s5 = inlined_call_operand.vmem [shape: bf16[128,64], index: 5, kind: input, shape index: {}]
  %s6 = inlined_call_operand.vmem [shape: f32[1,64], index: 6, kind: input, shape index: {}]
  %s7 = inlined_call_operand.vmem [shape: bf16[64,128], index: 7, kind: input, shape index: {}]
  %s8 = inlined_call_operand.vmem [shape: f32[1,128], index: 8, kind: input, shape index: {}]
  %s9 = inlined_call_operand.vmem [shape: bf16[64,64], index: 9, kind: input, shape index: {}]
  %s10 = inlined_call_operand.vmem [shape: bf16[128,64], index: 10, kind: input, shape index: {}]
  %s11 = inlined_call_operand.vmem [shape: f32[1,64], index: 11, kind: input, shape index: {}]
  %s12 = inlined_call_operand.vmem [shape: bf16[64,128], index: 12, kind: input, shape index: {}]
  %s13 = inlined_call_operand.vmem [shape: f32[1,128], index: 13, kind: input, shape index: {}]
  %s14 = inlined_call_operand.vmem [shape: bf16[128,64], index: 14, kind: input, shape index: {}]
  %s15 = inlined_call_operand.vmem [shape: bf16[128,64], index: 15, kind: input, shape index: {}]
  %s16 = inlined_call_operand.vmem [shape: f32[1,64], index: 16, kind: input, shape index: {}]
  %s17 = inlined_call_operand.vmem [shape: bf16[64,128], index: 17, kind: input, shape index: {}]
  %s18 = inlined_call_operand.vmem [shape: f32[1,128], index: 18, kind: input, shape index: {}]
  %s19 = inlined_call_operand.<no memory space> [shape: f32[1], index: 19, kind: input, shape index: {}]
  %s20 = inlined_call_operand.<no memory space> [shape: f32[1], index: 20, kind: input, shape index: {}]
  %s21 = inlined_call_operand.vmem [shape: f32[3,3], index: 21, kind: input, shape index: {}]
  %s22 = inlined_call_operand.vmem [shape: f32[3], index: 22, kind: input, shape index: {}]
  %s23 = inlined_call_operand.vmem [shape: f32[3,3], index: 23, kind: input, shape index: {}]
  %s24 = inlined_call_operand.vmem [shape: f32[3], index: 24, kind: input, shape index: {}]
  %s25 = inlined_call_operand.hbm [shape: f32[8,128], index: 25, kind: output, shape index: {0}]
  %s26 = inlined_call_operand.vmem [shape: f32[8,128], index: 26, kind: output, shape index: {1}]
  %s27 = inlined_call_operand.hbm [shape: f32[8,128], index: 27, kind: output, shape index: {2}]
  %s28 = inlined_call_operand.hbm [shape: f32[8,384], index: 28, kind: output, shape index: {3}]
  %29 = xla_tuple %s25, %s26, %s27, %s28
  %s30 = sld [smem:[#allocation0]]
  $region150: #{multimodal_forward.6} parent=0
    _
  %s32 = ssub.s32 1, %s30
  %s33 = scalar_select 0, %s32, %s30
  %34 = sst [smem:[#allocation2]] %s19
  %35 = sst [smem:[#allocation3]] %s20
  $region1: #{multimodal_forward.6} parent=0
    #allocation4 [shape = 'u8[2048]{0}', space=smem, size = 0x800, scoped, tag = 'input window, operand 21, single buffered']
    #allocation5 [shape = 's32[1]{0}', space=sflag, size = 0x4, scoped, tag = 'scoped memory for multimodal_forward.6']
    #allocation6 [shape = 's32[1]{0}', space=sflag, size = 0x4, scoped, tag = 'scoped memory for multimodal_forward.6']
    #allocation7 [shape = 'u8[512]{0}', space=smem, size = 0x200, scoped, tag = 'input window, operand 22, single buffered']
    #allocation8 [shape = 's32[1]{0}', space=sflag, size = 0x4, scoped, tag = 'scoped memory for multimodal_forward.6']
    #allocation9 [shape = 'u8[2048]{0}', space=smem, size = 0x800, scoped, tag = 'input window, operand 23, single buffered']
    #allocation10 [shape = 'u8[512]{0}', space=smem, size = 0x200, scoped, tag = 'input window, operand 24, single buffered']
    #allocation11 [shape = 's32[1]{0}', space=sflag, size = 0x4, scoped, tag = 'scoped memory for multimodal_forward.6']
    #allocation12 [shape = 'u8[4096]{0}', space=vmem, size = 0x1000, scoped, tag = 'output window, operand 0, single buffered']
    #allocation13 [shape = 'u8[4096]{0}', space=vmem, size = 0x1000, scoped, tag = 'output window, operand 2, single buffered']
    #allocation14 [shape = 's32[1]{0}', space=sflag, size = 0x4, scoped, tag = 'scoped memory for multimodal_forward.6']
    #allocation15 [shape = 'u8[12288]{0}', space=vmem, size = 0x3000, scoped, tag = 'output window, operand 3, single buffered']
    %36 = vsyncpa [#allocation6], 0
    %37 = vsyncpa [#allocation8], 0
    %38 = vsyncpa [#allocation11], 0
    %39 = vsyncpa [#allocation5], 0
    %40 = vsyncpa [#allocation14], 0
    // Predicated region
    $region2: #{multimodal_forward.6} parent=1 // pred_check
      _
    $region3: #{multimodal_forward.6} parent=1 // pred_check_branch
      %42 = sbr.rel (0) target = $region5
    $region4: #{multimodal_forward.6} parent=1 // pred_region
      _
    $region5: #{multimodal_forward.6} parent=1 // pred_fallthru
      _
    // Predicated region
    $region6: #{multimodal_forward.6} parent=1 // pred_check
      _
    $region7: #{multimodal_forward.6} parent=1 // pred_check_branch
      %44 = sbr.rel (0) target = $region9
    $region8: #{multimodal_forward.6} parent=1 // pred_region
      _
    $region9: #{multimodal_forward.6} parent=1 // pred_fallthru
      _
    // Predicated region
    $region10: #{multimodal_forward.6} parent=1 // pred_check
      _
    $region11: #{multimodal_forward.6} parent=1 // pred_check_branch
      %46 = sbr.rel (0) target = $region13
    $region12: #{multimodal_forward.6} parent=1 // pred_region
      _
    $region13: #{multimodal_forward.6} parent=1 // pred_fallthru
      _
    // Predicated region
    $region14: #{multimodal_forward.6} parent=1 // pred_check
      _
    $region15: #{multimodal_forward.6} parent=1 // pred_check_branch
      %48 = sbr.rel (0) target = $region17
    $region16: #{multimodal_forward.6} parent=1 // pred_region
      _
    $region17: #{multimodal_forward.6} parent=1 // pred_fallthru
      _
    // Predicated region
    $region18: #{multimodal_forward.6} parent=1 // pred_check
      _
    $region19: #{multimodal_forward.6} parent=1 // pred_check_branch
      %50 = sbr.rel (0) target = $region21
    $region20: #{multimodal_forward.6} parent=1 // pred_region
      _
    $region21: #{multimodal_forward.6} parent=1 // pred_fallthru
      _
    // Predicated region
    $region22: #{multimodal_forward.6} parent=1 // pred_check
      _
    $region23: #{multimodal_forward.6} parent=1 // pred_check_branch
      %52 = sbr.rel (0) target = $region25
    $region24: #{multimodal_forward.6} parent=1 // pred_region
      _
    $region25: #{multimodal_forward.6} parent=1 // pred_fallthru
      _
    // Predicated region
    $region26: #{multimodal_forward.6} parent=1 // pred_check
      _
    $region27: #{multimodal_forward.6} parent=1 // pred_check_branch
      %54 = sbr.rel (0) target = $region29
    $region28: #{multimodal_forward.6} parent=1 // pred_region
      _
    $region29: #{multimodal_forward.6} parent=1 // pred_fallthru
      _
    // Predicated region
    $region30: #{multimodal_forward.6} parent=1 // pred_check
      _
    $region31: #{multimodal_forward.6} parent=1 // pred_check_branch
      %56 = sbr.rel (0) target = $region33
    $region32: #{multimodal_forward.6} parent=1 // pred_region
      _
    $region33: #{multimodal_forward.6} parent=1 // pred_fallthru
      _
    // Predicated region
    $region34: #{multimodal_forward.6} parent=1 // pred_check
      _
    $region35: #{multimodal_forward.6} parent=1 // pred_check_branch
      %58 = sbr.rel (0) target = $region37
    $region36: #{multimodal_forward.6} parent=1 // pred_region
      _
    $region37: #{multimodal_forward.6} parent=1 // pred_fallthru
      _
    // Predicated region
    $region38: #{multimodal_forward.6} parent=1 // pred_check
      _
    $region39: #{multimodal_forward.6} parent=1 // pred_check_branch
      %60 = sbr.rel (0) target = $region41
    $region40: #{multimodal_forward.6} parent=1 // pred_region
      _
    $region41: #{multimodal_forward.6} parent=1 // pred_fallthru
      _
    // Predicated region
    $region42: #{multimodal_forward.6} parent=1 // pred_check
      _
    $region43: #{multimodal_forward.6} parent=1 // pred_check_branch
      %62 = sbr.rel (0) target = $region45
    $region44: #{multimodal_forward.6} parent=1 // pred_region
      _
    $region45: #{multimodal_forward.6} parent=1 // pred_fallthru
      _
    // Predicated region
    $region46: #{multimodal_forward.6} parent=1 // pred_check
      _
    $region47: #{multimodal_forward.6} parent=1 // pred_check_branch
      %64 = sbr.rel (0) target = $region49
    $region48: #{multimodal_forward.6} parent=1 // pred_region
      _
    $region49: #{multimodal_forward.6} parent=1 // pred_fallthru
      _
    // Predicated region
    $region50: #{multimodal_forward.6} parent=1 // pred_check
      _
    $region51: #{multimodal_forward.6} parent=1 // pred_check_branch
      %66 = sbr.rel (0) target = $region53
    $region52: #{multimodal_forward.6} parent=1 // pred_region
      _
    $region53: #{multimodal_forward.6} parent=1 // pred_fallthru
      _
    // Predicated region
    $region54: #{multimodal_forward.6} parent=1 // pred_check
      _
    $region55: #{multimodal_forward.6} parent=1 // pred_check_branch
      %68 = sbr.rel (0) target = $region57
    $region56: #{multimodal_forward.6} parent=1 // pred_region
      _
    $region57: #{multimodal_forward.6} parent=1 // pred_fallthru
      _
    // Predicated region
    $region58: #{multimodal_forward.6} parent=1 // pred_check
      _
    $region59: #{multimodal_forward.6} parent=1 // pred_check_branch
      %70 = sbr.rel (0) target = $region61
    $region60: #{multimodal_forward.6} parent=1 // pred_region
      _
    $region61: #{multimodal_forward.6} parent=1 // pred_fallthru
      _
    // Predicated region
    $region62: #{multimodal_forward.6} parent=1 // pred_check
      _
    $region63: #{multimodal_forward.6} parent=1 // pred_check_branch
      %72 = sbr.rel (0) target = $region65
    $region64: #{multimodal_forward.6} parent=1 // pred_region
      _
    $region65: #{multimodal_forward.6} parent=1 // pred_fallthru
      _
    // Predicated region
    $region66: #{multimodal_forward.6} parent=1 // pred_check
      _
    $region67: #{multimodal_forward.6} parent=1 // pred_check_branch
      %74 = sbr.rel (0) target = $region69
    $region68: #{multimodal_forward.6} parent=1 // pred_region
      _
    $region69: #{multimodal_forward.6} parent=1 // pred_fallthru
      _
    // Predicated region
    $region70: #{multimodal_forward.6} parent=1 // pred_check
      _
    $region71: #{multimodal_forward.6} parent=1 // pred_check_branch
      %76 = sbr.rel (0) target = $region73
    $region72: #{multimodal_forward.6} parent=1 // pred_region
      _
    $region73: #{multimodal_forward.6} parent=1 // pred_fallthru
      _
    // Predicated region
    $region74: #{multimodal_forward.6} parent=1 // pred_check
      _
    $region75: #{multimodal_forward.6} parent=1 // pred_check_branch
      %78 = sbr.rel (0) target = $region77
    $region76: #{multimodal_forward.6} parent=1 // pred_region
      _
    $region77: #{multimodal_forward.6} parent=1 // pred_fallthru
      _
    // Predicated region
    $region78: #{multimodal_forward.6} parent=1 // pred_check
      _
    $region79: #{multimodal_forward.6} parent=1 // pred_check_branch
      %80 = sbr.rel (0) target = $region81
    $region80: #{multimodal_forward.6} parent=1 // pred_region
      _
    $region81: #{multimodal_forward.6} parent=1 // pred_fallthru
      _
    // Predicated region
    $region82: #{multimodal_forward.6} parent=1 // pred_check
      _
    $region83: #{multimodal_forward.6} parent=1 // pred_check_branch
      %82 = sbr.rel (0) target = $region85
    $region84: #{multimodal_forward.6} parent=1 // pred_region
      _
    $region85: #{multimodal_forward.6} parent=1 // pred_fallthru
      _
    // Predicated region
    $region86: #{multimodal_forward.6} parent=1 // pred_check
      _
    $region87: #{multimodal_forward.6} parent=1 // pred_check_branch
      %84 = sbr.rel (0) target = $region89
    $region88: #{multimodal_forward.6} parent=1 // pred_region
      %86 = vsyncadd [#allocation6], 0
      %s88 = sshll.u32 %s21, 4
      %s89 = int_to_ptr.vmem [resolvable:$true] %s88
      %91 = dma.vmem_to_smem %s89, 64, [#allocation4], [#allocation6]
    $region89: #{multimodal_forward.6} parent=1 // pred_fallthru
      _
    // Predicated region
    $region90: #{multimodal_forward.6} parent=1 // pred_check
      _
    $region91: #{multimodal_forward.6} parent=1 // pred_check_branch
      %93 = sbr.rel (0) target = $region93
    $region92: #{multimodal_forward.6} parent=1 // pred_region
      %95 = vsyncadd [#allocation8], 0
      %s97 = sshll.u32 %s22, 4
      %s98 = int_to_ptr.vmem [resolvable:$true] %s97
      %100 = dma.vmem_to_smem %s98, 16, [#allocation7], [#allocation8]
    $region93: #{multimodal_forward.6} parent=1 // pred_fallthru
      _
    // Predicated region
    $region94: #{multimodal_forward.6} parent=1 // pred_check
      _
    $region95: #{multimodal_forward.6} parent=1 // pred_check_branch
      %102 = sbr.rel (0) target = $region97
    $region96: #{multimodal_forward.6} parent=1 // pred_region
      %104 = vsyncadd [#allocation8], 0
      %s106 = sshll.u32 %s23, 4
      %s107 = int_to_ptr.vmem [resolvable:$true] %s106
      %109 = dma.vmem_to_smem %s107, 64, [#allocation9], [#allocation8]
    $region97: #{multimodal_forward.6} parent=1 // pred_fallthru
      _
    // Predicated region
    $region98: #{multimodal_forward.6} parent=1 // pred_check
      _
    $region99: #{multimodal_forward.6} parent=1 // pred_check_branch
      %111 = sbr.rel (0) target = $region101
    $region100: #{multimodal_forward.6} parent=1 // pred_region
      %113 = vsyncadd [#allocation11], 0
      %s115 = sshll.u32 %s24, 4
      %s116 = int_to_ptr.vmem [resolvable:$true] %s115
      %118 = dma.vmem_to_smem %s116, 16, [#allocation10], [#allocation11]
    $region101: #{multimodal_forward.6} parent=1 // pred_fallthru
      _
    // Predicated region
    $region102: #{multimodal_forward.6} parent=1 // pred_check
      _
    $region103: #{multimodal_forward.6} parent=1 // pred_check_branch
      %120 = sbr.rel (0) target = $region105
    $region104: #{multimodal_forward.6} parent=1 // pred_region
      %122 = dma.done [#allocation6], 64
    $region105: #{multimodal_forward.6} parent=1 // pred_fallthru
      _
    // Predicated region
    $region106: #{multimodal_forward.6} parent=1 // pred_check
      _
    $region107: #{multimodal_forward.6} parent=1 // pred_check_branch
      %124 = sbr.rel (0) target = $region109
    $region108: #{multimodal_forward.6} parent=1 // pred_region
      %126 = dma.done [#allocation8], 16
    $region109: #{multimodal_forward.6} parent=1 // pred_fallthru
      _
    // Predicated region
    $region110: #{multimodal_forward.6} parent=1 // pred_check
      _
    $region111: #{multimodal_forward.6} parent=1 // pred_check_branch
      %128 = sbr.rel (0) target = $region113
    $region112: #{multimodal_forward.6} parent=1 // pred_region
      %130 = dma.done [#allocation8], 64
    $region113: #{multimodal_forward.6} parent=1 // pred_fallthru
      _
    // Predicated region
    $region114: #{multimodal_forward.6} parent=1 // pred_check
      _
    $region115: #{multimodal_forward.6} parent=1 // pred_check_branch
      %132 = sbr.rel (0) target = $region117
    $region116: #{multimodal_forward.6} parent=1 // pred_region
      %134 = dma.done [#allocation11], 16
    $region117: #{multimodal_forward.6} parent=1 // pred_fallthru
      _
    %135 = sfence
    %v137 = vld [vmem:[%s0] sm:$0xff]
    %v138 = vpack.c.bf16 %v137, %v137
    %v139 = vld [vmem:[%s2] sm:$0xff]
    %v140 = vpack.c.bf16 %v139, %v139
    %v141 = vld [vmem:[%s1] sm:$0xff]
    %v142 = vld [vmem:[%s3] sm:$0xff]
    %v143 = vpack.c.bf16 %v141, %v141
    %v144 = vpack.c.bf16 %v142, %v142
    %v145 = vld [vmem:[%s4] sm:$0xf]
    %v146 = vld [vmem:[%s4 + $0x4] sm:$0xf]
    %v147 = vld [vmem:[%s4 + $0x8] sm:$0xf]
    %v148 = vld [vmem:[%s4 + $0xc] sm:$0xf]
    %v149 = vld [vmem:[%s4 + $0x10] sm:$0xf]
    %v150 = vld [vmem:[%s4 + $0x14] sm:$0xf]
    %v151 = vld [vmem:[%s4 + $0x18] sm:$0xf]
    %v152 = vld [vmem:[%s4 + $0x1c] sm:$0xf]
    %v153 = vld [vmem:[%s5] sm:$0xf]
    %v154 = vld [vmem:[%s5 + $0x4] sm:$0xf]
    %v155 = vld [vmem:[%s5 + $0x8] sm:$0xf]
    %v156 = vld [vmem:[%s5 + $0xc] sm:$0xf]
    %v157 = vld [vmem:[%s5 + $0x10] sm:$0xf]
    %v158 = vld [vmem:[%s5 + $0x14] sm:$0xf]
    %v159 = vld [vmem:[%s5 + $0x18] sm:$0xf]
    %v160 = vld [vmem:[%s5 + $0x1c] sm:$0xf]
    %v161 = vld [vmem:[%s5 + $0x20] sm:$0xf]
    %v162 = vld [vmem:[%s5 + $0x24] sm:$0xf]
    %v163 = vld [vmem:[%s5 + $0x28] sm:$0xf]
    %v164 = vld [vmem:[%s5 + $0x2c] sm:$0xf]
    %v165 = vld [vmem:[%s5 + $0x30] sm:$0xf]
    %v166 = vld [vmem:[%s5 + $0x34] sm:$0xf]
    %v167 = vld [vmem:[%s5 + $0x38] sm:$0xf]
    %v168 = vld [vmem:[%s5 + $0x3c] sm:$0xf]
    %v169 = vld [vmem:[%s6] sm:$0x1]
    %v170 = vld [vmem:[%s7] sm:$0xf]
    %v171 = vld [vmem:[%s7 + $0x4] sm:$0xf]
    %v172 = vld [vmem:[%s7 + $0x8] sm:$0xf]
    %v173 = vld [vmem:[%s7 + $0xc] sm:$0xf]
    %v174 = vld [vmem:[%s7 + $0x10] sm:$0xf]
    %v175 = vld [vmem:[%s7 + $0x14] sm:$0xf]
    %v176 = vld [vmem:[%s7 + $0x18] sm:$0xf]
    %v177 = vld [vmem:[%s7 + $0x1c] sm:$0xf]
    %v178 = vld [vmem:[%s8] sm:$0x1]
    %v195 = vunpack.c.l.b16 %v153
    %v196 = vunpack.c.l.b16 %v154
    %v197 = vunpack.c.l.b16 %v155
    %v198 = vunpack.c.l.b16 %v156
    %v199 = vunpack.c.l.b16 %v157
    %v200 = vunpack.c.l.b16 %v158
    %v201 = vunpack.c.l.b16 %v159
    %v202 = vunpack.c.l.b16 %v160
    %v203 = vunpack.c.l.b16 %v161
    %v204 = vunpack.c.l.b16 %v162
    %v205 = vunpack.c.l.b16 %v163
    %v206 = vunpack.c.l.b16 %v164
    %v207 = vunpack.c.l.b16 %v165
    %v208 = vunpack.c.l.b16 %v166
    %v209 = vunpack.c.l.b16 %v167
    %v210 = vunpack.c.l.b16 %v168
    %v211 = vpack.c.b16 %v196, %v195
    %v212 = vpack.c.b16 %v198, %v197
    %v213 = vpack.c.b16 %v200, %v199
    %v214 = vpack.c.b16 %v202, %v201
    %v215 = vpack.c.b16 %v204, %v203
    %v216 = vpack.c.b16 %v206, %v205
    %v217 = vpack.c.b16 %v208, %v207
    %v218 = vpack.c.b16 %v210, %v209
    %227 = vmatpush.bf16.msra.mxu0 %v218
    %228 = vmatpush.bf16.msra.mxu0 %v217
    %229 = vmatpush.bf16.msra.mxu0 %v216
    %230 = vmatpush.bf16.msra.mxu0 %v215
    %231 = vmatpush.bf16.msra.mxu0 %v214
    %232 = vmatpush.bf16.msra.mxu0 %v213
    %233 = vmatpush.bf16.msra.mxu0 %v212
    %234 = vmatpush.bf16.msra.mxu0 %v211
    %235 = vmatmul.bf16.gmra.mxu0 %v143
    %v236 = vpop.f32.mrf.mxu0
    %v237 = vadd.f32 0.0, %v236
    %v238 = vpop.f32.mrf.mxu0
    %239 = vdwg.mxu0
    %v248 = vunpack.c.l.b16 %v145
    %v249 = vunpack.c.l.b16 %v146
    %v250 = vunpack.c.l.b16 %v147
    %v251 = vunpack.c.l.b16 %v148
    %v252 = vunpack.c.l.b16 %v149
    %v253 = vunpack.c.l.b16 %v150
    %v254 = vunpack.c.l.b16 %v151
    %v255 = vunpack.c.l.b16 %v152
    %v256 = vpack.c.b16 %v249, %v248
    %v257 = vpack.c.b16 %v251, %v250
    %v258 = vpack.c.b16 %v253, %v252
    %v259 = vpack.c.b16 %v255, %v254
    %vm264 = vcmask 523264
    %v266 = vsel %vm264, %v138, 0
    %268 = vmatpush.bf16.msra.mxu0 0
    %269 = vmatpush.bf16.msra.mxu0 0
    %270 = vmatpush.bf16.msra.mxu0 0
    %271 = vmatpush.bf16.msra.mxu0 0
    %272 = vmatpush.bf16.msra.mxu0 %v259
    %273 = vmatpush.bf16.msra.mxu0 %v258
    %274 = vmatpush.bf16.msra.mxu0 %v257
    %275 = vmatpush.bf16.msra.mxu0 %v256
    %276 = vmatmul.bf16.gmra.mxu0 %v266
    %v277 = vpop.f32.mrf.mxu0
    %v278 = vadd.f32 %v237, %v277
    %v279 = vpop.f32.mrf.mxu0
    %280 = vdwg.mxu0
    %v282 = vperm.slane %v169, 0
    %v284 = vadd.f32 %v278, %v282
    %v285 = vmax.f32 %v284, 0.0
    %v286 = vpack.c.bf16 %v285, %v285
    %v288 = vperm.slane %v178, 0
    %v298 = vunpack.c.l.b16 %v170
    %v299 = vunpack.c.l.b16 %v171
    %v300 = vunpack.c.l.b16 %v172
    %v301 = vunpack.c.l.b16 %v173
    %v302 = vunpack.c.l.b16 %v174
    %v303 = vunpack.c.l.b16 %v175
    %v304 = vunpack.c.l.b16 %v176
    %v305 = vunpack.c.l.b16 %v177
    %v306 = vpack.c.b16 %v299, %v298
    %v307 = vpack.c.b16 %v301, %v300
    %v308 = vpack.c.b16 %v303, %v302
    %v309 = vpack.c.b16 %v305, %v304
    %v315 = vsel %vm264, %v286, 0
    %317 = vmatpush.bf16.msra.mxu0 0
    %318 = vmatpush.bf16.msra.mxu0 0
    %319 = vmatpush.bf16.msra.mxu0 0
    %320 = vmatpush.bf16.msra.mxu0 0
    %321 = vmatpush.bf16.msra.mxu0 %v309
    %322 = vmatpush.bf16.msra.mxu0 %v308
    %323 = vmatpush.bf16.msra.mxu0 %v307
    %324 = vmatpush.bf16.msra.mxu0 %v306
    %325 = vmatmul.bf16.gmra.mxu0 %v315
    %v326 = vpop.f32.mrf.mxu0
    %v327 = vadd.f32 %v288, %v326
    %v328 = vpop.f32.mrf.mxu0
    %329 = vdwg.mxu0
    %v330 = vmax.f32 %v327, 0.0
    %v331 = vld [vmem:[%s9] sm:$0xf]
    %v332 = vld [vmem:[%s9 + $0x4] sm:$0xf]
    %v333 = vld [vmem:[%s9 + $0x8] sm:$0xf]
    %v334 = vld [vmem:[%s9 + $0xc] sm:$0xf]
    %v335 = vld [vmem:[%s9 + $0x10] sm:$0xf]
    %v336 = vld [vmem:[%s9 + $0x14] sm:$0xf]
    %v337 = vld [vmem:[%s9 + $0x18] sm:$0xf]
    %v338 = vld [vmem:[%s9 + $0x1c] sm:$0xf]
    %v339 = vld [vmem:[%s10] sm:$0xf]
    %v340 = vld [vmem:[%s10 + $0x4] sm:$0xf]
    %v341 = vld [vmem:[%s10 + $0x8] sm:$0xf]
    %v342 = vld [vmem:[%s10 + $0xc] sm:$0xf]
    %v343 = vld [vmem:[%s10 + $0x10] sm:$0xf]
    %v344 = vld [vmem:[%s10 + $0x14] sm:$0xf]
    %v345 = vld [vmem:[%s10 + $0x18] sm:$0xf]
    %v346 = vld [vmem:[%s10 + $0x1c] sm:$0xf]
    %v347 = vld [vmem:[%s10 + $0x20] sm:$0xf]
    %v348 = vld [vmem:[%s10 + $0x24] sm:$0xf]
    %v349 = vld [vmem:[%s10 + $0x28] sm:$0xf]
    %v350 = vld [vmem:[%s10 + $0x2c] sm:$0xf]
    %v351 = vld [vmem:[%s10 + $0x30] sm:$0xf]
    %v352 = vld [vmem:[%s10 + $0x34] sm:$0xf]
    %v353 = vld [vmem:[%s10 + $0x38] sm:$0xf]
    %v354 = vld [vmem:[%s10 + $0x3c] sm:$0xf]
    %v355 = vld [vmem:[%s11] sm:$0x1]
    %v356 = vld [vmem:[%s12] sm:$0xf]
    %v357 = vld [vmem:[%s12 + $0x4] sm:$0xf]
    %v358 = vld [vmem:[%s12 + $0x8] sm:$0xf]
    %v359 = vld [vmem:[%s12 + $0xc] sm:$0xf]
    %v360 = vld [vmem:[%s12 + $0x10] sm:$0xf]
    %v361 = vld [vmem:[%s12 + $0x14] sm:$0xf]
    %v362 = vld [vmem:[%s12 + $0x18] sm:$0xf]
    %v363 = vld [vmem:[%s12 + $0x1c] sm:$0xf]
    %v364 = vld [vmem:[%s13] sm:$0x1]
    %v381 = vunpack.c.l.b16 %v339
    %v382 = vunpack.c.l.b16 %v340
    %v383 = vunpack.c.l.b16 %v341
    %v384 = vunpack.c.l.b16 %v342
    %v385 = vunpack.c.l.b16 %v343
    %v386 = vunpack.c.l.b16 %v344
    %v387 = vunpack.c.l.b16 %v345
    %v388 = vunpack.c.l.b16 %v346
    %v389 = vunpack.c.l.b16 %v347
    %v390 = vunpack.c.l.b16 %v348
    %v391 = vunpack.c.l.b16 %v349
    %v392 = vunpack.c.l.b16 %v350
    %v393 = vunpack.c.l.b16 %v351
    %v394 = vunpack.c.l.b16 %v352
    %v395 = vunpack.c.l.b16 %v353
    %v396 = vunpack.c.l.b16 %v354
    %v397 = vpack.c.b16 %v382, %v381
    %v398 = vpack.c.b16 %v384, %v383
    %v399 = vpack.c.b16 %v386, %v385
    %v400 = vpack.c.b16 %v388, %v387
    %v401 = vpack.c.b16 %v390, %v389
    %v402 = vpack.c.b16 %v392, %v391
    %v403 = vpack.c.b16 %v394, %v393
    %v404 = vpack.c.b16 %v396, %v395
    %413 = vmatpush.bf16.msra.mxu0 %v404
    %414 = vmatpush.bf16.msra.mxu0 %v403
    %415 = vmatpush.bf16.msra.mxu0 %v402
    %416 = vmatpush.bf16.msra.mxu0 %v401
    %417 = vmatpush.bf16.msra.mxu0 %v400
    %418 = vmatpush.bf16.msra.mxu0 %v399
    %419 = vmatpush.bf16.msra.mxu0 %v398
    %420 = vmatpush.bf16.msra.mxu0 %v397
    %421 = vmatmul.bf16.gmra.mxu0 %v144
    %v422 = vpop.f32.mrf.mxu0
    %v423 = vadd.f32 0.0, %v422
    %v424 = vpop.f32.mrf.mxu0
    %425 = vdwg.mxu0
    %v434 = vunpack.c.l.b16 %v331
    %v435 = vunpack.c.l.b16 %v332
    %v436 = vunpack.c.l.b16 %v333
    %v437 = vunpack.c.l.b16 %v334
    %v438 = vunpack.c.l.b16 %v335
    %v439 = vunpack.c.l.b16 %v336
    %v440 = vunpack.c.l.b16 %v337
    %v441 = vunpack.c.l.b16 %v338
    %v442 = vpack.c.b16 %v435, %v434
    %v443 = vpack.c.b16 %v437, %v436
    %v444 = vpack.c.b16 %v439, %v438
    %v445 = vpack.c.b16 %v441, %v440
    %v451 = vsel %vm264, %v140, 0
    %453 = vmatpush.bf16.msra.mxu0 0
    %454 = vmatpush.bf16.msra.mxu0 0
    %455 = vmatpush.bf16.msra.mxu0 0
    %456 = vmatpush.bf16.msra.mxu0 0
    %457 = vmatpush.bf16.msra.mxu0 %v445
    %458 = vmatpush.bf16.msra.mxu0 %v444
    %459 = vmatpush.bf16.msra.mxu0 %v443
    %460 = vmatpush.bf16.msra.mxu0 %v442
    %461 = vmatmul.bf16.gmra.mxu0 %v451
    %v462 = vpop.f32.mrf.mxu0
    %v463 = vadd.f32 %v423, %v462
    %v464 = vpop.f32.mrf.mxu0
    %465 = vdwg.mxu0
    %v467 = vperm.slane %v355, 0
    %v469 = vadd.f32 %v463, %v467
    %v470 = vmax.f32 %v469, 0.0
    %v471 = vpack.c.bf16 %v470, %v470
    %v473 = vperm.slane %v364, 0
    %v483 = vunpack.c.l.b16 %v356
    %v484 = vunpack.c.l.b16 %v357
    %v485 = vunpack.c.l.b16 %v358
    %v486 = vunpack.c.l.b16 %v359
    %v487 = vunpack.c.l.b16 %v360
    %v488 = vunpack.c.l.b16 %v361
    %v489 = vunpack.c.l.b16 %v362
    %v490 = vunpack.c.l.b16 %v363
    %v491 = vpack.c.b16 %v484, %v483
    %v492 = vpack.c.b16 %v486, %v485
    %v493 = vpack.c.b16 %v488, %v487
    %v494 = vpack.c.b16 %v490, %v489
    %v500 = vsel %vm264, %v471, 0
    %502 = vmatpush.bf16.msra.mxu0 0
    %503 = vmatpush.bf16.msra.mxu0 0
    %504 = vmatpush.bf16.msra.mxu0 0
    %505 = vmatpush.bf16.msra.mxu0 0
    %506 = vmatpush.bf16.msra.mxu0 %v494
    %507 = vmatpush.bf16.msra.mxu0 %v493
    %508 = vmatpush.bf16.msra.mxu0 %v492
    %509 = vmatpush.bf16.msra.mxu0 %v491
    %510 = vmatmul.bf16.gmra.mxu0 %v500
    %v511 = vpop.f32.mrf.mxu0
    %v512 = vadd.f32 %v473, %v511
    %v513 = vpop.f32.mrf.mxu0
    %514 = vdwg.mxu0
    %v515 = vmax.f32 %v512, 0.0
    %v516 = vld [vmem:[%s14] sm:$0xf]
    %v517 = vld [vmem:[%s14 + $0x4] sm:$0xf]
    %v518 = vld [vmem:[%s14 + $0x8] sm:$0xf]
    %v519 = vld [vmem:[%s14 + $0xc] sm:$0xf]
    %v520 = vld [vmem:[%s14 + $0x10] sm:$0xf]
    %v521 = vld [vmem:[%s14 + $0x14] sm:$0xf]
    %v522 = vld [vmem:[%s14 + $0x18] sm:$0xf]
    %v523 = vld [vmem:[%s14 + $0x1c] sm:$0xf]
    %v524 = vld [vmem:[%s14 + $0x20] sm:$0xf]
    %v525 = vld [vmem:[%s14 + $0x24] sm:$0xf]
    %v526 = vld [vmem:[%s14 + $0x28] sm:$0xf]
    %v527 = vld [vmem:[%s14 + $0x2c] sm:$0xf]
    %v528 = vld [vmem:[%s14 + $0x30] sm:$0xf]
    %v529 = vld [vmem:[%s14 + $0x34] sm:$0xf]
    %v530 = vld [vmem:[%s14 + $0x38] sm:$0xf]
    %v531 = vld [vmem:[%s14 + $0x3c] sm:$0xf]
    %v532 = vld [vmem:[%s15] sm:$0xf]
    %v533 = vld [vmem:[%s15 + $0x4] sm:$0xf]
    %v534 = vld [vmem:[%s15 + $0x8] sm:$0xf]
    %v535 = vld [vmem:[%s15 + $0xc] sm:$0xf]
    %v536 = vld [vmem:[%s15 + $0x10] sm:$0xf]
    %v537 = vld [vmem:[%s15 + $0x14] sm:$0xf]
    %v538 = vld [vmem:[%s15 + $0x18] sm:$0xf]
    %v539 = vld [vmem:[%s15 + $0x1c] sm:$0xf]
    %v540 = vld [vmem:[%s15 + $0x20] sm:$0xf]
    %v541 = vld [vmem:[%s15 + $0x24] sm:$0xf]
    %v542 = vld [vmem:[%s15 + $0x28] sm:$0xf]
    %v543 = vld [vmem:[%s15 + $0x2c] sm:$0xf]
    %v544 = vld [vmem:[%s15 + $0x30] sm:$0xf]
    %v545 = vld [vmem:[%s15 + $0x34] sm:$0xf]
    %v546 = vld [vmem:[%s15 + $0x38] sm:$0xf]
    %v547 = vld [vmem:[%s15 + $0x3c] sm:$0xf]
    %v548 = vld [vmem:[%s16] sm:$0x1]
    %v549 = vld [vmem:[%s17] sm:$0xf]
    %v550 = vld [vmem:[%s17 + $0x4] sm:$0xf]
    %v551 = vld [vmem:[%s17 + $0x8] sm:$0xf]
    %v552 = vld [vmem:[%s17 + $0xc] sm:$0xf]
    %v553 = vld [vmem:[%s17 + $0x10] sm:$0xf]
    %v554 = vld [vmem:[%s17 + $0x14] sm:$0xf]
    %v555 = vld [vmem:[%s17 + $0x18] sm:$0xf]
    %v556 = vld [vmem:[%s17 + $0x1c] sm:$0xf]
    %v557 = vld [vmem:[%s18] sm:$0x1]
    %v574 = vunpack.c.l.b16 %v532
    %v575 = vunpack.c.l.b16 %v533
    %v576 = vunpack.c.l.b16 %v534
    %v577 = vunpack.c.l.b16 %v535
    %v578 = vunpack.c.l.b16 %v536
    %v579 = vunpack.c.l.b16 %v537
    %v580 = vunpack.c.l.b16 %v538
    %v581 = vunpack.c.l.b16 %v539
    %v582 = vunpack.c.l.b16 %v540
    %v583 = vunpack.c.l.b16 %v541
    %v584 = vunpack.c.l.b16 %v542
    %v585 = vunpack.c.l.b16 %v543
    %v586 = vunpack.c.l.b16 %v544
    %v587 = vunpack.c.l.b16 %v545
    %v588 = vunpack.c.l.b16 %v546
    %v589 = vunpack.c.l.b16 %v547
    %v590 = vpack.c.b16 %v575, %v574
    %v591 = vpack.c.b16 %v577, %v576
    %v592 = vpack.c.b16 %v579, %v578
    %v593 = vpack.c.b16 %v581, %v580
    %v594 = vpack.c.b16 %v583, %v582
    %v595 = vpack.c.b16 %v585, %v584
    %v596 = vpack.c.b16 %v587, %v586
    %v597 = vpack.c.b16 %v589, %v588
    %606 = vmatpush.bf16.msra.mxu0 %v597
    %607 = vmatpush.bf16.msra.mxu0 %v596
    %608 = vmatpush.bf16.msra.mxu0 %v595
    %609 = vmatpush.bf16.msra.mxu0 %v594
    %610 = vmatpush.bf16.msra.mxu0 %v593
    %611 = vmatpush.bf16.msra.mxu0 %v592
    %612 = vmatpush.bf16.msra.mxu0 %v591
    %613 = vmatpush.bf16.msra.mxu0 %v590
    %614 = vmatmul.bf16.gmra.mxu0 %v144
    %v615 = vpop.f32.mrf.mxu0
    %v616 = vadd.f32 0.0, %v615
    %v617 = vpop.f32.mrf.mxu0
    %618 = vdwg.mxu0
    %v635 = vunpack.c.l.b16 %v516
    %v636 = vunpack.c.l.b16 %v517
    %v637 = vunpack.c.l.b16 %v518
    %v638 = vunpack.c.l.b16 %v519
    %v639 = vunpack.c.l.b16 %v520
    %v640 = vunpack.c.l.b16 %v521
    %v641 = vunpack.c.l.b16 %v522
    %v642 = vunpack.c.l.b16 %v523
    %v643 = vunpack.c.l.b16 %v524
    %v644 = vunpack.c.l.b16 %v525
    %v645 = vunpack.c.l.b16 %v526
    %v646 = vunpack.c.l.b16 %v527
    %v647 = vunpack.c.l.b16 %v528
    %v648 = vunpack.c.l.b16 %v529
    %v649 = vunpack.c.l.b16 %v530
    %v650 = vunpack.c.l.b16 %v531
    %v651 = vpack.c.b16 %v636, %v635
    %v652 = vpack.c.b16 %v638, %v637
    %v653 = vpack.c.b16 %v640, %v639
    %v654 = vpack.c.b16 %v642, %v641
    %v655 = vpack.c.b16 %v644, %v643
    %v656 = vpack.c.b16 %v646, %v645
    %v657 = vpack.c.b16 %v648, %v647
    %v658 = vpack.c.b16 %v650, %v649
    %667 = vmatpush.bf16.msra.mxu0 %v658
    %668 = vmatpush.bf16.msra.mxu0 %v657
    %669 = vmatpush.bf16.msra.mxu0 %v656
    %670 = vmatpush.bf16.msra.mxu0 %v655
    %671 = vmatpush.bf16.msra.mxu0 %v654
    %672 = vmatpush.bf16.msra.mxu0 %v653
    %673 = vmatpush.bf16.msra.mxu0 %v652
    %674 = vmatpush.bf16.msra.mxu0 %v651
    %675 = vmatmul.bf16.gmra.mxu0 %v143
    %v676 = vpop.f32.mrf.mxu0
    %v677 = vadd.f32 %v616, %v676
    %v678 = vpop.f32.mrf.mxu0
    %679 = vdwg.mxu0
    %v681 = vperm.slane %v548, 0
    %v683 = vadd.f32 %v677, %v681
    %v684 = vmax.f32 %v683, 0.0
    %v685 = vpack.c.bf16 %v684, %v684
    %v687 = vperm.slane %v557, 0
    %v697 = vunpack.c.l.b16 %v549
    %v698 = vunpack.c.l.b16 %v550
    %v699 = vunpack.c.l.b16 %v551
    %v700 = vunpack.c.l.b16 %v552
    %v701 = vunpack.c.l.b16 %v553
    %v702 = vunpack.c.l.b16 %v554
    %v703 = vunpack.c.l.b16 %v555
    %v704 = vunpack.c.l.b16 %v556
    %v705 = vpack.c.b16 %v698, %v697
    %v706 = vpack.c.b16 %v700, %v699
    %v707 = vpack.c.b16 %v702, %v701
    %v708 = vpack.c.b16 %v704, %v703
    %v714 = vsel %vm264, %v685, 0
    %716 = vmatpush.bf16.msra.mxu0 0
    %717 = vmatpush.bf16.msra.mxu0 0
    %718 = vmatpush.bf16.msra.mxu0 0
    %719 = vmatpush.bf16.msra.mxu0 0
    %720 = vmatpush.bf16.msra.mxu0 %v708
    %721 = vmatpush.bf16.msra.mxu0 %v707
    %722 = vmatpush.bf16.msra.mxu0 %v706
    %723 = vmatpush.bf16.msra.mxu0 %v705
    %724 = vmatmul.bf16.gmra.mxu0 %v714
    %v725 = vpop.f32.mrf.mxu0
    %v726 = vadd.f32 %v687, %v725
    %v727 = vpop.f32.mrf.mxu0
    %728 = vdwg.mxu0
    %v729 = vmax.f32 %v726, 0.0
    %730 = vst [vmem:[%s26] sm:$0xff] %v515
    %v731 = vmul.f32 %v141, %v142
    %732 = vadd.xlane.f32.xlu0 %v731
    %v733 = vpop.xlane.xlu0 %732
    %v734 = vmul.f32 %v141, %v141
    %735 = vadd.xlane.f32.xlu0 %v734
    %v736 = vpop.xlane.xlu0 %735
    %v737 = vrsqrt.pop %v736
    %v738 = vmul.f32 %v737, %v736
    %v739 = vmul.f32 %v738, %v737
    %v740 = vmul.f32 0.5, %v739
    %v741 = vsub.f32 1.5, %v740
    %v742 = vmul.f32 %v737, %v741
    %v743 = vmul.f32 %v736, %v742
    %vm744 = vcmp.eq.f32.partialorder %v736, inf
    %v745 = vsel %vm744, %v736, %v743
    %vm746 = vcmp.eq.f32.partialorder %v736, 0.0
    %v747 = vand.u32 %v736, 2147483648
    %v748 = vsel %vm746, %v747, %v745
    %v749 = vmul.f32 %v142, %v142
    %750 = vadd.xlane.f32.xlu0 %v749
    %v751 = vpop.xlane.xlu0 %750
    %v752 = vrsqrt.pop %v751
    %v753 = vmul.f32 %v752, %v751
    %v754 = vmul.f32 %v753, %v752
    %v755 = vmul.f32 0.5, %v754
    %v756 = vsub.f32 1.5, %v755
    %v757 = vmul.f32 %v752, %v756
    %v758 = vmul.f32 %v751, %v757
    %vm759 = vcmp.eq.f32.partialorder %v751, inf
    %v760 = vsel %vm759, %v751, %v758
    %vm761 = vcmp.eq.f32.partialorder %v751, 0.0
    %v762 = vand.u32 %v751, 2147483648
    %v763 = vsel %vm761, %v762, %v760
    %v764 = vmul.f32 %v748, %v763
    %v765 = vmax.f32 %v764, 1e-12
    %v766 = vrcp.pop %v765
    %v767 = vmul.f32 %v765, %v766
    %v768 = vsub.f32 1.0, %v767
    %v769 = vmul.f32 %v766, %v768
    %v770 = vadd.f32 %v766, %v769
    %vm771 = vweird.f32 %v765
    %vm772 = vweird.f32 %v766
    %vm773 = vmor %vm771, %vm772
    %v774 = vsel %vm773, %v766, %v770
    %v775 = vand.u32 2147483647, %v765
    %vm776 = vcmp.eq.f32.partialorder %v775, 8.507059e+37
    %v777 = vand.u32 %v765, 2147483648
    %v778 = vor.u32 1.1754944e-38, %v777
    %v779 = vsel %vm776, %v778, %v774
    %v780 = vmul.f32 %v733, %v779
    %s781 = sld [smem:[#allocation2]]
    %v782 = vstv %s781
    %v783 = vmul.f32 %v780, %v782
    %s784 = sld [smem:[#allocation3]]
    %v785 = vstv %s784
    %v786 = vadd.f32 %v783, %v785
    %v787 = vmul.f32 %v729, %v786
    %788 = vst [vmem:[#allocation13] sm:$0xff] %v787
    %789 = vadd.xlane.f32.xlu0 %v330
    %v790 = vpop.xlane.xlu0 %789
    %v791 = vrcp.pop 128.0
    %v792 = vmul.f32 128.0, %v791
    %v793 = vsub.f32 1.0, %v792
    %v794 = vmul.f32 %v791, %v793
    %v795 = vadd.f32 %v791, %v794
    %vm796 = vweird.f32 %v791
    %v797 = vsel %vm796, %v791, %v795
    %v798 = vmul.f32 %v790, %v797
    %799 = vadd.xlane.f32.xlu0 %v515
    %v800 = vpop.xlane.xlu0 %799
    %v801 = vmul.f32 %v800, %v797
    %802 = vadd.xlane.f32.xlu0 %v787
    %v803 = vpop.xlane.xlu0 %802
    %v804 = vmul.f32 %v803, %v797
    %805 = vmax.xlane.f32.xlu0 %v330
    %v806 = vpop.xlane.xlu0 %805
    %807 = vmax.xlane.f32.xlu0 %v515
    %v808 = vpop.xlane.xlu0 %807
    %809 = vmax.xlane.f32.xlu0 %v787
    %v810 = vpop.xlane.xlu0 %809
    %s811 = sld [smem:[#allocation4]]
    %v812 = vstv %s811
    %v813 = vmul.f32 %v798, %v812
    %s814 = sld [smem:[#allocation4 + $0x1]]
    %v815 = vstv %s814
    %v816 = vmul.f32 %v801, %v815
    %v817 = vadd.f32 %v813, %v816
    %s818 = sld [smem:[#allocation4 + $0x2]]
    %v819 = vstv %s818
    %v820 = vmul.f32 %v804, %v819
    %v821 = vadd.f32 %v817, %v820
    %s822 = sld [smem:[#allocation7]]
    %v823 = vstv %s822
    %v824 = vadd.f32 %v821, %v823
    %v825 = vmul.f32 %v824, 0.5
    %v826 = vmul.f32 %v824, 0.044715
    %v827 = vmul.f32 %v826, %v824
    %v828 = vmul.f32 %v827, %v824
    %v829 = vadd.f32 %v824, %v828
    %v830 = vmul.f32 %v829, 0.7978846
    %v831 = vtanh.pop %v830
    %v832 = vadd.f32 %v831, 1.0
    %v833 = vmul.f32 %v825, %v832
    %s834 = sld [smem:[#allocation4 + $0x80]]
    %v835 = vstv %s834
    %v836 = vmul.f32 %v798, %v835
    %s837 = sld [smem:[#allocation4 + $0x81]]
    %v838 = vstv %s837
    %v839 = vmul.f32 %v801, %v838
    %v840 = vadd.f32 %v836, %v839
    %s841 = sld [smem:[#allocation4 + $0x82]]
    %v842 = vstv %s841
    %v843 = vmul.f32 %v804, %v842
    %v844 = vadd.f32 %v840, %v843
    %s845 = sld [smem:[#allocation7 + $0x1]]
    %v846 = vstv %s845
    %v847 = vadd.f32 %v844, %v846
    %v848 = vmul.f32 %v847, 0.5
    %v849 = vmul.f32 %v847, 0.044715
    %v850 = vmul.f32 %v849, %v847
    %v851 = vmul.f32 %v850, %v847
    %v852 = vadd.f32 %v847, %v851
    %v853 = vmul.f32 %v852, 0.7978846
    %v854 = vtanh.pop %v853
    %v855 = vadd.f32 %v854, 1.0
    %v856 = vmul.f32 %v848, %v855
    %s857 = sld [smem:[#allocation4 + $0x100]]
    %v858 = vstv %s857
    %v859 = vmul.f32 %v798, %v858
    %s860 = sld [smem:[#allocation4 + $0x101]]
    %v861 = vstv %s860
    %v862 = vmul.f32 %v801, %v861
    %v863 = vadd.f32 %v859, %v862
    %s864 = sld [smem:[#allocation4 + $0x102]]
    %v865 = vstv %s864
    %v866 = vmul.f32 %v804, %v865
    %v867 = vadd.f32 %v863, %v866
    %s868 = sld [smem:[#allocation7 + $0x2]]
    %v869 = vstv %s868
    %v870 = vadd.f32 %v867, %v869
    %v871 = vmul.f32 %v870, 0.5
    %v872 = vmul.f32 %v870, 0.044715
    %v873 = vmul.f32 %v872, %v870
    %v874 = vmul.f32 %v873, %v870
    %v875 = vadd.f32 %v870, %v874
    %v876 = vmul.f32 %v875, 0.7978846
    %v877 = vtanh.pop %v876
    %v878 = vadd.f32 %v877, 1.0
    %v879 = vmul.f32 %v871, %v878
    %s880 = sld [smem:[#allocation9]]
    %v881 = vstv %s880
    %v882 = vmul.f32 %v833, %v881
    %s883 = sld [smem:[#allocation9 + $0x1]]
    %v884 = vstv %s883
    %v885 = vmul.f32 %v856, %v884
    %v886 = vadd.f32 %v882, %v885
    %s887 = sld [smem:[#allocation9 + $0x2]]
    %v888 = vstv %s887
    %v889 = vmul.f32 %v879, %v888
    %v890 = vadd.f32 %v886, %v889
    %s891 = sld [smem:[#allocation10]]
    %v892 = vstv %s891
    %v893 = vadd.f32 %v890, %v892
    %s894 = sld [smem:[#allocation9 + $0x80]]
    %v895 = vstv %s894
    %v896 = vmul.f32 %v833, %v895
    %s897 = sld [smem:[#allocation9 + $0x81]]
    %v898 = vstv %s897
    %v899 = vmul.f32 %v856, %v898
    %v900 = vadd.f32 %v896, %v899
    %s901 = sld [smem:[#allocation9 + $0x82]]
    %v902 = vstv %s901
    %v903 = vmul.f32 %v879, %v902
    %v904 = vadd.f32 %v900, %v903
    %s905 = sld [smem:[#allocation10 + $0x1]]
    %v906 = vstv %s905
    %v907 = vadd.f32 %v904, %v906
    %s908 = sld [smem:[#allocation9 + $0x100]]
    %v909 = vstv %s908
    %v910 = vmul.f32 %v833, %v909
    %s911 = sld [smem:[#allocation9 + $0x101]]
    %v912 = vstv %s911
    %v913 = vmul.f32 %v856, %v912
    %v914 = vadd.f32 %v910, %v913
    %s915 = sld [smem:[#allocation9 + $0x102]]
    %v916 = vstv %s915
    %v917 = vmul.f32 %v879, %v916
    %v918 = vadd.f32 %v914, %v917
    %s919 = sld [smem:[#allocation10 + $0x2]]
    %v920 = vstv %s919
    %v921 = vadd.f32 %v918, %v920
    %v922 = vmul.f32 %v806, %v812
    %v923 = vmul.f32 %v808, %v815
    %v924 = vadd.f32 %v922, %v923
    %v925 = vmul.f32 %v810, %v819
    %v926 = vadd.f32 %v924, %v925
    %v927 = vadd.f32 %v926, %v823
    %v928 = vmul.f32 %v927, 0.5
    %v929 = vmul.f32 %v927, 0.044715
    %v930 = vmul.f32 %v929, %v927
    %v931 = vmul.f32 %v930, %v927
    %v932 = vadd.f32 %v927, %v931
    %v933 = vmul.f32 %v932, 0.7978846
    %v934 = vtanh.pop %v933
    %v935 = vadd.f32 %v934, 1.0
    %v936 = vmul.f32 %v928, %v935
    %v937 = vmul.f32 %v806, %v835
    %v938 = vmul.f32 %v808, %v838
    %v939 = vadd.f32 %v937, %v938
    %v940 = vmul.f32 %v810, %v842
    %v941 = vadd.f32 %v939, %v940
    %v942 = vadd.f32 %v941, %v846
    %v943 = vmul.f32 %v942, 0.5
    %v944 = vmul.f32 %v942, 0.044715
    %v945 = vmul.f32 %v944, %v942
    %v946 = vmul.f32 %v945, %v942
    %v947 = vadd.f32 %v942, %v946
    %v948 = vmul.f32 %v947, 0.7978846
    %v949 = vtanh.pop %v948
    %v950 = vadd.f32 %v949, 1.0
    %v951 = vmul.f32 %v943, %v950
    %v952 = vmul.f32 %v806, %v858
    %v953 = vmul.f32 %v808, %v861
    %v954 = vadd.f32 %v952, %v953
    %v955 = vmul.f32 %v810, %v865
    %v956 = vadd.f32 %v954, %v955
    %v957 = vadd.f32 %v956, %v869
    %v958 = vmul.f32 %v957, 0.5
    %v959 = vmul.f32 %v957, 0.044715
    %v960 = vmul.f32 %v959, %v957
    %v961 = vmul.f32 %v960, %v957
    %v962 = vadd.f32 %v957, %v961
    %v963 = vmul.f32 %v962, 0.7978846
    %v964 = vtanh.pop %v963
    %v965 = vadd.f32 %v964, 1.0
    %v966 = vmul.f32 %v958, %v965
    %v967 = vmul.f32 %v936, %v881
    %v968 = vmul.f32 %v951, %v884
    %v969 = vadd.f32 %v967, %v968
    %v970 = vmul.f32 %v966, %v888
    %v971 = vadd.f32 %v969, %v970
    %v972 = vadd.f32 %v971, %v892
    %v973 = vmul.f32 %v936, %v895
    %v974 = vmul.f32 %v951, %v898
    %v975 = vadd.f32 %v973, %v974
    %v976 = vmul.f32 %v966, %v902
    %v977 = vadd.f32 %v975, %v976
    %v978 = vadd.f32 %v977, %v906
    %v979 = vmul.f32 %v936, %v909
    %v980 = vmul.f32 %v951, %v912
    %v981 = vadd.f32 %v979, %v980
    %v982 = vmul.f32 %v966, %v916
    %v983 = vadd.f32 %v981, %v982
    %v984 = vadd.f32 %v983, %v920
    %v985 = vadd.f32 %v893, %v972
    %v986 = vsub.f32 0.0, %v985
    %v987 = vmul.f32 %v986, 1.442695
    %v988 = vpow.pop %v987
    %v989 = vadd.f32 %v988, 1.0
    %v990 = vrcp.pop %v989
    %v991 = vmul.f32 %v989, %v990
    %v992 = vsub.f32 1.0, %v991
    %v993 = vmul.f32 %v990, %v992
    %v994 = vadd.f32 %v990, %v993
    %vm995 = vweird.f32 %v989
    %vm996 = vweird.f32 %v990
    %vm997 = vmor %vm995, %vm996
    %v998 = vsel %vm997, %v990, %v994
    %v999 = vand.u32 2147483647, %v989
    %vm1000 = vcmp.eq.f32.partialorder %v999, 8.507059e+37
    %v1001 = vand.u32 %v989, 2147483648
    %v1002 = vor.u32 1.1754944e-38, %v1001
    %v1003 = vsel %vm1000, %v1002, %v998
    %v1004 = vmul.f32 1.0, %v1003
    %v1005 = vmul.f32 %v1004, %v330
    %1006 = vst [vmem:[#allocation15] sm:$0xff] %v1005
    %v1007 = vadd.f32 %v907, %v978
    %v1008 = vsub.f32 0.0, %v1007
    %v1009 = vmul.f32 %v1008, 1.442695
    %v1010 = vpow.pop %v1009
    %v1011 = vadd.f32 %v1010, 1.0
    %v1012 = vrcp.pop %v1011
    %v1013 = vmul.f32 %v1011, %v1012
    %v1014 = vsub.f32 1.0, %v1013
    %v1015 = vmul.f32 %v1012, %v1014
    %v1016 = vadd.f32 %v1012, %v1015
    %vm1017 = vweird.f32 %v1011
    %vm1018 = vweird.f32 %v1012
    %vm1019 = vmor %vm1017, %vm1018
    %v1020 = vsel %vm1019, %v1012, %v1016
    %v1021 = vand.u32 2147483647, %v1011
    %vm1022 = vcmp.eq.f32.partialorder %v1021, 8.507059e+37
    %v1023 = vand.u32 %v1011, 2147483648
    %v1024 = vor.u32 1.1754944e-38, %v1023
    %v1025 = vsel %vm1022, %v1024, %v1020
    %v1026 = vmul.f32 1.0, %v1025
    %v1027 = vmul.f32 %v1026, %v515
    %1028 = vst [vmem:[#allocation15 + $0x8] sm:$0xff] %v1027
    %v1029 = vadd.f32 %v921, %v984
    %v1030 = vsub.f32 0.0, %v1029
    %v1031 = vmul.f32 %v1030, 1.442695
    %v1032 = vpow.pop %v1031
    %v1033 = vadd.f32 %v1032, 1.0
    %v1034 = vrcp.pop %v1033
    %v1035 = vmul.f32 %v1033, %v1034
    %v1036 = vsub.f32 1.0, %v1035
    %v1037 = vmul.f32 %v1034, %v1036
    %v1038 = vadd.f32 %v1034, %v1037
    %vm1039 = vweird.f32 %v1033
    %vm1040 = vweird.f32 %v1034
    %vm1041 = vmor %vm1039, %vm1040
    %v1042 = vsel %vm1041, %v1034, %v1038
    %v1043 = vand.u32 2147483647, %v1033
    %vm1044 = vcmp.eq.f32.partialorder %v1043, 8.507059e+37
    %v1045 = vand.u32 %v1033, 2147483648
    %v1046 = vor.u32 1.1754944e-38, %v1045
    %v1047 = vsel %vm1044, %v1046, %v1042
    %v1048 = vmul.f32 1.0, %v1047
    %v1049 = vmul.f32 %v1048, %v787
    %1050 = vst [vmem:[#allocation15 + $0x10] sm:$0xff] %v1049
    %1051 = vmin.xlane.f32.xlu0 %v330
    %v1052 = vpop.xlane.xlu0 %1051
    %v1053 = vrot.slane %v1052, 4
    %v1054 = vmin.f32 %v1052, %v1053
    %v1055 = vrot.slane %v1054, 2
    %v1056 = vmin.f32 %v1054, %v1055
    %v1057 = vrot.slane %v1056, 1
    %v1058 = vmin.f32 %v1056, %v1057
    %v1059 = vrot.slane %v806, 4
    %v1060 = vmax.f32 %v806, %v1059
    %v1061 = vrot.slane %v1060, 2
    %v1062 = vmax.f32 %v1060, %v1061
    %v1063 = vrot.slane %v1062, 1
    %v1064 = vmax.f32 %v1062, %v1063
    %v1065 = vsub.f32 %v1064, %v1058
    %vm1066 = vcmp.eq.f32.partialorder %v1065, 0.0
    %v1067 = vadd.f32 %v1065, 1e-06
    %v1068 = vsel %vm1066, %v1067, %v1065
    %v1069 = vsub.f32 %v330, %v1058
    %v1070 = vrcp.pop %v1068
    %v1071 = vmul.f32 %v1068, %v1070
    %v1072 = vsub.f32 1.0, %v1071
    %v1073 = vmul.f32 %v1070, %v1072
    %v1074 = vadd.f32 %v1070, %v1073
    %vm1075 = vweird.f32 %v1068
    %vm1076 = vweird.f32 %v1070
    %vm1077 = vmor %vm1075, %vm1076
    %v1078 = vsel %vm1077, %v1070, %v1074
    %v1079 = vand.u32 2147483647, %v1068
    %vm1080 = vcmp.eq.f32.partialorder %v1079, 8.507059e+37
    %v1081 = vand.u32 %v1068, 2147483648
    %v1082 = vor.u32 1.1754944e-38, %v1081
    %v1083 = vsel %vm1080, %v1082, %v1078
    %v1084 = vmul.f32 %v1069, %v1083
    %v1085 = vmul.f32 %v1084, 2.0
    %v1086 = vsub.f32 %v1085, 1.0
    %1087 = vst [vmem:[#allocation12] sm:$0xff] %v1086
    // Predicated region
    $region118: #{multimodal_forward.6} parent=1 // pred_check
      _
    $region119: #{multimodal_forward.6} parent=1 // pred_check_branch
      %1089 = sbr.rel (0) target = $region121
    $region120: #{multimodal_forward.6} parent=1 // pred_region
      %1091 = vsyncadd [#allocation5], 0
      %s1093 = sshll.u32 [#allocation12], 4
      %s1094 = int_to_ptr.vmem [resolvable:$true] %s1093
      %s1095 = sshll.u32 %s25, 4
      %s1096 = int_to_ptr.hbm [resolvable:$true] %s1095
      %1098 = dma.vmem_to_hbm [thread:$0]  %s1094, 128, %s1096, [#allocation5]
    $region121: #{multimodal_forward.6} parent=1 // pred_fallthru
      _
    // Predicated region
    $region122: #{multimodal_forward.6} parent=1 // pred_check
      _
    $region123: #{multimodal_forward.6} parent=1 // pred_check_branch
      %1100 = sbr.rel (0) target = $region125
    $region124: #{multimodal_forward.6} parent=1 // pred_region
      _
    $region125: #{multimodal_forward.6} parent=1 // pred_fallthru
      _
    // Predicated region
    $region126: #{multimodal_forward.6} parent=1 // pred_check
      _
    $region127: #{multimodal_forward.6} parent=1 // pred_check_branch
      %1102 = sbr.rel (0) target = $region129
    $region128: #{multimodal_forward.6} parent=1 // pred_region
      %1104 = vsyncadd [#allocation14], 0
      %s1106 = sshll.u32 [#allocation13], 4
      %s1107 = int_to_ptr.vmem [resolvable:$true] %s1106
      %s1108 = sshll.u32 %s27, 4
      %s1109 = int_to_ptr.hbm [resolvable:$true] %s1108
      %1111 = dma.vmem_to_hbm [thread:$0]  %s1107, 128, %s1109, [#allocation14]
    $region129: #{multimodal_forward.6} parent=1 // pred_fallthru
      _
    // Predicated region
    $region130: #{multimodal_forward.6} parent=1 // pred_check
      _
    $region131: #{multimodal_forward.6} parent=1 // pred_check_branch
      %1113 = sbr.rel (0) target = $region133
    $region132: #{multimodal_forward.6} parent=1 // pred_region
      %1115 = vsyncadd [#allocation14], 0
      %s1117 = sshll.u32 [#allocation15], 4
      %s1118 = int_to_ptr.vmem [resolvable:$true] %s1117
      %s1119 = sshll.u32 %s28, 4
      %s1120 = int_to_ptr.hbm [resolvable:$true] %s1119
      %1122 = dma.vmem_to_hbm [thread:$0]  %s1118, 384, %s1120, [#allocation14]
    $region133: #{multimodal_forward.6} parent=1 // pred_fallthru
      _
    // Predicated region
    $region134: #{multimodal_forward.6} parent=1 // pred_check
      _
    $region135: #{multimodal_forward.6} parent=1 // pred_check_branch
      %1124 = sbr.rel (0) target = $region137
    $region136: #{multimodal_forward.6} parent=1 // pred_region
      %1126 = dma.done [#allocation5], 128
    $region137: #{multimodal_forward.6} parent=1 // pred_fallthru
      _
    // Predicated region
    $region138: #{multimodal_forward.6} parent=1 // pred_check
      _
    $region139: #{multimodal_forward.6} parent=1 // pred_check_branch
      %1128 = sbr.rel (0) target = $region141
    $region140: #{multimodal_forward.6} parent=1 // pred_region
      _
    $region141: #{multimodal_forward.6} parent=1 // pred_fallthru
      _
    // Predicated region
    $region142: #{multimodal_forward.6} parent=1 // pred_check
      _
    $region143: #{multimodal_forward.6} parent=1 // pred_check_branch
      %1130 = sbr.rel (0) target = $region145
    $region144: #{multimodal_forward.6} parent=1 // pred_region
      %1132 = dma.done [#allocation14], 128
    $region145: #{multimodal_forward.6} parent=1 // pred_fallthru
      _
    // Predicated region
    $region146: #{multimodal_forward.6} parent=1 // pred_check
      _
    $region147: #{multimodal_forward.6} parent=1 // pred_check_branch
      %1134 = sbr.rel (0) target = $region149
    $region148: #{multimodal_forward.6} parent=1 // pred_region
      %1136 = dma.done [#allocation14], 384
    $region149: #{multimodal_forward.6} parent=1 // pred_fallthru
      _
    %1137 = vsyncpa [#allocation5], 1
    %1138 = vsyncpa [#allocation14], 1
    %1139 = vsyncpa [#allocation6], 1
    %1140 = vsyncpa [#allocation8], 1
    %1141 = vsyncpa [#allocation11], 1

// kernel: multimodal_forward.7
$region0: #{multimodal_forward.7}
  #allocation0 [shape = 'u32[]', space=smem, size = 0x4, offset = 0x4, fixed_abs, tag = 'smem constant byte address 0x4 - core index']
  #allocation1 [shape = 'u32[72,128]{1,0:T(1,128)}', space=vmem, size = 0x9000, scoped, tag = 'internal scratch']
  %s0 = inlined_call_operand.vmem [shape: f32[8,128], index: 0, kind: input, shape index: {}]
  %s1 = inlined_call_operand.vmem [shape: bf16[128,3072], index: 1, kind: input, shape index: {}]
  %s2 = inlined_call_operand.vmem [shape: f32[1,3072], index: 2, kind: input, shape index: {}]
  %s3 = inlined_call_operand.vmem [shape: bf16[8,3072], index: 3, kind: output, shape index: {}]
  %s4 = sld [smem:[#allocation0]]
  $region22: #{multimodal_forward.7} parent=0
    _
  %s6 = ssub.s32 1, %s4
  %s7 = scalar_select 0, %s6, %s4
  // Predicated region
  $region2: #{multimodal_forward.7} parent=0 // pred_check
    _
  $region3: #{multimodal_forward.7} parent=0 // pred_check_branch
    %9 = sbr.rel (0) target = $region5
  $region4: #{multimodal_forward.7} parent=0 // pred_region
    _
  $region5: #{multimodal_forward.7} parent=0 // pred_fallthru
    _
  // Predicated region
  $region6: #{multimodal_forward.7} parent=0 // pred_check
    _
  $region7: #{multimodal_forward.7} parent=0 // pred_check_branch
    %11 = sbr.rel (0) target = $region9
  $region8: #{multimodal_forward.7} parent=0 // pred_region
    _
  $region9: #{multimodal_forward.7} parent=0 // pred_fallthru
    _
  // Predicated region
  $region10: #{multimodal_forward.7} parent=0 // pred_check
    _
  $region11: #{multimodal_forward.7} parent=0 // pred_check_branch
    %13 = sbr.rel (0) target = $region13
  $region12: #{multimodal_forward.7} parent=0 // pred_region
    _
  $region13: #{multimodal_forward.7} parent=0 // pred_fallthru
    _
  %v14 = vld [vmem:[%s0] sm:$0xff]
  %v15 = vpack.c.bf16 %v14, %v14
  %v16 = vld [vmem:[%s1] sm:$0xff]
  %v17 = vld [vmem:[%s1 + $0x8] sm:$0xff]
  %v18 = vld [vmem:[%s1 + $0x10] sm:$0xff]
  %v19 = vld [vmem:[%s1 + $0x18] sm:$0xff]
  %v20 = vld [vmem:[%s1 + $0x20] sm:$0xff]
  %v21 = vld [vmem:[%s1 + $0x28] sm:$0xff]
  %v22 = vld [vmem:[%s1 + $0x30] sm:$0xff]
  %v23 = vld [vmem:[%s1 + $0x38] sm:$0xff]
  %v24 = vld [vmem:[%s1 + $0x40] sm:$0xff]
  %v25 = vld [vmem:[%s1 + $0x48] sm:$0xff]
  %v26 = vld [vmem:[%s1 + $0x50] sm:$0xff]
  %v27 = vld [vmem:[%s1 + $0x58] sm:$0xff]
  %v28 = vld [vmem:[%s1 + $0x60] sm:$0xff]
  %v29 = vld [vmem:[%s1 + $0x68] sm:$0xff]
  %v30 = vld [vmem:[%s1 + $0x70] sm:$0xff]
  %v31 = vld [vmem:[%s1 + $0x78] sm:$0xff]
  %v32 = vld [vmem:[%s1 + $0x80] sm:$0xff]
  %v33 = vld [vmem:[%s1 + $0x88] sm:$0xff]
  %v34 = vld [vmem:[%s1 + $0x90] sm:$0xff]
  %v35 = vld [vmem:[%s1 + $0x98] sm:$0xff]
  %v36 = vld [vmem:[%s1 + $0xa0] sm:$0xff]
  %v37 = vld [vmem:[%s1 + $0xa8] sm:$0xff]
  %v38 = vld [vmem:[%s1 + $0xb0] sm:$0xff]
  %v39 = vld [vmem:[%s1 + $0xb8] sm:$0xff]
  %v40 = vld [vmem:[%s1 + $0xc0] sm:$0xff]
  %v41 = vld [vmem:[%s1 + $0xc8] sm:$0xff]
  %v42 = vld [vmem:[%s1 + $0xd0] sm:$0xff]
  %v43 = vld [vmem:[%s1 + $0xd8] sm:$0xff]
  %v44 = vld [vmem:[%s1 + $0xe0] sm:$0xff]
  %v45 = vld [vmem:[%s1 + $0xe8] sm:$0xff]
  %v46 = vld [vmem:[%s1 + $0xf0] sm:$0xff]
  %v47 = vld [vmem:[%s1 + $0xf8] sm:$0xff]
  %v48 = vld [vmem:[%s1 + $0x100] sm:$0xff]
  %v49 = vld [vmem:[%s1 + $0x108] sm:$0xff]
  %v50 = vld [vmem:[%s1 + $0x110] sm:$0xff]
  %v51 = vld [vmem:[%s1 + $0x118] sm:$0xff]
  %v52 = vld [vmem:[%s1 + $0x120] sm:$0xff]
  %v53 = vld [vmem:[%s1 + $0x128] sm:$0xff]
  %v54 = vld [vmem:[%s1 + $0x130] sm:$0xff]
  %v55 = vld [vmem:[%s1 + $0x138] sm:$0xff]
  %v56 = vld [vmem:[%s1 + $0x140] sm:$0xff]
  %v57 = vld [vmem:[%s1 + $0x148] sm:$0xff]
  %v58 = vld [vmem:[%s1 + $0x150] sm:$0xff]
  %v59 = vld [vmem:[%s1 + $0x158] sm:$0xff]
  %v60 = vld [vmem:[%s1 + $0x160] sm:$0xff]
  %v61 = vld [vmem:[%s1 + $0x168] sm:$0xff]
  %v62 = vld [vmem:[%s1 + $0x170] sm:$0xff]
  %v63 = vld [vmem:[%s1 + $0x178] sm:$0xff]
  %v64 = vld [vmem:[%s1 + $0x180] sm:$0xff]
  %v65 = vld [vmem:[%s1 + $0x188] sm:$0xff]
  %v66 = vld [vmem:[%s1 + $0x190] sm:$0xff]
  %v67 = vld [vmem:[%s1 + $0x198] sm:$0xff]
  %v68 = vld [vmem:[%s1 + $0x1a0] sm:$0xff]
  %v69 = vld [vmem:[%s1 + $0x1a8] sm:$0xff]
  %v70 = vld [vmem:[%s1 + $0x1b0] sm:$0xff]
  %v71 = vld [vmem:[%s1 + $0x1b8] sm:$0xff]
  %v72 = vld [vmem:[%s1 + $0x1c0] sm:$0xff]
  %v73 = vld [vmem:[%s1 + $0x1c8] sm:$0xff]
  %v74 = vld [vmem:[%s1 + $0x1d0] sm:$0xff]
  %v75 = vld [vmem:[%s1 + $0x1d8] sm:$0xff]
  %v76 = vld [vmem:[%s1 + $0x1e0] sm:$0xff]
  %v77 = vld [vmem:[%s1 + $0x1e8] sm:$0xff]
  %v78 = vld [vmem:[%s1 + $0x1f0] sm:$0xff]
  %v79 = vld [vmem:[%s1 + $0x1f8] sm:$0xff]
  %v80 = vld [vmem:[%s1 + $0x200] sm:$0xff]
  %v81 = vld [vmem:[%s1 + $0x208] sm:$0xff]
  %v82 = vld [vmem:[%s1 + $0x210] sm:$0xff]
  %v83 = vld [vmem:[%s1 + $0x218] sm:$0xff]
  %v84 = vld [vmem:[%s1 + $0x220] sm:$0xff]
  %v85 = vld [vmem:[%s1 + $0x228] sm:$0xff]
  %v86 = vld [vmem:[%s1 + $0x230] sm:$0xff]
  %v87 = vld [vmem:[%s1 + $0x238] sm:$0xff]
  %v88 = vld [vmem:[%s1 + $0x240] sm:$0xff]
  %v89 = vld [vmem:[%s1 + $0x248] sm:$0xff]
  %v90 = vld [vmem:[%s1 + $0x250] sm:$0xff]
  %v91 = vld [vmem:[%s1 + $0x258] sm:$0xff]
  %v92 = vld [vmem:[%s1 + $0x260] sm:$0xff]
  %v93 = vld [vmem:[%s1 + $0x268] sm:$0xff]
  %v94 = vld [vmem:[%s1 + $0x270] sm:$0xff]
  %v95 = vld [vmem:[%s1 + $0x278] sm:$0xff]
  %v96 = vld [vmem:[%s1 + $0x280] sm:$0xff]
  %v97 = vld [vmem:[%s1 + $0x288] sm:$0xff]
  %v98 = vld [vmem:[%s1 + $0x290] sm:$0xff]
  %v99 = vld [vmem:[%s1 + $0x298] sm:$0xff]
  %v100 = vld [vmem:[%s1 + $0x2a0] sm:$0xff]
  %v101 = vld [vmem:[%s1 + $0x2a8] sm:$0xff]
  %v102 = vld [vmem:[%s1 + $0x2b0] sm:$0xff]
  %v103 = vld [vmem:[%s1 + $0x2b8] sm:$0xff]
  %v104 = vld [vmem:[%s1 + $0x2c0] sm:$0xff]
  %v105 = vld [vmem:[%s1 + $0x2c8] sm:$0xff]
  %v106 = vld [vmem:[%s1 + $0x2d0] sm:$0xff]
  %v107 = vld [vmem:[%s1 + $0x2d8] sm:$0xff]
  %v108 = vld [vmem:[%s1 + $0x2e0] sm:$0xff]
  %v109 = vld [vmem:[%s1 + $0x2e8] sm:$0xff]
  %v110 = vld [vmem:[%s1 + $0x2f0] sm:$0xff]
  %v111 = vld [vmem:[%s1 + $0x2f8] sm:$0xff]
  %v112 = vld [vmem:[%s1 + $0x300] sm:$0xff]
  %v113 = vld [vmem:[%s1 + $0x308] sm:$0xff]
  %v114 = vld [vmem:[%s1 + $0x310] sm:$0xff]
  %v115 = vld [vmem:[%s1 + $0x318] sm:$0xff]
  %v116 = vld [vmem:[%s1 + $0x320] sm:$0xff]
  %v117 = vld [vmem:[%s1 + $0x328] sm:$0xff]
  %v118 = vld [vmem:[%s1 + $0x330] sm:$0xff]
  %v119 = vld [vmem:[%s1 + $0x338] sm:$0xff]
  %v120 = vld [vmem:[%s1 + $0x340] sm:$0xff]
  %v121 = vld [vmem:[%s1 + $0x348] sm:$0xff]
  %v122 = vld [vmem:[%s1 + $0x350] sm:$0xff]
  %v123 = vld [vmem:[%s1 + $0x358] sm:$0xff]
  %v124 = vld [vmem:[%s1 + $0x360] sm:$0xff]
  %v125 = vld [vmem:[%s1 + $0x368] sm:$0xff]
  %v126 = vld [vmem:[%s1 + $0x370] sm:$0xff]
  %v127 = vld [vmem:[%s1 + $0x378] sm:$0xff]
  %v128 = vld [vmem:[%s1 + $0x380] sm:$0xff]
  %v129 = vld [vmem:[%s1 + $0x388] sm:$0xff]
  %v130 = vld [vmem:[%s1 + $0x390] sm:$0xff]
  %v131 = vld [vmem:[%s1 + $0x398] sm:$0xff]
  %v132 = vld [vmem:[%s1 + $0x3a0] sm:$0xff]
  %v133 = vld [vmem:[%s1 + $0x3a8] sm:$0xff]
  %v134 = vld [vmem:[%s1 + $0x3b0] sm:$0xff]
  %v135 = vld [vmem:[%s1 + $0x3b8] sm:$0xff]
  %v136 = vld [vmem:[%s1 + $0x3c0] sm:$0xff]
  %v137 = vld [vmem:[%s1 + $0x3c8] sm:$0xff]
  %v138 = vld [vmem:[%s1 + $0x3d0] sm:$0xff]
  %v139 = vld [vmem:[%s1 + $0x3d8] sm:$0xff]
  %v140 = vld [vmem:[%s1 + $0x3e0] sm:$0xff]
  %v141 = vld [vmem:[%s1 + $0x3e8] sm:$0xff]
  %v142 = vld [vmem:[%s1 + $0x3f0] sm:$0xff]
  %v143 = vld [vmem:[%s1 + $0x3f8] sm:$0xff]
  %v144 = vld [vmem:[%s1 + $0x400] sm:$0xff]
  %v145 = vld [vmem:[%s1 + $0x408] sm:$0xff]
  %v146 = vld [vmem:[%s1 + $0x410] sm:$0xff]
  %v147 = vld [vmem:[%s1 + $0x418] sm:$0xff]
  %v148 = vld [vmem:[%s1 + $0x420] sm:$0xff]
  %v149 = vld [vmem:[%s1 + $0x428] sm:$0xff]
  %v150 = vld [vmem:[%s1 + $0x430] sm:$0xff]
  %v151 = vld [vmem:[%s1 + $0x438] sm:$0xff]
  %v152 = vld [vmem:[%s1 + $0x440] sm:$0xff]
  %v153 = vld [vmem:[%s1 + $0x448] sm:$0xff]
  %v154 = vld [vmem:[%s1 + $0x450] sm:$0xff]
  %v155 = vld [vmem:[%s1 + $0x458] sm:$0xff]
  %v156 = vld [vmem:[%s1 + $0x460] sm:$0xff]
  %v157 = vld [vmem:[%s1 + $0x468] sm:$0xff]
  %v158 = vld [vmem:[%s1 + $0x470] sm:$0xff]
  %v159 = vld [vmem:[%s1 + $0x478] sm:$0xff]
  %v160 = vld [vmem:[%s1 + $0x480] sm:$0xff]
  %v161 = vld [vmem:[%s1 + $0x488] sm:$0xff]
  %v162 = vld [vmem:[%s1 + $0x490] sm:$0xff]
  %v163 = vld [vmem:[%s1 + $0x498] sm:$0xff]
  %v164 = vld [vmem:[%s1 + $0x4a0] sm:$0xff]
  %v165 = vld [vmem:[%s1 + $0x4a8] sm:$0xff]
  %v166 = vld [vmem:[%s1 + $0x4b0] sm:$0xff]
  %v167 = vld [vmem:[%s1 + $0x4b8] sm:$0xff]
  %v168 = vld [vmem:[%s1 + $0x4c0] sm:$0xff]
  %v169 = vld [vmem:[%s1 + $0x4c8] sm:$0xff]
  %v170 = vld [vmem:[%s1 + $0x4d0] sm:$0xff]
  %v171 = vld [vmem:[%s1 + $0x4d8] sm:$0xff]
  %v172 = vld [vmem:[%s1 + $0x4e0] sm:$0xff]
  %v173 = vld [vmem:[%s1 + $0x4e8] sm:$0xff]
  %v174 = vld [vmem:[%s1 + $0x4f0] sm:$0xff]
  %v175 = vld [vmem:[%s1 + $0x4f8] sm:$0xff]
  %v176 = vld [vmem:[%s1 + $0x500] sm:$0xff]
  %v177 = vld [vmem:[%s1 + $0x508] sm:$0xff]
  %v178 = vld [vmem:[%s1 + $0x510] sm:$0xff]
  %v179 = vld [vmem:[%s1 + $0x518] sm:$0xff]
  %v180 = vld [vmem:[%s1 + $0x520] sm:$0xff]
  %v181 = vld [vmem:[%s1 + $0x528] sm:$0xff]
  %v182 = vld [vmem:[%s1 + $0x530] sm:$0xff]
  %v183 = vld [vmem:[%s1 + $0x538] sm:$0xff]
  %v184 = vld [vmem:[%s1 + $0x540] sm:$0xff]
  %v185 = vld [vmem:[%s1 + $0x548] sm:$0xff]
  %v186 = vld [vmem:[%s1 + $0x550] sm:$0xff]
  %v187 = vld [vmem:[%s1 + $0x558] sm:$0xff]
  %v188 = vld [vmem:[%s1 + $0x560] sm:$0xff]
  %v189 = vld [vmem:[%s1 + $0x568] sm:$0xff]
  %v190 = vld [vmem:[%s1 + $0x570] sm:$0xff]
  %v191 = vld [vmem:[%s1 + $0x578] sm:$0xff]
  %v192 = vld [vmem:[%s1 + $0x580] sm:$0xff]
  %v193 = vld [vmem:[%s1 + $0x588] sm:$0xff]
  %v194 = vld [vmem:[%s1 + $0x590] sm:$0xff]
  %v195 = vld [vmem:[%s1 + $0x598] sm:$0xff]
  %v196 = vld [vmem:[%s1 + $0x5a0] sm:$0xff]
  %v197 = vld [vmem:[%s1 + $0x5a8] sm:$0xff]
  %v198 = vld [vmem:[%s1 + $0x5b0] sm:$0xff]
  %v199 = vld [vmem:[%s1 + $0x5b8] sm:$0xff]
  %v200 = vld [vmem:[%s1 + $0x5c0] sm:$0xff]
  %v201 = vld [vmem:[%s1 + $0x5c8] sm:$0xff]
  %v202 = vld [vmem:[%s1 + $0x5d0] sm:$0xff]
  %v203 = vld [vmem:[%s1 + $0x5d8] sm:$0xff]
  %v204 = vld [vmem:[%s1 + $0x5e0] sm:$0xff]
  %v205 = vld [vmem:[%s1 + $0x5e8] sm:$0xff]
  %v206 = vld [vmem:[%s1 + $0x5f0] sm:$0xff]
  %v207 = vld [vmem:[%s1 + $0x5f8] sm:$0xff]
  %v208 = vld [vmem:[%s2] sm:$0xff]
  %v209 = vld [vmem:[%s2 + $0x8] sm:$0xff]
  %v210 = vld [vmem:[%s2 + $0x10] sm:$0xff]
  %v214 = vperm.slane %v208, 0
  %v215 = vperm.slane %v208, 1
  %v216 = vperm.slane %v208, 2
  %v217 = vperm.slane %v208, 3
  %v218 = vperm.slane %v208, 4
  %v219 = vperm.slane %v208, 5
  %v220 = vperm.slane %v208, 6
  %v221 = vperm.slane %v208, 7
  %v222 = vperm.slane %v209, 0
  %v223 = vperm.slane %v209, 1
  %v224 = vperm.slane %v209, 2
  %v225 = vperm.slane %v209, 3
  %v226 = vperm.slane %v209, 4
  %v227 = vperm.slane %v209, 5
  %v228 = vperm.slane %v209, 6
  %v229 = vperm.slane %v209, 7
  %v230 = vperm.slane %v210, 0
  %v231 = vperm.slane %v210, 1
  %v232 = vperm.slane %v210, 2
  %v233 = vperm.slane %v210, 3
  %v234 = vperm.slane %v210, 4
  %v235 = vperm.slane %v210, 5
  %v236 = vperm.slane %v210, 6
  %v237 = vperm.slane %v210, 7
  %v454 = vunpack.c.l.b16 %v16
  %v455 = vunpack.c.h.b16 %v16
  %v456 = vunpack.c.l.b16 %v17
  %v457 = vunpack.c.h.b16 %v17
  %v458 = vunpack.c.l.b16 %v18
  %v459 = vunpack.c.h.b16 %v18
  %v460 = vunpack.c.l.b16 %v19
  %v461 = vunpack.c.h.b16 %v19
  %v462 = vunpack.c.l.b16 %v20
  %v463 = vunpack.c.h.b16 %v20
  %v464 = vunpack.c.l.b16 %v21
  %v465 = vunpack.c.h.b16 %v21
  %v466 = vunpack.c.l.b16 %v22
  %v467 = vunpack.c.h.b16 %v22
  %v468 = vunpack.c.l.b16 %v23
  %v469 = vunpack.c.h.b16 %v23
  %v470 = vunpack.c.l.b16 %v24
  %v471 = vunpack.c.h.b16 %v24
  %v472 = vunpack.c.l.b16 %v25
  %v473 = vunpack.c.h.b16 %v25
  %v474 = vunpack.c.l.b16 %v26
  %v475 = vunpack.c.h.b16 %v26
  %v476 = vunpack.c.l.b16 %v27
  %v477 = vunpack.c.h.b16 %v27
  %v478 = vunpack.c.l.b16 %v28
  %v479 = vunpack.c.h.b16 %v28
  %v480 = vunpack.c.l.b16 %v29
  %v481 = vunpack.c.h.b16 %v29
  %v482 = vunpack.c.l.b16 %v30
  %v483 = vunpack.c.h.b16 %v30
  %v484 = vunpack.c.l.b16 %v31
  %v485 = vunpack.c.h.b16 %v31
  %v486 = vunpack.c.l.b16 %v32
  %v487 = vunpack.c.h.b16 %v32
  %v488 = vunpack.c.l.b16 %v33
  %v489 = vunpack.c.h.b16 %v33
  %v490 = vunpack.c.l.b16 %v34
  %v491 = vunpack.c.h.b16 %v34
  %v492 = vunpack.c.l.b16 %v35
  %v493 = vunpack.c.h.b16 %v35
  %v494 = vunpack.c.l.b16 %v36
  %v495 = vunpack.c.h.b16 %v36
  %v496 = vunpack.c.l.b16 %v37
  %v497 = vunpack.c.h.b16 %v37
  %v498 = vunpack.c.l.b16 %v38
  %v499 = vunpack.c.h.b16 %v38
  %v500 = vunpack.c.l.b16 %v39
  %v501 = vunpack.c.h.b16 %v39
  %v502 = vunpack.c.l.b16 %v40
  %v503 = vunpack.c.h.b16 %v40
  %v504 = vunpack.c.l.b16 %v41
  %v505 = vunpack.c.h.b16 %v41
  %v506 = vunpack.c.l.b16 %v42
  %v507 = vunpack.c.h.b16 %v42
  %v508 = vunpack.c.l.b16 %v43
  %v509 = vunpack.c.h.b16 %v43
  %v510 = vunpack.c.l.b16 %v44
  %v511 = vunpack.c.h.b16 %v44
  %v512 = vunpack.c.l.b16 %v45
  %v513 = vunpack.c.h.b16 %v45
  %v514 = vunpack.c.l.b16 %v46
  %v515 = vunpack.c.h.b16 %v46
  %v516 = vunpack.c.l.b16 %v47
  %v517 = vunpack.c.h.b16 %v47
  %v518 = vunpack.c.l.b16 %v48
  %v519 = vunpack.c.h.b16 %v48
  %v520 = vunpack.c.l.b16 %v49
  %v521 = vunpack.c.h.b16 %v49
  %v522 = vunpack.c.l.b16 %v50
  %v523 = vunpack.c.h.b16 %v50
  %v524 = vunpack.c.l.b16 %v51
  %v525 = vunpack.c.h.b16 %v51
  %v526 = vunpack.c.l.b16 %v52
  %v527 = vunpack.c.h.b16 %v52
  %v528 = vunpack.c.l.b16 %v53
  %v529 = vunpack.c.h.b16 %v53
  %v530 = vunpack.c.l.b16 %v54
  %v531 = vunpack.c.h.b16 %v54
  %v532 = vunpack.c.l.b16 %v55
  %v533 = vunpack.c.h.b16 %v55
  %v534 = vunpack.c.l.b16 %v56
  %v535 = vunpack.c.h.b16 %v56
  %v536 = vunpack.c.l.b16 %v57
  %v537 = vunpack.c.h.b16 %v57
  %v538 = vunpack.c.l.b16 %v58
  %v539 = vunpack.c.h.b16 %v58
  %v540 = vunpack.c.l.b16 %v59
  %v541 = vunpack.c.h.b16 %v59
  %v542 = vunpack.c.l.b16 %v60
  %v543 = vunpack.c.h.b16 %v60
  %v544 = vunpack.c.l.b16 %v61
  %v545 = vunpack.c.h.b16 %v61
  %v546 = vunpack.c.l.b16 %v62
  %v547 = vunpack.c.h.b16 %v62
  %v548 = vunpack.c.l.b16 %v63
  %v549 = vunpack.c.h.b16 %v63
  %v550 = vunpack.c.l.b16 %v64
  %v551 = vunpack.c.h.b16 %v64
  %v552 = vunpack.c.l.b16 %v65
  %v553 = vunpack.c.h.b16 %v65
  %v554 = vunpack.c.l.b16 %v66
  %v555 = vunpack.c.h.b16 %v66
  %v556 = vunpack.c.l.b16 %v67
  %v557 = vunpack.c.h.b16 %v67
  %v558 = vunpack.c.l.b16 %v68
  %v559 = vunpack.c.h.b16 %v68
  %v560 = vunpack.c.l.b16 %v69
  %v561 = vunpack.c.h.b16 %v69
  %v562 = vunpack.c.l.b16 %v70
  %v563 = vunpack.c.h.b16 %v70
  %v564 = vunpack.c.l.b16 %v71
  %v565 = vunpack.c.h.b16 %v71
  %v566 = vunpack.c.l.b16 %v72
  %v567 = vunpack.c.h.b16 %v72
  %v568 = vunpack.c.l.b16 %v73
  %v569 = vunpack.c.h.b16 %v73
  %v570 = vunpack.c.l.b16 %v74
  %v571 = vunpack.c.h.b16 %v74
  %v572 = vunpack.c.l.b16 %v75
  %v573 = vunpack.c.h.b16 %v75
  %v574 = vunpack.c.l.b16 %v76
  %v575 = vunpack.c.h.b16 %v76
  %v576 = vunpack.c.l.b16 %v77
  %v577 = vunpack.c.h.b16 %v77
  %v578 = vunpack.c.l.b16 %v78
  %v579 = vunpack.c.h.b16 %v78
  %v580 = vunpack.c.l.b16 %v79
  %v581 = vunpack.c.h.b16 %v79
  %v582 = vunpack.c.l.b16 %v80
  %v583 = vunpack.c.h.b16 %v80
  %v584 = vunpack.c.l.b16 %v81
  %v585 = vunpack.c.h.b16 %v81
  %v586 = vunpack.c.l.b16 %v82
  %v587 = vunpack.c.h.b16 %v82
  %v588 = vunpack.c.l.b16 %v83
  %v589 = vunpack.c.h.b16 %v83
  %v590 = vunpack.c.l.b16 %v84
  %v591 = vunpack.c.h.b16 %v84
  %v592 = vunpack.c.l.b16 %v85
  %v593 = vunpack.c.h.b16 %v85
  %v594 = vunpack.c.l.b16 %v86
  %v595 = vunpack.c.h.b16 %v86
  %v596 = vunpack.c.l.b16 %v87
  %v597 = vunpack.c.h.b16 %v87
  %v598 = vunpack.c.l.b16 %v88
  %v599 = vunpack.c.h.b16 %v88
  %v600 = vunpack.c.l.b16 %v89
  %v601 = vunpack.c.h.b16 %v89
  %v602 = vunpack.c.l.b16 %v90
  %v603 = vunpack.c.h.b16 %v90
  %v604 = vunpack.c.l.b16 %v91
  %v605 = vunpack.c.h.b16 %v91
  %v606 = vunpack.c.l.b16 %v92
  %v607 = vunpack.c.h.b16 %v92
  %v608 = vunpack.c.l.b16 %v93
  %v609 = vunpack.c.h.b16 %v93
  %v610 = vunpack.c.l.b16 %v94
  %v611 = vunpack.c.h.b16 %v94
  %v612 = vunpack.c.l.b16 %v95
  %v613 = vunpack.c.h.b16 %v95
  %v614 = vunpack.c.l.b16 %v96
  %v615 = vunpack.c.h.b16 %v96
  %v616 = vunpack.c.l.b16 %v97
  %v617 = vunpack.c.h.b16 %v97
  %v618 = vunpack.c.l.b16 %v98
  %v619 = vunpack.c.h.b16 %v98
  %v620 = vunpack.c.l.b16 %v99
  %v621 = vunpack.c.h.b16 %v99
  %v622 = vunpack.c.l.b16 %v100
  %v623 = vunpack.c.h.b16 %v100
  %v624 = vunpack.c.l.b16 %v101
  %v625 = vunpack.c.h.b16 %v101
  %v626 = vunpack.c.l.b16 %v102
  %v627 = vunpack.c.h.b16 %v102
  %v628 = vunpack.c.l.b16 %v103
  %v629 = vunpack.c.h.b16 %v103
  %v630 = vunpack.c.l.b16 %v104
  %v631 = vunpack.c.h.b16 %v104
  %v632 = vunpack.c.l.b16 %v105
  %v633 = vunpack.c.h.b16 %v105
  %v634 = vunpack.c.l.b16 %v106
  %v635 = vunpack.c.h.b16 %v106
  %v636 = vunpack.c.l.b16 %v107
  %v637 = vunpack.c.h.b16 %v107
  %v638 = vunpack.c.l.b16 %v108
  %v639 = vunpack.c.h.b16 %v108
  %v640 = vunpack.c.l.b16 %v109
  %v641 = vunpack.c.h.b16 %v109
  %v642 = vunpack.c.l.b16 %v110
  %v643 = vunpack.c.h.b16 %v110
  %v644 = vunpack.c.l.b16 %v111
  %v645 = vunpack.c.h.b16 %v111
  %v646 = vunpack.c.l.b16 %v112
  %v647 = vunpack.c.h.b16 %v112
  %v648 = vunpack.c.l.b16 %v113
  %v649 = vunpack.c.h.b16 %v113
  %v650 = vunpack.c.l.b16 %v114
  %v651 = vunpack.c.h.b16 %v114
  %v652 = vunpack.c.l.b16 %v115
  %v653 = vunpack.c.h.b16 %v115
  %v654 = vunpack.c.l.b16 %v116
  %v655 = vunpack.c.h.b16 %v116
  %v656 = vunpack.c.l.b16 %v117
  %v657 = vunpack.c.h.b16 %v117
  %v658 = vunpack.c.l.b16 %v118
  %v659 = vunpack.c.h.b16 %v118
  %v660 = vunpack.c.l.b16 %v119
  %v661 = vunpack.c.h.b16 %v119
  %v662 = vunpack.c.l.b16 %v120
  %v663 = vunpack.c.h.b16 %v120
  %v664 = vunpack.c.l.b16 %v121
  %v665 = vunpack.c.h.b16 %v121
  %v666 = vunpack.c.l.b16 %v122
  %v667 = vunpack.c.h.b16 %v122
  %v668 = vunpack.c.l.b16 %v123
  %v669 = vunpack.c.h.b16 %v123
  %v670 = vunpack.c.l.b16 %v124
  %v671 = vunpack.c.h.b16 %v124
  %v672 = vunpack.c.l.b16 %v125
  %v673 = vunpack.c.h.b16 %v125
  %v674 = vunpack.c.l.b16 %v126
  %v675 = vunpack.c.h.b16 %v126
  %v676 = vunpack.c.l.b16 %v127
  %v677 = vunpack.c.h.b16 %v127
  %v678 = vunpack.c.l.b16 %v128
  %v679 = vunpack.c.h.b16 %v128
  %v680 = vunpack.c.l.b16 %v129
  %v681 = vunpack.c.h.b16 %v129
  %v682 = vunpack.c.l.b16 %v130
  %v683 = vunpack.c.h.b16 %v130
  %v684 = vunpack.c.l.b16 %v131
  %v685 = vunpack.c.h.b16 %v131
  %v686 = vunpack.c.l.b16 %v132
  %v687 = vunpack.c.h.b16 %v132
  %v688 = vunpack.c.l.b16 %v133
  %v689 = vunpack.c.h.b16 %v133
  %v690 = vunpack.c.l.b16 %v134
  %v691 = vunpack.c.h.b16 %v134
  %v692 = vunpack.c.l.b16 %v135
  %v693 = vunpack.c.h.b16 %v135
  %v694 = vunpack.c.l.b16 %v136
  %v695 = vunpack.c.h.b16 %v136
  %v696 = vunpack.c.l.b16 %v137
  %v697 = vunpack.c.h.b16 %v137
  %v698 = vunpack.c.l.b16 %v138
  %v699 = vunpack.c.h.b16 %v138
  %v700 = vunpack.c.l.b16 %v139
  %v701 = vunpack.c.h.b16 %v139
  %v702 = vunpack.c.l.b16 %v140
  %v703 = vunpack.c.h.b16 %v140
  %v704 = vunpack.c.l.b16 %v141
  %v705 = vunpack.c.h.b16 %v141
  %v706 = vunpack.c.l.b16 %v142
  %v707 = vunpack.c.h.b16 %v142
  %v708 = vunpack.c.l.b16 %v143
  %v709 = vunpack.c.h.b16 %v143
  %v710 = vunpack.c.l.b16 %v144
  %v711 = vunpack.c.h.b16 %v144
  %v712 = vunpack.c.l.b16 %v145
  %v713 = vunpack.c.h.b16 %v145
  %v714 = vunpack.c.l.b16 %v146
  %v715 = vunpack.c.h.b16 %v146
  %v716 = vunpack.c.l.b16 %v147
  %v717 = vunpack.c.h.b16 %v147
  %v718 = vunpack.c.l.b16 %v148
  %v719 = vunpack.c.h.b16 %v148
  %v720 = vunpack.c.l.b16 %v149
  %v721 = vunpack.c.h.b16 %v149
  %v722 = vunpack.c.l.b16 %v150
  %v723 = vunpack.c.h.b16 %v150
  %v724 = vunpack.c.l.b16 %v151
  %v725 = vunpack.c.h.b16 %v151
  %v726 = vunpack.c.l.b16 %v152
  %v727 = vunpack.c.h.b16 %v152
  %v728 = vunpack.c.l.b16 %v153
  %v729 = vunpack.c.h.b16 %v153
  %v730 = vunpack.c.l.b16 %v154
  %v731 = vunpack.c.h.b16 %v154
  %v732 = vunpack.c.l.b16 %v155
  %v733 = vunpack.c.h.b16 %v155
  %v734 = vunpack.c.l.b16 %v156
  %v735 = vunpack.c.h.b16 %v156
  %v736 = vunpack.c.l.b16 %v157
  %v737 = vunpack.c.h.b16 %v157
  %v738 = vunpack.c.l.b16 %v158
  %v739 = vunpack.c.h.b16 %v158
  %v740 = vunpack.c.l.b16 %v159
  %v741 = vunpack.c.h.b16 %v159
  %v742 = vunpack.c.l.b16 %v160
  %v743 = vunpack.c.h.b16 %v160
  %v744 = vunpack.c.l.b16 %v161
  %v745 = vunpack.c.h.b16 %v161
  %v746 = vunpack.c.l.b16 %v162
  %v747 = vunpack.c.h.b16 %v162
  %v748 = vunpack.c.l.b16 %v163
  %v749 = vunpack.c.h.b16 %v163
  %v750 = vunpack.c.l.b16 %v164
  %v751 = vunpack.c.h.b16 %v164
  %v752 = vunpack.c.l.b16 %v165
  %v753 = vunpack.c.h.b16 %v165
  %v754 = vunpack.c.l.b16 %v166
  %v755 = vunpack.c.h.b16 %v166
  %v756 = vunpack.c.l.b16 %v167
  %v757 = vunpack.c.h.b16 %v167
  %v758 = vunpack.c.l.b16 %v168
  %v759 = vunpack.c.h.b16 %v168
  %v760 = vunpack.c.l.b16 %v169
  %v761 = vunpack.c.h.b16 %v169
  %v762 = vunpack.c.l.b16 %v170
  %v763 = vunpack.c.h.b16 %v170
  %v764 = vunpack.c.l.b16 %v171
  %v765 = vunpack.c.h.b16 %v171
  %v766 = vunpack.c.l.b16 %v172
  %v767 = vunpack.c.h.b16 %v172
  %v768 = vunpack.c.l.b16 %v173
  %v769 = vunpack.c.h.b16 %v173
  %v770 = vunpack.c.l.b16 %v174
  %v771 = vunpack.c.h.b16 %v174
  %v772 = vunpack.c.l.b16 %v175
  %v773 = vunpack.c.h.b16 %v175
  %v774 = vunpack.c.l.b16 %v176
  %v775 = vunpack.c.h.b16 %v176
  %v776 = vunpack.c.l.b16 %v177
  %v777 = vunpack.c.h.b16 %v177
  %v778 = vunpack.c.l.b16 %v178
  %v779 = vunpack.c.h.b16 %v178
  %v780 = vunpack.c.l.b16 %v179
  %v781 = vunpack.c.h.b16 %v179
  %v782 = vunpack.c.l.b16 %v180
  %v783 = vunpack.c.h.b16 %v180
  %v784 = vunpack.c.l.b16 %v181
  %v785 = vunpack.c.h.b16 %v181
  %v786 = vunpack.c.l.b16 %v182
  %v787 = vunpack.c.h.b16 %v182
  %v788 = vunpack.c.l.b16 %v183
  %v789 = vunpack.c.h.b16 %v183
  %v790 = vunpack.c.l.b16 %v184
  %v791 = vunpack.c.h.b16 %v184
  %v792 = vunpack.c.l.b16 %v185
  %v793 = vunpack.c.h.b16 %v185
  %v794 = vunpack.c.l.b16 %v186
  %v795 = vunpack.c.h.b16 %v186
  %v796 = vunpack.c.l.b16 %v187
  %v797 = vunpack.c.h.b16 %v187
  %v798 = vunpack.c.l.b16 %v188
  %v799 = vunpack.c.h.b16 %v188
  %v800 = vunpack.c.l.b16 %v189
  %v801 = vunpack.c.h.b16 %v189
  %v802 = vunpack.c.l.b16 %v190
  %v803 = vunpack.c.h.b16 %v190
  %v804 = vunpack.c.l.b16 %v191
  %v805 = vunpack.c.h.b16 %v191
  %v806 = vunpack.c.l.b16 %v192
  %v807 = vunpack.c.h.b16 %v192
  %v808 = vunpack.c.l.b16 %v193
  %v809 = vunpack.c.h.b16 %v193
  %v810 = vunpack.c.l.b16 %v194
  %v811 = vunpack.c.h.b16 %v194
  %v812 = vunpack.c.l.b16 %v195
  %v813 = vunpack.c.h.b16 %v195
  %v814 = vunpack.c.l.b16 %v196
  %v815 = vunpack.c.h.b16 %v196
  %v816 = vunpack.c.l.b16 %v197
  %v817 = vunpack.c.h.b16 %v197
  %v818 = vunpack.c.l.b16 %v198
  %v819 = vunpack.c.h.b16 %v198
  %v820 = vunpack.c.l.b16 %v199
  %v821 = vunpack.c.h.b16 %v199
  %v822 = vunpack.c.l.b16 %v200
  %v823 = vunpack.c.h.b16 %v200
  %v824 = vunpack.c.l.b16 %v201
  %v825 = vunpack.c.h.b16 %v201
  %v826 = vunpack.c.l.b16 %v202
  %v827 = vunpack.c.h.b16 %v202
  %v828 = vunpack.c.l.b16 %v203
  %v829 = vunpack.c.h.b16 %v203
  %v830 = vunpack.c.l.b16 %v204
  %v831 = vunpack.c.h.b16 %v204
  %v832 = vunpack.c.l.b16 %v205
  %v833 = vunpack.c.h.b16 %v205
  %v834 = vunpack.c.l.b16 %v206
  %v835 = vunpack.c.h.b16 %v206
  %v836 = vunpack.c.l.b16 %v207
  %v837 = vunpack.c.h.b16 %v207
  %v838 = vpack.c.b16 %v478, %v454
  %v839 = vpack.c.b16 %v479, %v455
  %v840 = vpack.c.b16 %v480, %v456
  %v841 = vpack.c.b16 %v481, %v457
  %v842 = vpack.c.b16 %v482, %v458
  %v843 = vpack.c.b16 %v483, %v459
  %v844 = vpack.c.b16 %v484, %v460
  %v845 = vpack.c.b16 %v485, %v461
  %v846 = vpack.c.b16 %v486, %v462
  %v847 = vpack.c.b16 %v487, %v463
  %v848 = vpack.c.b16 %v488, %v464
  %v849 = vpack.c.b16 %v489, %v465
  %v850 = vpack.c.b16 %v490, %v466
  %v851 = vpack.c.b16 %v491, %v467
  %v852 = vpack.c.b16 %v492, %v468
  %v853 = vpack.c.b16 %v493, %v469
  %v854 = vpack.c.b16 %v494, %v470
  %v855 = vpack.c.b16 %v495, %v471
  %v856 = vpack.c.b16 %v496, %v472
  %v857 = vpack.c.b16 %v497, %v473
  %v858 = vpack.c.b16 %v498, %v474
  %v859 = vpack.c.b16 %v499, %v475
  %v860 = vpack.c.b16 %v500, %v476
  %v861 = vpack.c.b16 %v501, %v477
  %v862 = vpack.c.b16 %v526, %v502
  %v863 = vpack.c.b16 %v527, %v503
  %v864 = vpack.c.b16 %v528, %v504
  %v865 = vpack.c.b16 %v529, %v505
  %v866 = vpack.c.b16 %v530, %v506
  %v867 = vpack.c.b16 %v531, %v507
  %v868 = vpack.c.b16 %v532, %v508
  %v869 = vpack.c.b16 %v533, %v509
  %v870 = vpack.c.b16 %v534, %v510
  %v871 = vpack.c.b16 %v535, %v511
  %v872 = vpack.c.b16 %v536, %v512
  %v873 = vpack.c.b16 %v537, %v513
  %v874 = vpack.c.b16 %v538, %v514
  %v875 = vpack.c.b16 %v539, %v515
  %v876 = vpack.c.b16 %v540, %v516
  %v877 = vpack.c.b16 %v541, %v517
  %v878 = vpack.c.b16 %v542, %v518
  %v879 = vpack.c.b16 %v543, %v519
  %v880 = vpack.c.b16 %v544, %v520
  %v881 = vpack.c.b16 %v545, %v521
  %v882 = vpack.c.b16 %v546, %v522
  %v883 = vpack.c.b16 %v547, %v523
  %v884 = vpack.c.b16 %v548, %v524
  %v885 = vpack.c.b16 %v549, %v525
  %v886 = vpack.c.b16 %v574, %v550
  %v887 = vpack.c.b16 %v575, %v551
  %v888 = vpack.c.b16 %v576, %v552
  %v889 = vpack.c.b16 %v577, %v553
  %v890 = vpack.c.b16 %v578, %v554
  %v891 = vpack.c.b16 %v579, %v555
  %v892 = vpack.c.b16 %v580, %v556
  %v893 = vpack.c.b16 %v581, %v557
  %v894 = vpack.c.b16 %v582, %v558
  %v895 = vpack.c.b16 %v583, %v559
  %v896 = vpack.c.b16 %v584, %v560
  %v897 = vpack.c.b16 %v585, %v561
  %v898 = vpack.c.b16 %v586, %v562
  %v899 = vpack.c.b16 %v587, %v563
  %v900 = vpack.c.b16 %v588, %v564
  %v901 = vpack.c.b16 %v589, %v565
  %v902 = vpack.c.b16 %v590, %v566
  %v903 = vpack.c.b16 %v591, %v567
  %v904 = vpack.c.b16 %v592, %v568
  %v905 = vpack.c.b16 %v593, %v569
  %v906 = vpack.c.b16 %v594, %v570
  %v907 = vpack.c.b16 %v595, %v571
  %v908 = vpack.c.b16 %v596, %v572
  %v909 = vpack.c.b16 %v597, %v573
  %v910 = vpack.c.b16 %v622, %v598
  %v911 = vpack.c.b16 %v623, %v599
  %v912 = vpack.c.b16 %v624, %v600
  %v913 = vpack.c.b16 %v625, %v601
  %v914 = vpack.c.b16 %v626, %v602
  %v915 = vpack.c.b16 %v627, %v603
  %v916 = vpack.c.b16 %v628, %v604
  %v917 = vpack.c.b16 %v629, %v605
  %v918 = vpack.c.b16 %v630, %v606
  %v919 = vpack.c.b16 %v631, %v607
  %v920 = vpack.c.b16 %v632, %v608
  %v921 = vpack.c.b16 %v633, %v609
  %v922 = vpack.c.b16 %v634, %v610
  %v923 = vpack.c.b16 %v635, %v611
  %v924 = vpack.c.b16 %v636, %v612
  %v925 = vpack.c.b16 %v637, %v613
  %v926 = vpack.c.b16 %v638, %v614
  %v927 = vpack.c.b16 %v639, %v615
  %v928 = vpack.c.b16 %v640, %v616
  %v929 = vpack.c.b16 %v641, %v617
  %v930 = vpack.c.b16 %v642, %v618
  %v931 = vpack.c.b16 %v643, %v619
  %v932 = vpack.c.b16 %v644, %v620
  %v933 = vpack.c.b16 %v645, %v621
  %v934 = vpack.c.b16 %v670, %v646
  %v935 = vpack.c.b16 %v671, %v647
  %v936 = vpack.c.b16 %v672, %v648
  %v937 = vpack.c.b16 %v673, %v649
  %v938 = vpack.c.b16 %v674, %v650
  %v939 = vpack.c.b16 %v675, %v651
  %v940 = vpack.c.b16 %v676, %v652
  %v941 = vpack.c.b16 %v677, %v653
  %v942 = vpack.c.b16 %v678, %v654
  %v943 = vpack.c.b16 %v679, %v655
  %v944 = vpack.c.b16 %v680, %v656
  %v945 = vpack.c.b16 %v681, %v657
  %v946 = vpack.c.b16 %v682, %v658
  %v947 = vpack.c.b16 %v683, %v659
  %v948 = vpack.c.b16 %v684, %v660
  %v949 = vpack.c.b16 %v685, %v661
  %v950 = vpack.c.b16 %v686, %v662
  %v951 = vpack.c.b16 %v687, %v663
  %v952 = vpack.c.b16 %v688, %v664
  %v953 = vpack.c.b16 %v689, %v665
  %v954 = vpack.c.b16 %v690, %v666
  %v955 = vpack.c.b16 %v691, %v667
  %v956 = vpack.c.b16 %v692, %v668
  %v957 = vpack.c.b16 %v693, %v669
  %v958 = vpack.c.b16 %v718, %v694
  %v959 = vpack.c.b16 %v719, %v695
  %v960 = vpack.c.b16 %v720, %v696
  %v961 = vpack.c.b16 %v721, %v697
  %v962 = vpack.c.b16 %v722, %v698
  %v963 = vpack.c.b16 %v723, %v699
  %v964 = vpack.c.b16 %v724, %v700
  %v965 = vpack.c.b16 %v725, %v701
  %v966 = vpack.c.b16 %v726, %v702
  %v967 = vpack.c.b16 %v727, %v703
  %v968 = vpack.c.b16 %v728, %v704
  %v969 = vpack.c.b16 %v729, %v705
  %v970 = vpack.c.b16 %v730, %v706
  %v971 = vpack.c.b16 %v731, %v707
  %v972 = vpack.c.b16 %v732, %v708
  %v973 = vpack.c.b16 %v733, %v709
  %v974 = vpack.c.b16 %v734, %v710
  %v975 = vpack.c.b16 %v735, %v711
  %v976 = vpack.c.b16 %v736, %v712
  %v977 = vpack.c.b16 %v737, %v713
  %v978 = vpack.c.b16 %v738, %v714
  %v979 = vpack.c.b16 %v739, %v715
  %v980 = vpack.c.b16 %v740, %v716
  %v981 = vpack.c.b16 %v741, %v717
  %v982 = vpack.c.b16 %v766, %v742
  %v983 = vpack.c.b16 %v767, %v743
  %v984 = vpack.c.b16 %v768, %v744
  %v985 = vpack.c.b16 %v769, %v745
  %v986 = vpack.c.b16 %v770, %v746
  %v987 = vpack.c.b16 %v771, %v747
  %v988 = vpack.c.b16 %v772, %v748
  %v989 = vpack.c.b16 %v773, %v749
  %v990 = vpack.c.b16 %v774, %v750
  %v991 = vpack.c.b16 %v775, %v751
  %v992 = vpack.c.b16 %v776, %v752
  %v993 = vpack.c.b16 %v777, %v753
  %v994 = vpack.c.b16 %v778, %v754
  %v995 = vpack.c.b16 %v779, %v755
  %v996 = vpack.c.b16 %v780, %v756
  %v997 = vpack.c.b16 %v781, %v757
  %v998 = vpack.c.b16 %v782, %v758
  %v999 = vpack.c.b16 %v783, %v759
  %v1000 = vpack.c.b16 %v784, %v760
  %v1001 = vpack.c.b16 %v785, %v761
  %v1002 = vpack.c.b16 %v786, %v762
  %v1003 = vpack.c.b16 %v787, %v763
  %v1004 = vpack.c.b16 %v788, %v764
  %v1005 = vpack.c.b16 %v789, %v765
  %v1006 = vpack.c.b16 %v814, %v790
  %v1007 = vpack.c.b16 %v815, %v791
  %v1008 = vpack.c.b16 %v816, %v792
  %v1009 = vpack.c.b16 %v817, %v793
  %v1010 = vpack.c.b16 %v818, %v794
  %v1011 = vpack.c.b16 %v819, %v795
  %v1012 = vpack.c.b16 %v820, %v796
  %v1013 = vpack.c.b16 %v821, %v797
  %v1014 = vpack.c.b16 %v822, %v798
  %v1015 = vpack.c.b16 %v823, %v799
  %v1016 = vpack.c.b16 %v824, %v800
  %v1017 = vpack.c.b16 %v825, %v801
  %v1018 = vpack.c.b16 %v826, %v802
  %v1019 = vpack.c.b16 %v827, %v803
  %v1020 = vpack.c.b16 %v828, %v804
  %v1021 = vpack.c.b16 %v829, %v805
  %v1022 = vpack.c.b16 %v830, %v806
  %v1023 = vpack.c.b16 %v831, %v807
  %v1024 = vpack.c.b16 %v832, %v808
  %v1025 = vpack.c.b16 %v833, %v809
  %v1026 = vpack.c.b16 %v834, %v810
  %v1027 = vpack.c.b16 %v835, %v811
  %v1028 = vpack.c.b16 %v836, %v812
  %v1029 = vpack.c.b16 %v837, %v813
  %1222 = vmatpush.bf16.msra.mxu0 %v1006
  %1223 = vmatpush.bf16.msra.mxu0 %v982
  %1224 = vmatpush.bf16.msra.mxu0 %v958
  %1225 = vmatpush.bf16.msra.mxu0 %v934
  %1226 = vmatpush.bf16.msra.mxu0 %v910
  %1227 = vmatpush.bf16.msra.mxu0 %v886
  %1228 = vmatpush.bf16.msra.mxu0 %v862
  %1229 = vmatpush.bf16.msra.mxu0 %v838
  %1230 = vmatmul.bf16.gmra.mxu0 %v15
  %v1231 = vpop.f32.mrf.mxu0
  %v1232 = vadd.f32 %v214, %v1231
  %v1233 = vpop.f32.mrf.mxu0
  %1234 = vdwg.mxu0
  %1235 = vmatpush.bf16.msra.mxu0 %v1007
  %1236 = vmatpush.bf16.msra.mxu0 %v983
  %1237 = vmatpush.bf16.msra.mxu0 %v959
  %1238 = vmatpush.bf16.msra.mxu0 %v935
  %1239 = vmatpush.bf16.msra.mxu0 %v911
  %1240 = vmatpush.bf16.msra.mxu0 %v887
  %1241 = vmatpush.bf16.msra.mxu0 %v863
  %1242 = vmatpush.bf16.msra.mxu0 %v839
  %1243 = vmatmul.bf16.gmra.mxu0 %v15
  %v1244 = vpop.f32.mrf.mxu0
  %v1245 = vadd.f32 %v215, %v1244
  %v1246 = vpop.f32.mrf.mxu0
  %1247 = vdwg.mxu0
  %1248 = vmatpush.bf16.msra.mxu0 %v1008
  %1249 = vmatpush.bf16.msra.mxu0 %v984
  %1250 = vmatpush.bf16.msra.mxu0 %v960
  %1251 = vmatpush.bf16.msra.mxu0 %v936
  %1252 = vmatpush.bf16.msra.mxu0 %v912
  %1253 = vmatpush.bf16.msra.mxu0 %v888
  %1254 = vmatpush.bf16.msra.mxu0 %v864
  %1255 = vmatpush.bf16.msra.mxu0 %v840
  %1256 = vmatmul.bf16.gmra.mxu0 %v15
  %v1257 = vpop.f32.mrf.mxu0
  %v1258 = vadd.f32 %v216, %v1257
  %v1259 = vpop.f32.mrf.mxu0
  %1260 = vdwg.mxu0
  %1261 = vmatpush.bf16.msra.mxu0 %v1009
  %1262 = vmatpush.bf16.msra.mxu0 %v985
  %1263 = vmatpush.bf16.msra.mxu0 %v961
  %1264 = vmatpush.bf16.msra.mxu0 %v937
  %1265 = vmatpush.bf16.msra.mxu0 %v913
  %1266 = vmatpush.bf16.msra.mxu0 %v889
  %1267 = vmatpush.bf16.msra.mxu0 %v865
  %1268 = vmatpush.bf16.msra.mxu0 %v841
  %1269 = vmatmul.bf16.gmra.mxu0 %v15
  %v1270 = vpop.f32.mrf.mxu0
  %v1271 = vadd.f32 %v217, %v1270
  %v1272 = vpop.f32.mrf.mxu0
  %1273 = vdwg.mxu0
  %1274 = vmatpush.bf16.msra.mxu0 %v1010
  %1275 = vmatpush.bf16.msra.mxu0 %v986
  %1276 = vmatpush.bf16.msra.mxu0 %v962
  %1277 = vmatpush.bf16.msra.mxu0 %v938
  %1278 = vmatpush.bf16.msra.mxu0 %v914
  %1279 = vmatpush.bf16.msra.mxu0 %v890
  %1280 = vmatpush.bf16.msra.mxu0 %v866
  %1281 = vmatpush.bf16.msra.mxu0 %v842
  %1282 = vmatmul.bf16.gmra.mxu0 %v15
  %v1283 = vpop.f32.mrf.mxu0
  %v1284 = vadd.f32 %v218, %v1283
  %v1285 = vpop.f32.mrf.mxu0
  %1286 = vdwg.mxu0
  %1287 = vmatpush.bf16.msra.mxu0 %v1011
  %1288 = vmatpush.bf16.msra.mxu0 %v987
  %1289 = vmatpush.bf16.msra.mxu0 %v963
  %1290 = vmatpush.bf16.msra.mxu0 %v939
  %1291 = vmatpush.bf16.msra.mxu0 %v915
  %1292 = vmatpush.bf16.msra.mxu0 %v891
  %1293 = vmatpush.bf16.msra.mxu0 %v867
  %1294 = vmatpush.bf16.msra.mxu0 %v843
  %1295 = vmatmul.bf16.gmra.mxu0 %v15
  %v1296 = vpop.f32.mrf.mxu0
  %v1297 = vadd.f32 %v219, %v1296
  %v1298 = vpop.f32.mrf.mxu0
  %1299 = vdwg.mxu0
  %1300 = vmatpush.bf16.msra.mxu0 %v1012
  %1301 = vmatpush.bf16.msra.mxu0 %v988
  %1302 = vmatpush.bf16.msra.mxu0 %v964
  %1303 = vmatpush.bf16.msra.mxu0 %v940
  %1304 = vmatpush.bf16.msra.mxu0 %v916
  %1305 = vmatpush.bf16.msra.mxu0 %v892
  %1306 = vmatpush.bf16.msra.mxu0 %v868
  %1307 = vmatpush.bf16.msra.mxu0 %v844
  %1308 = vmatmul.bf16.gmra.mxu0 %v15
  %v1309 = vpop.f32.mrf.mxu0
  %v1310 = vadd.f32 %v220, %v1309
  %v1311 = vpop.f32.mrf.mxu0
  %1312 = vdwg.mxu0
  %1313 = vmatpush.bf16.msra.mxu0 %v1013
  %1314 = vmatpush.bf16.msra.mxu0 %v989
  %1315 = vmatpush.bf16.msra.mxu0 %v965
  %1316 = vmatpush.bf16.msra.mxu0 %v941
  %1317 = vmatpush.bf16.msra.mxu0 %v917
  %1318 = vmatpush.bf16.msra.mxu0 %v893
  %1319 = vmatpush.bf16.msra.mxu0 %v869
  %1320 = vmatpush.bf16.msra.mxu0 %v845
  %1321 = vmatmul.bf16.gmra.mxu0 %v15
  %v1322 = vpop.f32.mrf.mxu0
  %v1323 = vadd.f32 %v221, %v1322
  %v1324 = vpop.f32.mrf.mxu0
  %1325 = vdwg.mxu0
  %1326 = vmatpush.bf16.msra.mxu0 %v1014
  %1327 = vmatpush.bf16.msra.mxu0 %v990
  %1328 = vmatpush.bf16.msra.mxu0 %v966
  %1329 = vmatpush.bf16.msra.mxu0 %v942
  %1330 = vmatpush.bf16.msra.mxu0 %v918
  %1331 = vmatpush.bf16.msra.mxu0 %v894
  %1332 = vmatpush.bf16.msra.mxu0 %v870
  %1333 = vmatpush.bf16.msra.mxu0 %v846
  %1334 = vmatmul.bf16.gmra.mxu0 %v15
  %v1335 = vpop.f32.mrf.mxu0
  %v1336 = vadd.f32 %v222, %v1335
  %v1337 = vpop.f32.mrf.mxu0
  %1338 = vdwg.mxu0
  %1339 = vmatpush.bf16.msra.mxu0 %v1015
  %1340 = vmatpush.bf16.msra.mxu0 %v991
  %1341 = vmatpush.bf16.msra.mxu0 %v967
  %1342 = vmatpush.bf16.msra.mxu0 %v943
  %1343 = vmatpush.bf16.msra.mxu0 %v919
  %1344 = vmatpush.bf16.msra.mxu0 %v895
  %1345 = vmatpush.bf16.msra.mxu0 %v871
  %1346 = vmatpush.bf16.msra.mxu0 %v847
  %1347 = vmatmul.bf16.gmra.mxu0 %v15
  %v1348 = vpop.f32.mrf.mxu0
  %v1349 = vadd.f32 %v223, %v1348
  %v1350 = vpop.f32.mrf.mxu0
  %1351 = vdwg.mxu0
  %1352 = vmatpush.bf16.msra.mxu0 %v1016
  %1353 = vmatpush.bf16.msra.mxu0 %v992
  %1354 = vmatpush.bf16.msra.mxu0 %v968
  %1355 = vmatpush.bf16.msra.mxu0 %v944
  %1356 = vmatpush.bf16.msra.mxu0 %v920
  %1357 = vmatpush.bf16.msra.mxu0 %v896
  %1358 = vmatpush.bf16.msra.mxu0 %v872
  %1359 = vmatpush.bf16.msra.mxu0 %v848
  %1360 = vmatmul.bf16.gmra.mxu0 %v15
  %v1361 = vpop.f32.mrf.mxu0
  %v1362 = vadd.f32 %v224, %v1361
  %v1363 = vpop.f32.mrf.mxu0
  %1364 = vdwg.mxu0
  %1365 = vmatpush.bf16.msra.mxu0 %v1017
  %1366 = vmatpush.bf16.msra.mxu0 %v993
  %1367 = vmatpush.bf16.msra.mxu0 %v969
  %1368 = vmatpush.bf16.msra.mxu0 %v945
  %1369 = vmatpush.bf16.msra.mxu0 %v921
  %1370 = vmatpush.bf16.msra.mxu0 %v897
  %1371 = vmatpush.bf16.msra.mxu0 %v873
  %1372 = vmatpush.bf16.msra.mxu0 %v849
  %1373 = vmatmul.bf16.gmra.mxu0 %v15
  %v1374 = vpop.f32.mrf.mxu0
  %v1375 = vadd.f32 %v225, %v1374
  %v1376 = vpop.f32.mrf.mxu0
  %1377 = vdwg.mxu0
  %1378 = vmatpush.bf16.msra.mxu0 %v1018
  %1379 = vmatpush.bf16.msra.mxu0 %v994
  %1380 = vmatpush.bf16.msra.mxu0 %v970
  %1381 = vmatpush.bf16.msra.mxu0 %v946
  %1382 = vmatpush.bf16.msra.mxu0 %v922
  %1383 = vmatpush.bf16.msra.mxu0 %v898
  %1384 = vmatpush.bf16.msra.mxu0 %v874
  %1385 = vmatpush.bf16.msra.mxu0 %v850
  %1386 = vmatmul.bf16.gmra.mxu0 %v15
  %v1387 = vpop.f32.mrf.mxu0
  %v1388 = vadd.f32 %v226, %v1387
  %v1389 = vpop.f32.mrf.mxu0
  %1390 = vdwg.mxu0
  %1391 = vmatpush.bf16.msra.mxu0 %v1019
  %1392 = vmatpush.bf16.msra.mxu0 %v995
  %1393 = vmatpush.bf16.msra.mxu0 %v971
  %1394 = vmatpush.bf16.msra.mxu0 %v947
  %1395 = vmatpush.bf16.msra.mxu0 %v923
  %1396 = vmatpush.bf16.msra.mxu0 %v899
  %1397 = vmatpush.bf16.msra.mxu0 %v875
  %1398 = vmatpush.bf16.msra.mxu0 %v851
  %1399 = vmatmul.bf16.gmra.mxu0 %v15
  %v1400 = vpop.f32.mrf.mxu0
  %v1401 = vadd.f32 %v227, %v1400
  %v1402 = vpop.f32.mrf.mxu0
  %1403 = vdwg.mxu0
  %1404 = vmatpush.bf16.msra.mxu0 %v1020
  %1405 = vmatpush.bf16.msra.mxu0 %v996
  %1406 = vmatpush.bf16.msra.mxu0 %v972
  %1407 = vmatpush.bf16.msra.mxu0 %v948
  %1408 = vmatpush.bf16.msra.mxu0 %v924
  %1409 = vmatpush.bf16.msra.mxu0 %v900
  %1410 = vmatpush.bf16.msra.mxu0 %v876
  %1411 = vmatpush.bf16.msra.mxu0 %v852
  %1412 = vmatmul.bf16.gmra.mxu0 %v15
  %v1413 = vpop.f32.mrf.mxu0
  %v1414 = vadd.f32 %v228, %v1413
  %v1415 = vpop.f32.mrf.mxu0
  %1416 = vdwg.mxu0
  %1417 = vmatpush.bf16.msra.mxu0 %v1021
  %1418 = vmatpush.bf16.msra.mxu0 %v997
  %1419 = vmatpush.bf16.msra.mxu0 %v973
  %1420 = vmatpush.bf16.msra.mxu0 %v949
  %1421 = vmatpush.bf16.msra.mxu0 %v925
  %1422 = vmatpush.bf16.msra.mxu0 %v901
  %1423 = vmatpush.bf16.msra.mxu0 %v877
  %1424 = vmatpush.bf16.msra.mxu0 %v853
  %1425 = vmatmul.bf16.gmra.mxu0 %v15
  %v1426 = vpop.f32.mrf.mxu0
  %v1427 = vadd.f32 %v229, %v1426
  %v1428 = vpop.f32.mrf.mxu0
  %1429 = vdwg.mxu0
  %1430 = vmatpush.bf16.msra.mxu0 %v1022
  %1431 = vmatpush.bf16.msra.mxu0 %v998
  %1432 = vmatpush.bf16.msra.mxu0 %v974
  %1433 = vmatpush.bf16.msra.mxu0 %v950
  %1434 = vmatpush.bf16.msra.mxu0 %v926
  %1435 = vmatpush.bf16.msra.mxu0 %v902
  %1436 = vmatpush.bf16.msra.mxu0 %v878
  %1437 = vmatpush.bf16.msra.mxu0 %v854
  %1438 = vmatmul.bf16.gmra.mxu0 %v15
  %v1439 = vpop.f32.mrf.mxu0
  %v1440 = vadd.f32 %v230, %v1439
  %v1441 = vpop.f32.mrf.mxu0
  %1442 = vdwg.mxu0
  %1443 = vmatpush.bf16.msra.mxu0 %v1023
  %1444 = vmatpush.bf16.msra.mxu0 %v999
  %1445 = vmatpush.bf16.msra.mxu0 %v975
  %1446 = vmatpush.bf16.msra.mxu0 %v951
  %1447 = vmatpush.bf16.msra.mxu0 %v927
  %1448 = vmatpush.bf16.msra.mxu0 %v903
  %1449 = vmatpush.bf16.msra.mxu0 %v879
  %1450 = vmatpush.bf16.msra.mxu0 %v855
  %1451 = vmatmul.bf16.gmra.mxu0 %v15
  %v1452 = vpop.f32.mrf.mxu0
  %v1453 = vadd.f32 %v231, %v1452
  %v1454 = vpop.f32.mrf.mxu0
  %1455 = vdwg.mxu0
  %1456 = vmatpush.bf16.msra.mxu0 %v1024
  %1457 = vmatpush.bf16.msra.mxu0 %v1000
  %1458 = vmatpush.bf16.msra.mxu0 %v976
  %1459 = vmatpush.bf16.msra.mxu0 %v952
  %1460 = vmatpush.bf16.msra.mxu0 %v928
  %1461 = vmatpush.bf16.msra.mxu0 %v904
  %1462 = vmatpush.bf16.msra.mxu0 %v880
  %1463 = vmatpush.bf16.msra.mxu0 %v856
  %1464 = vmatmul.bf16.gmra.mxu0 %v15
  %v1465 = vpop.f32.mrf.mxu0
  %v1466 = vadd.f32 %v232, %v1465
  %v1467 = vpop.f32.mrf.mxu0
  %1468 = vdwg.mxu0
  %1469 = vmatpush.bf16.msra.mxu0 %v1025
  %1470 = vmatpush.bf16.msra.mxu0 %v1001
  %1471 = vmatpush.bf16.msra.mxu0 %v977
  %1472 = vmatpush.bf16.msra.mxu0 %v953
  %1473 = vmatpush.bf16.msra.mxu0 %v929
  %1474 = vmatpush.bf16.msra.mxu0 %v905
  %1475 = vmatpush.bf16.msra.mxu0 %v881
  %1476 = vmatpush.bf16.msra.mxu0 %v857
  %1477 = vmatmul.bf16.gmra.mxu0 %v15
  %v1478 = vpop.f32.mrf.mxu0
  %v1479 = vadd.f32 %v233, %v1478
  %v1480 = vpop.f32.mrf.mxu0
  %1481 = vdwg.mxu0
  %1482 = vmatpush.bf16.msra.mxu0 %v1026
  %1483 = vmatpush.bf16.msra.mxu0 %v1002
  %1484 = vmatpush.bf16.msra.mxu0 %v978
  %1485 = vmatpush.bf16.msra.mxu0 %v954
  %1486 = vmatpush.bf16.msra.mxu0 %v930
  %1487 = vmatpush.bf16.msra.mxu0 %v906
  %1488 = vmatpush.bf16.msra.mxu0 %v882
  %1489 = vmatpush.bf16.msra.mxu0 %v858
  %1490 = vmatmul.bf16.gmra.mxu0 %v15
  %v1491 = vpop.f32.mrf.mxu0
  %v1492 = vadd.f32 %v234, %v1491
  %v1493 = vpop.f32.mrf.mxu0
  %1494 = vdwg.mxu0
  %1495 = vmatpush.bf16.msra.mxu0 %v1027
  %1496 = vmatpush.bf16.msra.mxu0 %v1003
  %1497 = vmatpush.bf16.msra.mxu0 %v979
  %1498 = vmatpush.bf16.msra.mxu0 %v955
  %1499 = vmatpush.bf16.msra.mxu0 %v931
  %1500 = vmatpush.bf16.msra.mxu0 %v907
  %1501 = vmatpush.bf16.msra.mxu0 %v883
  %1502 = vmatpush.bf16.msra.mxu0 %v859
  %1503 = vmatmul.bf16.gmra.mxu0 %v15
  %v1504 = vpop.f32.mrf.mxu0
  %v1505 = vadd.f32 %v235, %v1504
  %v1506 = vpop.f32.mrf.mxu0
  %1507 = vdwg.mxu0
  %1508 = vmatpush.bf16.msra.mxu0 %v1028
  %1509 = vmatpush.bf16.msra.mxu0 %v1004
  %1510 = vmatpush.bf16.msra.mxu0 %v980
  %1511 = vmatpush.bf16.msra.mxu0 %v956
  %1512 = vmatpush.bf16.msra.mxu0 %v932
  %1513 = vmatpush.bf16.msra.mxu0 %v908
  %1514 = vmatpush.bf16.msra.mxu0 %v884
  %1515 = vmatpush.bf16.msra.mxu0 %v860
  %1516 = vmatmul.bf16.gmra.mxu0 %v15
  %v1517 = vpop.f32.mrf.mxu0
  %v1518 = vadd.f32 %v236, %v1517
  %v1519 = vpop.f32.mrf.mxu0
  %1520 = vdwg.mxu0
  %1521 = vmatpush.bf16.msra.mxu0 %v1029
  %1522 = vmatpush.bf16.msra.mxu0 %v1005
  %1523 = vmatpush.bf16.msra.mxu0 %v981
  %1524 = vmatpush.bf16.msra.mxu0 %v957
  %1525 = vmatpush.bf16.msra.mxu0 %v933
  %1526 = vmatpush.bf16.msra.mxu0 %v909
  %1527 = vmatpush.bf16.msra.mxu0 %v885
  %1528 = vmatpush.bf16.msra.mxu0 %v861
  %1529 = vmatmul.bf16.gmra.mxu0 %v15
  %v1530 = vpop.f32.mrf.mxu0
  %v1531 = vadd.f32 %v237, %v1530
  %v1532 = vpop.f32.mrf.mxu0
  %1533 = vdwg.mxu0
  %v1534 = vpack.c.bf16 %v1245, %v1232
  %v1535 = vpack.c.bf16 %v1271, %v1258
  %v1536 = vpack.c.bf16 %v1297, %v1284
  %v1537 = vpack.c.bf16 %v1323, %v1310
  %v1538 = vpack.c.bf16 %v1349, %v1336
  %v1539 = vpack.c.bf16 %v1375, %v1362
  %v1540 = vpack.c.bf16 %v1401, %v1388
  %v1541 = vpack.c.bf16 %v1427, %v1414
  %v1542 = vpack.c.bf16 %v1453, %v1440
  %v1543 = vpack.c.bf16 %v1479, %v1466
  %v1544 = vpack.c.bf16 %v1505, %v1492
  %v1545 = vpack.c.bf16 %v1531, %v1518
  %1546 = vst [vmem:[%s3] sm:$0xff] %v1534
  %1547 = vst [vmem:[%s3 + $0x8] sm:$0xff] %v1535
  %1548 = vst [vmem:[%s3 + $0x10] sm:$0xff] %v1536
  %1549 = vst [vmem:[%s3 + $0x18] sm:$0xff] %v1537
  %1550 = vst [vmem:[%s3 + $0x20] sm:$0xff] %v1538
  %1551 = vst [vmem:[%s3 + $0x28] sm:$0xff] %v1539
  %1552 = vst [vmem:[%s3 + $0x30] sm:$0xff] %v1540
  %1553 = vst [vmem:[%s3 + $0x38] sm:$0xff] %v1541
  %1554 = vst [vmem:[%s3 + $0x40] sm:$0xff] %v1542
  %1555 = vst [vmem:[%s3 + $0x48] sm:$0xff] %v1543
  %1556 = vst [vmem:[%s3 + $0x50] sm:$0xff] %v1544
  %1557 = vst [vmem:[%s3 + $0x58] sm:$0xff] %v1545
  // Predicated region
  $region14: #{multimodal_forward.7} parent=0 // pred_check
    _
  $region15: #{multimodal_forward.7} parent=0 // pred_check_branch
    %1559 = sbr.rel (0) target = $region17
  $region16: #{multimodal_forward.7} parent=0 // pred_region
    _
  $region17: #{multimodal_forward.7} parent=0 // pred_fallthru
    _
  // Predicated region
  $region18: #{multimodal_forward.7} parent=0 // pred_check
    _
  $region19: #{multimodal_forward.7} parent=0 // pred_check_branch
    %1561 = sbr.rel (0) target = $region21
  $region20: #{multimodal_forward.7} parent=0 // pred_region
    _
  $region21: #{multimodal_forward.7} parent=0 // pred_fallthru
    _

</llo_original>
